<compile_context>
chip_gen: v7x
topology: tpu7x:2x2x1
jax: 0.10.0
libtpu: 0.0.40
codegen_flags: <defaults>
</compile_context>

<pallas_src>
import functools
import math

import jax
import jax.numpy as jnp
from jax.experimental import pallas as pl
from jax.experimental.pallas import tpu as pltpu

LANE = 128                 # feature dims padded to a multiple of the 128-lane width
ROW_TILE = 256             # node-row tile
N_ALIGN = 512              # node dim padded to a multiple of this (enables K tiles >= 512)
BN_EPS = 1e-10             # matches nn.BatchNorm1d(eps=1e-10)
X_RESIDENT_BYTES = 10 * 1024 * 1024   # keep x resident in the propagation matmul below this
FUSED_BYTES = 16 * 1024 * 1024        # whole-forward single-kernel fast path below this


def _round_up(x, m):
    return (x + m - 1) // m * m


def _pad2d(a, rows, cols):
    return jnp.pad(a, ((0, rows - a.shape[0]), (0, cols - a.shape[1])))


def _vmem_limit_bytes():
    # v7x TensorCores only have 64 MiB of physical VMEM; v5e/v6e have 128 MiB.
    try:
        kind = jax.devices()[0].device_kind.lower()
    except Exception:
        kind = ""
    return (48 if "v7" in kind else 64) * 1024 * 1024


def _cparams(dims):
    return pltpu.CompilerParams(
        dimension_semantics=dims,
        vmem_limit_bytes=_vmem_limit_bytes(),
    )


def _block_spec(shape, index_map, buffers=None):
    """BlockSpec, optionally multi-buffered; falls back if unsupported."""
    if buffers is not None:
        try:
            return pl.BlockSpec(shape, index_map, pipeline_mode=pl.Buffered(buffers))
        except Exception:
            pass
    return pl.BlockSpec(shape, index_map)


def _pick_k_tile(n_pad):
    for t in (2048, 1024, 512, 256):
        if n_pad % t == 0:
            return t
    return ROW_TILE


# ---------------------------------------------------------------------------
# Kernel 1: gcn_conv as a tiled, pipelined dense matmul  (A_norm @ x)
# ---------------------------------------------------------------------------
def _propagate_resident_kernel(a_ref, x_ref, o_ref, acc_ref, *, k_tile):
    """x is fully resident in VMEM; slice the k-chunk in-kernel (no re-streaming)."""
    k = pl.program_id(1)

    @pl.when(k == 0)
    def _():
        acc_ref[...] = jnp.zeros_like(acc_ref)

    off = pl.multiple_of(k * k_tile, k_tile)
    acc_ref[...] += jnp.dot(a_ref[...], x_ref[pl.ds(off, k_tile), :],
                            preferred_element_type=jnp.float32)

    @pl.when(k == pl.num_programs(1) - 1)
    def _():
        o_ref[...] = acc_ref[...].astype(o_ref.dtype)


def _propagate_stream_kernel(a_ref, x_ref, o_ref, acc_ref):
    """Fallback: x streamed per k-step (used only when x does not fit VMEM)."""
    k = pl.program_id(1)

    @pl.when(k == 0)
    def _():
        acc_ref[...] = jnp.zeros_like(acc_ref)

    acc_ref[...] += jnp.dot(a_ref[...], x_ref[...],
                            preferred_element_type=jnp.float32)

    @pl.when(k == pl.num_programs(1) - 1)
    def _():
        o_ref[...] = acc_ref[...].astype(o_ref.dtype)


def gcn_propagate(a_pad, x_pad):
    """One gcn_conv step on padded inputs (bf16 streams, f32 MXU accumulation)."""
    n_pad = a_pad.shape[0]
    f_pad = x_pad.shape[1]
    k_tile = _pick_k_tile(n_pad)
    k_steps = n_pad // k_tile
    grid = (n_pad // ROW_TILE, k_steps)

    x_bytes = x_pad.size * jnp.dtype(x_pad.dtype).itemsize
    if x_bytes <= X_RESIDENT_BYTES:
        kern = functools.partial(_propagate_resident_kernel, k_tile=k_tile)
        x_spec = pl.BlockSpec((n_pad, f_pad), lambda i, k: (0, 0))   # DMA'd once
    else:
        kern = _propagate_stream_kernel
        x_spec = pl.BlockSpec((k_tile, f_pad), lambda i, k: (k, 0))

    # Triple-buffer the A tiles only when the reduction grid is long enough
    # for it to matter (DMA-bound regime).
    a_buffers = 3 if k_steps >= 4 else None

    return pl.pallas_call(
        kern,
        out_shape=jax.ShapeDtypeStruct((n_pad, f_pad), jnp.bfloat16),
        grid_spec=pltpu.PrefetchScalarGridSpec(
            num_scalar_prefetch=0,
            grid=grid,
            in_specs=[
                _block_spec((ROW_TILE, k_tile), lambda i, k: (i, k), buffers=a_buffers),
                x_spec,
            ],
            out_specs=pl.BlockSpec((ROW_TILE, f_pad), lambda i, k: (i, 0)),
            scratch_shapes=[pltpu.VMEM((ROW_TILE, f_pad), jnp.float32)],
        ),
        compiler_params=_cparams(("parallel", "arbitrary")),
    )(a_pad, x_pad)


# ---------------------------------------------------------------------------
# Per-tile BN statistics helper (row 0 of an 8-row stats block carries the
# partial sums; rows 1..7 are zero so a plain column-sum reduces across tiles).
# ---------------------------------------------------------------------------
def _emit_tile_stats(h_f32, s1_ref, s2_ref):
    s1 = jnp.sum(h_f32, axis=0, keepdims=True)
    s2 = jnp.sum(h_f32 * h_f32, axis=0, keepdims=True)
    row_idx = jax.lax.broadcasted_iota(jnp.int32, s1_ref.shape, 0)
    s1_ref[...] = jnp.where(row_idx == 0, jnp.broadcast_to(s1, s1_ref.shape), 0.0)
    s2_ref[...] = jnp.where(row_idx == 0, jnp.broadcast_to(s2, s2_ref.shape), 0.0)


def _bn_mean_scale(s1, s2, n_real):
    """Reduce tiny per-tile partials once per layer (plain JAX: (8*tiles, F))."""
    # One-pass E[x^2] - mean^2 in f32 with clamp; acceptable under the loose
    # bf16 tolerance (a shifted / Welford variant would be more robust).
    mean = jnp.sum(s1, axis=0, keepdims=True) / n_real
    ex2 = jnp.sum(s2, axis=0, keepdims=True) / n_real
    var = jnp.maximum(ex2 - mean * mean, 0.0)
    return mean, jax.lax.rsqrt(var + BN_EPS)


# ---------------------------------------------------------------------------
# Kernel 2: first hidden linear layer (bf16), emitting per-tile BN partials.
# ---------------------------------------------------------------------------
def _linear_stats_kernel(x_ref, wt_ref, h_ref, s1_ref, s2_ref):
    h = jnp.dot(x_ref[...], wt_ref[...], preferred_element_type=jnp.float32)
    h_ref[...] = h.astype(h_ref.dtype)
    _emit_tile_stats(h, s1_ref, s2_ref)


def linear_with_stats(x_pad, wt_pad):
    n_pad, f_in = x_pad.shape
    f_out = wt_pad.shape[1]
    tiles = n_pad // ROW_TILE
    return pl.pallas_call(
        _linear_stats_kernel,
        out_shape=(
            jax.ShapeDtypeStruct((n_pad, f_out), jnp.bfloat16),
            jax.ShapeDtypeStruct((8 * tiles, f_out), jnp.float32),
            jax.ShapeDtypeStruct((8 * tiles, f_out), jnp.float32),
        ),
        grid_spec=pltpu.PrefetchScalarGridSpec(
            num_scalar_prefetch=0,
            grid=(tiles,),
            in_specs=[
                pl.BlockSpec((ROW_TILE, f_in), lambda i: (i, 0)),
                pl.BlockSpec((f_in, f_out), lambda i: (0, 0)),
            ],
            out_specs=[
                pl.BlockSpec((ROW_TILE, f_out), lambda i: (i, 0)),
                pl.BlockSpec((8, f_out), lambda i: (i, 0)),
                pl.BlockSpec((8, f_out), lambda i: (i, 0)),
            ],
        ),
        compiler_params=_cparams(("parallel",)),
    )(x_pad, wt_pad)


# ---------------------------------------------------------------------------
# Kernel 3: fused BN(prev layer) -> ReLU -> linear -> BN partials of this layer.
#           Removes two full (N x F) HBM round trips per hidden layer.
# ---------------------------------------------------------------------------
def _bn_linear_stats_kernel(h_ref, mean_ref, scale_ref, wt_ref,
                            o_ref, s1_ref, s2_ref, *, n_real, needs_mask):
    h = h_ref[...].astype(jnp.float32)
    y = jnp.maximum((h - mean_ref[...]) * scale_ref[...], 0.0)
    if needs_mask:
        # Keep padded node rows exactly zero so this layer's stats stay exact.
        rows = (pl.program_id(0) * h_ref.shape[0]
                + jax.lax.broadcasted_iota(jnp.int32, y.shape, 0))
        y = jnp.where(rows < n_real, y, 0.0)
    z = jnp.dot(y.astype(wt_ref.dtype), wt_ref[...],
                preferred_element_type=jnp.float32)
    o_ref[...] = z.astype(o_ref.dtype)
    _emit_tile_stats(z, s1_ref, s2_ref)


def bn_linear_with_stats(h_pad, mean, scale, wt_pad, *, n_real):
    n_pad, f_in = h_pad.shape
    f_out = wt_pad.shape[1]
    tiles = n_pad // ROW_TILE
    kern = functools.partial(_bn_linear_stats_kernel, n_real=n_real,
                             needs_mask=(n_real != n_pad))
    return pl.pallas_call(
        kern,
        out_shape=(
            jax.ShapeDtypeStruct((n_pad, f_out), jnp.bfloat16),
            jax.ShapeDtypeStruct((8 * tiles, f_out), jnp.float32),
            jax.ShapeDtypeStruct((8 * tiles, f_out), jnp.float32),
        ),
        grid_spec=pltpu.PrefetchScalarGridSpec(
            num_scalar_prefetch=0,
            grid=(tiles,),
            in_specs=[
                pl.BlockSpec((ROW_TILE, f_in), lambda i: (i, 0)),
                pl.BlockSpec((1, f_in), lambda i: (0, 0)),
                pl.BlockSpec((1, f_in), lambda i: (0, 0)),
                pl.BlockSpec((f_in, f_out), lambda i: (0, 0)),
            ],
            out_specs=[
                pl.BlockSpec((ROW_TILE, f_out), lambda i: (i, 0)),
                pl.BlockSpec((8, f_out), lambda i: (i, 0)),
                pl.BlockSpec((8, f_out), lambda i: (i, 0)),
            ],
        ),
        compiler_params=_cparams(("parallel",)),
    )(h_pad, mean, scale, wt_pad)


# ---------------------------------------------------------------------------
# Kernel 4: fused BN(last hidden) -> ReLU -> final linear + bias.
# ---------------------------------------------------------------------------
def _bn_final_kernel(h_ref, mean_ref, scale_ref, wt_ref, b_ref, o_ref):
    h = h_ref[...].astype(jnp.float32)
    y = jnp.maximum((h - mean_ref[...]) * scale_ref[...], 0.0)
    o_ref[...] = (jnp.dot(y.astype(wt_ref.dtype), wt_ref[...],
                          preferred_element_type=jnp.float32)
                  + b_ref[...]).astype(o_ref.dtype)


def bn_final_linear(h_pad, mean, scale, wt_pad, b_pad):
    n_pad, f_in = h_pad.shape
    f_out = wt_pad.shape[1]
    tiles = n_pad // ROW_TILE
    return pl.pallas_call(
        _bn_final_kernel,
        out_shape=jax.ShapeDtypeStruct((n_pad, f_out), jnp.float32),
        grid_spec=pltpu.PrefetchScalarGridSpec(
            num_scalar_prefetch=0,
            grid=(tiles,),
            in_specs=[
                pl.BlockSpec((ROW_TILE, f_in), lambda i: (i, 0)),
                pl.BlockSpec((1, f_in), lambda i: (0, 0)),
                pl.BlockSpec((1, f_in), lambda i: (0, 0)),
                pl.BlockSpec((f_in, f_out), lambda i: (0, 0)),
                pl.BlockSpec((1, f_out), lambda i: (0, 0)),
            ],
            out_specs=pl.BlockSpec((ROW_TILE, f_out), lambda i: (i, 0)),
        ),
        compiler_params=_cparams(("parallel",)),
    )(h_pad, mean, scale, wt_pad, b_pad)


# ---------------------------------------------------------------------------
# Kernel 5: small-graph fast path — the entire forward in one pallas_call.
# ---------------------------------------------------------------------------
def _fused_small_kernel(a_ref, x_ref, *rest, num_mps, use_conv, n_real, needs_mask):
    wt_refs, b_ref, o_ref = rest[:-2], rest[-2], rest[-1]
    h = x_ref[...]                                   # bf16, padded rows are zero
    if use_conv:
        for _ in range(num_mps):
            h = jnp.dot(a_ref[...], h,
                        preferred_element_type=jnp.float32).astype(jnp.bfloat16)
    inv_n = 1.0 / n_real
    for wt_ref in wt_refs[:-1]:
        z = jnp.dot(h, wt_ref[...], preferred_element_type=jnp.float32)
        mean = jnp.sum(z, axis=0, keepdims=True) * inv_n
        ex2 = jnp.sum(z * z, axis=0, keepdims=True) * inv_n
        var = jnp.maximum(ex2 - mean * mean, 0.0)
        y = jnp.maximum((z - mean) * jax.lax.rsqrt(var + BN_EPS), 0.0)
        if needs_mask:
            rows = jax.lax.broadcasted_iota(jnp.int32, y.shape, 0)
            y = jnp.where(rows < n_real, y, 0.0)
        h = y.astype(jnp.bfloat16)
    o_ref[...] = (jnp.dot(h, wt_refs[-1][...],
                          preferred_element_type=jnp.float32) + b_ref[...])


def _fused_small_forward(x_pad, a_pad, wts_pad, b_pad, *, num_mps, use_conv, n_real):
    n_pad = x_pad.shape[0]
    f_out = wts_pad[-1].shape[1]
    needs_mask = (n_real != n_pad) and len(wts_pad) > 1
    kern = functools.partial(_fused_small_kernel, num_mps=num_mps,
                             use_conv=use_conv, n_real=n_real,
                             needs_mask=needs_mask)

    def full(shape):
        return pl.BlockSpec(shape, lambda i: (0, 0))

    in_specs = ([full(a_pad.shape), full(x_pad.shape)]
                + [full(w.shape) for w in wts_pad]
                + [full(b_pad.shape)])
    return pl.pallas_call(
        kern,
        out_shape=jax.ShapeDtypeStruct((n_pad, f_out), jnp.float32),
        grid_spec=pltpu.PrefetchScalarGridSpec(
            num_scalar_prefetch=0,
            grid=(1,),
            in_specs=in_specs,
            out_specs=full((n_pad, f_out)),
        ),
        compiler_params=_cparams(("arbitrary",)),
    )(a_pad, x_pad, *wts_pad, b_pad)


def _fits_fused(n_pad, x_pad, wts_pad, use_conv):
    max_f = max([x_pad.shape[1]] + [w.shape[1] for w in wts_pad])
    need = n_pad * max_f * 4 * 6                     # f32 intermediates headroom
    if use_conv:
        need += n_pad * n_pad * 2 * 2                # bf16 A, double-buffer margin
    need += x_pad.size * 2 * 2
    need += sum(w.size * 2 * 2 for w in wts_pad)
    return need <= FUSED_BYTES


# ---------------------------------------------------------------------------
# Graph / parameter preparation (hoisted out of the forward path)
# ---------------------------------------------------------------------------
def build_gcn_adj(edge_index, num_nodes):
    """Dense A_norm = D^-1/2 (A + I) D^-1/2 (scatter-add: duplicate edges count)."""
    src, dst = edge_index[0], edge_index[1]
    a = jnp.zeros((num_nodes, num_nodes), jnp.float32)
    a = a.at[dst, src].add(1.0)                           # message src -> dst
    a = a + jnp.eye(num_nodes, dtype=jnp.float32)         # self loops
    deg = jnp.sum(a, axis=1)
    d_inv_sqrt = jnp.where(deg > 0, jax.lax.rsqrt(deg), 0.0)
    return d_inv_sqrt[:, None] * a * d_inv_sqrt[None, :]


def pad_adj(a_norm, n_pad):
    # Further per-generation optimization: int8 (v5e/v6e) or fp8 (v7x) A.
    return _pad2d(a_norm, n_pad, n_pad).astype(jnp.bfloat16)


def init_params(key, in_ch, hid_ch, out_ch, num_layers):
    """xavier_uniform_(gain=1.414) weights, zero biases (as reset_parameters)."""
    dims = [in_ch] + [hid_ch] * (num_layers - 1) + [out_ch]
    ws, bs = [], []
    for i in range(num_layers):
        key, sub = jax.random.split(key)
        fan_in, fan_out = dims[i], dims[i + 1]
        bound = 1.414 * math.sqrt(6.0 / (fan_in + fan_out))
        ws.append(jax.random.uniform(sub, (fan_out, fan_in), jnp.float32,
                                     -bound, bound))
        bs.append(jnp.zeros((fan_out,), jnp.float32))
    return ws, bs


def prepare_params(ws, bs):
    """Pre-transpose + zero-pad weights to lane-dense shapes, cast to bf16."""
    wts = []
    for w in ws:
        f_out, f_in = w.shape
        wts.append(_pad2d(w.T, _round_up(f_in, LANE),
                          _round_up(f_out, LANE)).astype(jnp.bfloat16))
    b_last = bs[-1]
    pad = _round_up(b_last.shape[0], LANE) - b_last.shape[0]
    b_last_pad = jnp.pad(b_last, (0, pad))[None, :].astype(jnp.float32)
    return wts, b_last_pad


# ---------------------------------------------------------------------------
# Forward pass
# ---------------------------------------------------------------------------
def pmlp_sgc_forward(x, a_norm_pad, wts_pad, b_last_pad, *, num_mps,
                     out_channels, use_conv=True, force_tiled=False):
    n = x.shape[0]
    n_pad = a_norm_pad.shape[0]
    f_in_pad = wts_pad[0].shape[0]
    x_pad = _pad2d(x, n_pad, f_in_pad).astype(jnp.bfloat16)

    # Small-graph fast path: one fused kernel, everything resident in VMEM.
    if not force_tiled and _fits_fused(n_pad, x_pad, wts_pad, use_conv):
        out_pad = _fused_small_forward(x_pad, a_norm_pad, wts_pad, b_last_pad,
                                       num_mps=num_mps, use_conv=use_conv,
                                       n_real=n)
        return out_pad[:n, :out_channels]

    # ------------------ tiled / pipelined path ------------------
    assert len(wts_pad) >= 2, "tiled path expects num_layers >= 2"

    # SGC-style message passing on the raw (narrow) features.
    h = x_pad
    if use_conv:
        for _ in range(num_mps):
            h = gcn_propagate(a_norm_pad, h)

    # First hidden layer (no BN on its input), emitting BN partials.
    h, s1, s2 = linear_with_stats(h, wts_pad[0])
    mean, scale = _bn_mean_scale(s1, s2, n)

    # Middle hidden layers: fused BN+ReLU -> linear -> BN partials.
    for wt in wts_pad[1:-1]:
        h, s1, s2 = bn_linear_with_stats(h, mean, scale, wt, n_real=n)
        mean, scale = _bn_mean_scale(s1, s2, n)
        # F.dropout(..., training=False) is the identity.

    # Final layer: fused BN+ReLU -> linear + bias.
    out_pad = bn_final_linear(h, mean, scale, wts_pad[-1], b_last_pad)
    return out_pad[:n, :out_channels]


# ---------------------------------------------------------------------------
# Pure-JAX reference (for a loose numerical sanity check of the kernels)
# ---------------------------------------------------------------------------
def reference_forward(x, a_norm, ws, bs, *, num_mps, use_conv=True):
    h = x
    if use_conv:
        for _ in range(num_mps):
            h = a_norm @ h
    for w, b in zip(ws[:-1], bs[:-1]):
        h = h @ w.T + b
        mean = jnp.mean(h, axis=0, keepdims=True)
        var = jnp.var(h, axis=0, keepdims=True)
        h = jnp.maximum((h - mean) * jax.lax.rsqrt(var + BN_EPS), 0.0)
    return h @ ws[-1].T + bs[-1]


if __name__ == "__main__":
    # Small shapes consistent with the module.
    NUM_NODES = 500      # num_node (non-multiple of the row tile: exercises masking)
    IN_CH = 16           # in_channels
    HID_CH = 32          # hidden_channels
    OUT_CH = 8           # out_channels
    NUM_LAYERS = 3       # args.num_layers
    NUM_MPS = 2          # args.num_mps
    # args.dropout is irrelevant in eval mode.

    key = jax.random.PRNGKey(0)
    k_x, k_e1, k_e2, k_p = jax.random.split(key, 4)

    x = jax.random.normal(k_x, (NUM_NODES, IN_CH), jnp.float32)

    num_edges = 2048
    src = jax.random.randint(k_e1, (num_edges,), 0, NUM_NODES)
    dst = jax.random.randint(k_e2, (num_edges,), 0, NUM_NODES)
    edge_index = jnp.stack([jnp.concatenate([src, dst]),
                            jnp.concatenate([dst, src])])

    ws, bs = init_params(k_p, IN_CH, HID_CH, OUT_CH, NUM_LAYERS)
    wts_pad, b_last_pad = prepare_params(ws, bs)

    # Adjacency is static per graph: build + normalize + pad once, cache it.
    n_pad = _round_up(NUM_NODES, N_ALIGN)
    a_norm = build_gcn_adj(edge_index, NUM_NODES)
    a_norm_pad = pad_adj(a_norm, n_pad)

    ref = reference_forward(x, a_norm, ws, bs, num_mps=NUM_MPS, use_conv=True)

    # Path 1: fused small-graph fast path (taken automatically at this size).
    fwd_fused = jax.jit(functools.partial(pmlp_sgc_forward, num_mps=NUM_MPS,
                                          out_channels=OUT_CH, use_conv=True,
                                          force_tiled=False))
    out_fused = jax.block_until_ready(fwd_fused(x, a_norm_pad, wts_pad, b_last_pad))
    assert out_fused.shape == (NUM_NODES, OUT_CH), out_fused.shape
    assert bool(jnp.all(jnp.isfinite(out_fused)))
    assert bool(jnp.allclose(out_fused, ref, rtol=1e-1, atol=1e-1)), \
        "fused path mismatch vs reference"

    # Path 2: force the tiled / pipelined path so it is validated too.
    fwd_tiled = jax.jit(functools.partial(pmlp_sgc_forward, num_mps=NUM_MPS,
                                          out_channels=OUT_CH, use_conv=True,
                                          force_tiled=True))
    out_tiled = jax.block_until_ready(fwd_tiled(x, a_norm_pad, wts_pad, b_last_pad))
    assert out_tiled.shape == (NUM_NODES, OUT_CH), out_tiled.shape
    assert bool(jnp.all(jnp.isfinite(out_tiled)))
    assert bool(jnp.allclose(out_tiled, ref, rtol=1e-1, atol=1e-1)), \
        "tiled path mismatch vs reference"

    print("KERNEL_OK")
</pallas_src>

<mosaic_0001>
module attributes {stable_mosaic.version = 11 : i64} {
  func.func @_fused_small_kernel(%arg0: i32, %arg1: memref<512x512xbf16, #tpu.memory_space<vmem>>, %arg2: memref<512x128xbf16, #tpu.memory_space<vmem>>, %arg3: memref<128x128xbf16, #tpu.memory_space<vmem>>, %arg4: memref<128x128xbf16, #tpu.memory_space<vmem>>, %arg5: memref<128x128xbf16, #tpu.memory_space<vmem>>, %arg6: memref<1x128xf32, #tpu.memory_space<vmem>>, %arg7: memref<512x128xf32, #tpu.memory_space<vmem>>) attributes {dimension_semantics = [#tpu.dimension_semantics<arbitrary>], iteration_bounds = array<i64: 1>, scalar_prefetch = 0 : i64, scratch_operands = 0 : i64, tpu.core_type = #tpu.core_type<tc>, window_params = [{pipeline_mode = #tpu.pipeline_mode<synchronous>, transform_indices = @transform_0, window_bounds = array<i64: 512, 512>}, {pipeline_mode = #tpu.pipeline_mode<synchronous>, transform_indices = @transform_1, window_bounds = array<i64: 512, 128>}, {pipeline_mode = #tpu.pipeline_mode<synchronous>, transform_indices = @transform_2, window_bounds = array<i64: 128, 128>}, {pipeline_mode = #tpu.pipeline_mode<synchronous>, transform_indices = @transform_3, window_bounds = array<i64: 128, 128>}, {pipeline_mode = #tpu.pipeline_mode<synchronous>, transform_indices = @transform_4, window_bounds = array<i64: 128, 128>}, {pipeline_mode = #tpu.pipeline_mode<synchronous>, transform_indices = @transform_5, window_bounds = array<i64: 1, 128>}, {pipeline_mode = #tpu.pipeline_mode<synchronous>, transform_indices = @transform_6, window_bounds = array<i64: 512, 128>}]} {
    %c0 = arith.constant 0 : index
    %c0_0 = arith.constant 0 : index
    %0 = vector.load %arg2[%c0, %c0_0] : memref<512x128xbf16, #tpu.memory_space<vmem>>, vector<512x128xbf16>
    %c0_1 = arith.constant 0 : index
    %c0_2 = arith.constant 0 : index
    %1 = vector.load %arg1[%c0_1, %c0_2] : memref<512x512xbf16, #tpu.memory_space<vmem>>, vector<512x512xbf16>
    %cst = arith.constant dense<0.000000e+00> : vector<512x128xf32>
    %2 = tpu.matmul %1, %0, %cst {dimension_numbers = #tpu.dot_dimension_numbers<[1], [0], [0], [1], [0, 0, 1, 1], [], []>} : vector<512x512xbf16>, vector<512x128xbf16>, vector<512x128xf32> -> vector<512x128xf32>
    %3 = arith.truncf %2 : vector<512x128xf32> to vector<512x128xbf16>
    %c0_3 = arith.constant 0 : index
    %c0_4 = arith.constant 0 : index
    %4 = vector.load %arg1[%c0_3, %c0_4] : memref<512x512xbf16, #tpu.memory_space<vmem>>, vector<512x512xbf16>
    %cst_5 = arith.constant dense<0.000000e+00> : vector<512x128xf32>
    %5 = tpu.matmul %4, %3, %cst_5 {dimension_numbers = #tpu.dot_dimension_numbers<[1], [0], [0], [1], [0, 0, 1, 1], [], []>} : vector<512x512xbf16>, vector<512x128xbf16>, vector<512x128xf32> -> vector<512x128xf32>
    %6 = arith.truncf %5 : vector<512x128xf32> to vector<512x128xbf16>
    %c0_6 = arith.constant 0 : index
    %c0_7 = arith.constant 0 : index
    %7 = vector.load %arg3[%c0_6, %c0_7] : memref<128x128xbf16, #tpu.memory_space<vmem>>, vector<128x128xbf16>
    %cst_8 = arith.constant dense<0.000000e+00> : vector<512x128xf32>
    %8 = tpu.matmul %6, %7, %cst_8 {dimension_numbers = #tpu.dot_dimension_numbers<[1], [0], [0], [1], [0, 0, 1, 1], [], []>} : vector<512x128xbf16>, vector<128x128xbf16>, vector<512x128xf32> -> vector<512x128xf32>
    %cst_9 = arith.constant dense<0.000000e+00> : vector<128xf32>
    %9 = vector.multi_reduction <add>, %8, %cst_9 [0] : vector<512x128xf32> to vector<128xf32>
    %10 = vector.shape_cast %9 : vector<128xf32> to vector<1x128xf32>
    %cst_10 = arith.constant 2.000000e-03 : f32
    %11 = vector.broadcast %cst_10 : f32 to vector<1x128xf32>
    %12 = arith.mulf %10, %11 : vector<1x128xf32>
    %13 = arith.mulf %8, %8 : vector<512x128xf32>
    %cst_11 = arith.constant dense<0.000000e+00> : vector<128xf32>
    %14 = vector.multi_reduction <add>, %13, %cst_11 [0] : vector<512x128xf32> to vector<128xf32>
    %15 = vector.shape_cast %14 : vector<128xf32> to vector<1x128xf32>
    %cst_12 = arith.constant 2.000000e-03 : f32
    %16 = vector.broadcast %cst_12 : f32 to vector<1x128xf32>
    %17 = arith.mulf %15, %16 : vector<1x128xf32>
    %18 = arith.mulf %12, %12 : vector<1x128xf32>
    %19 = arith.subf %17, %18 : vector<1x128xf32>
    %cst_13 = arith.constant 0.000000e+00 : f32
    %20 = vector.broadcast %cst_13 : f32 to vector<1x128xf32>
    %21 = arith.maximumf %19, %20 : vector<1x128xf32>
    %22 = vector.broadcast %12 : vector<1x128xf32> to vector<512x128xf32>
    %23 = arith.subf %8, %22 : vector<512x128xf32>
    %cst_14 = arith.constant 1.000000e-10 : f32
    %24 = vector.broadcast %cst_14 : f32 to vector<1x128xf32>
    %25 = arith.addf %21, %24 : vector<1x128xf32>
    %26 = math.rsqrt %25 : vector<1x128xf32>
    %27 = vector.broadcast %26 : vector<1x128xf32> to vector<512x128xf32>
    %28 = arith.mulf %23, %27 : vector<512x128xf32>
    %cst_15 = arith.constant 0.000000e+00 : f32
    %29 = vector.broadcast %cst_15 : f32 to vector<512x128xf32>
    %30 = arith.maximumf %28, %29 : vector<512x128xf32>
    %31 = tpu.iota {dimensions = array<i32: 0>} : vector<512x128xi32>
    %c500_i32 = arith.constant 500 : i32
    %32 = vector.broadcast %c500_i32 : i32 to vector<512x128xi32>
    %33 = arith.cmpi slt, %31, %32 : vector<512x128xi32>
    %cst_16 = arith.constant 0.000000e+00 : f32
    %34 = vector.broadcast %cst_16 : f32 to vector<512x128xf32>
    %35 = arith.select %33, %30, %34 : vector<512x128xi1>, vector<512x128xf32>
    %36 = arith.truncf %35 : vector<512x128xf32> to vector<512x128xbf16>
    %c0_17 = arith.constant 0 : index
    %c0_18 = arith.constant 0 : index
    %37 = vector.load %arg4[%c0_17, %c0_18] : memref<128x128xbf16, #tpu.memory_space<vmem>>, vector<128x128xbf16>
    %cst_19 = arith.constant dense<0.000000e+00> : vector<512x128xf32>
    %38 = tpu.matmul %36, %37, %cst_19 {dimension_numbers = #tpu.dot_dimension_numbers<[1], [0], [0], [1], [0, 0, 1, 1], [], []>} : vector<512x128xbf16>, vector<128x128xbf16>, vector<512x128xf32> -> vector<512x128xf32>
    %cst_20 = arith.constant dense<0.000000e+00> : vector<128xf32>
    %39 = vector.multi_reduction <add>, %38, %cst_20 [0] : vector<512x128xf32> to vector<128xf32>
    %40 = vector.shape_cast %39 : vector<128xf32> to vector<1x128xf32>
    %cst_21 = arith.constant 2.000000e-03 : f32
    %41 = vector.broadcast %cst_21 : f32 to vector<1x128xf32>
    %42 = arith.mulf %40, %41 : vector<1x128xf32>
    %43 = arith.mulf %38, %38 : vector<512x128xf32>
    %cst_22 = arith.constant dense<0.000000e+00> : vector<128xf32>
    %44 = vector.multi_reduction <add>, %43, %cst_22 [0] : vector<512x128xf32> to vector<128xf32>
    %45 = vector.shape_cast %44 : vector<128xf32> to vector<1x128xf32>
    %cst_23 = arith.constant 2.000000e-03 : f32
    %46 = vector.broadcast %cst_23 : f32 to vector<1x128xf32>
    %47 = arith.mulf %45, %46 : vector<1x128xf32>
    %48 = arith.mulf %42, %42 : vector<1x128xf32>
    %49 = arith.subf %47, %48 : vector<1x128xf32>
    %cst_24 = arith.constant 0.000000e+00 : f32
    %50 = vector.broadcast %cst_24 : f32 to vector<1x128xf32>
    %51 = arith.maximumf %49, %50 : vector<1x128xf32>
    %52 = vector.broadcast %42 : vector<1x128xf32> to vector<512x128xf32>
    %53 = arith.subf %38, %52 : vector<512x128xf32>
    %cst_25 = arith.constant 1.000000e-10 : f32
    %54 = vector.broadcast %cst_25 : f32 to vector<1x128xf32>
    %55 = arith.addf %51, %54 : vector<1x128xf32>
    %56 = math.rsqrt %55 : vector<1x128xf32>
    %57 = vector.broadcast %56 : vector<1x128xf32> to vector<512x128xf32>
    %58 = arith.mulf %53, %57 : vector<512x128xf32>
    %cst_26 = arith.constant 0.000000e+00 : f32
    %59 = vector.broadcast %cst_26 : f32 to vector<512x128xf32>
    %60 = arith.maximumf %58, %59 : vector<512x128xf32>
    %61 = tpu.iota {dimensions = array<i32: 0>} : vector<512x128xi32>
    %c500_i32_27 = arith.constant 500 : i32
    %62 = vector.broadcast %c500_i32_27 : i32 to vector<512x128xi32>
    %63 = arith.cmpi slt, %61, %62 : vector<512x128xi32>
    %cst_28 = arith.constant 0.000000e+00 : f32
    %64 = vector.broadcast %cst_28 : f32 to vector<512x128xf32>
    %65 = arith.select %63, %60, %64 : vector<512x128xi1>, vector<512x128xf32>
    %66 = arith.truncf %65 : vector<512x128xf32> to vector<512x128xbf16>
    %c0_29 = arith.constant 0 : index
    %c0_30 = arith.constant 0 : index
    %67 = vector.load %arg5[%c0_29, %c0_30] : memref<128x128xbf16, #tpu.memory_space<vmem>>, vector<128x128xbf16>
    %cst_31 = arith.constant dense<0.000000e+00> : vector<512x128xf32>
    %68 = tpu.matmul %66, %67, %cst_31 {dimension_numbers = #tpu.dot_dimension_numbers<[1], [0], [0], [1], [0, 0, 1, 1], [], []>} : vector<512x128xbf16>, vector<128x128xbf16>, vector<512x128xf32> -> vector<512x128xf32>
    %c0_32 = arith.constant 0 : index
    %c0_33 = arith.constant 0 : index
    %69 = vector.load %arg6[%c0_32, %c0_33] : memref<1x128xf32, #tpu.memory_space<vmem>>, vector<1x128xf32>
    %70 = vector.broadcast %69 : vector<1x128xf32> to vector<512x128xf32>
    %71 = arith.addf %68, %70 : vector<512x128xf32>
    %c0_34 = arith.constant 0 : index
    %c0_35 = arith.constant 0 : index
    %72 = vector.load %arg7[%c0_34, %c0_35] : memref<512x128xf32, #tpu.memory_space<vmem>>, vector<512x128xf32>
    tpu.vector_store %arg7[%c0_34, %c0_35], %71 {strides = array<i32>} : memref<512x128xf32, #tpu.memory_space<vmem>>, vector<512x128xf32>,
    return
  }
  func.func @transform_0(%arg0: i32) -> (i32, i32) {
    %c0_i32 = arith.constant 0 : i32
    %c0_i32_0 = arith.constant 0 : i32
    %c0_i32_1 = arith.constant 0 : i32
    return %c0_i32, %c0_i32_0 : i32, i32
  }
  func.func @transform_1(%arg0: i32) -> (i32, i32) {
    %c0_i32 = arith.constant 0 : i32
    %c0_i32_0 = arith.constant 0 : i32
    %c0_i32_1 = arith.constant 0 : i32
    return %c0_i32, %c0_i32_0 : i32, i32
  }
  func.func @transform_2(%arg0: i32) -> (i32, i32) {
    %c0_i32 = arith.constant 0 : i32
    %c0_i32_0 = arith.constant 0 : i32
    %c0_i32_1 = arith.constant 0 : i32
    return %c0_i32, %c0_i32_0 : i32, i32
  }
  func.func @transform_3(%arg0: i32) -> (i32, i32) {
    %c0_i32 = arith.constant 0 : i32
    %c0_i32_0 = arith.constant 0 : i32
    %c0_i32_1 = arith.constant 0 : i32
    return %c0_i32, %c0_i32_0 : i32, i32
  }
  func.func @transform_4(%arg0: i32) -> (i32, i32) {
    %c0_i32 = arith.constant 0 : i32
    %c0_i32_0 = arith.constant 0 : i32
    %c0_i32_1 = arith.constant 0 : i32
    return %c0_i32, %c0_i32_0 : i32, i32
  }
  func.func @transform_5(%arg0: i32) -> (i32, i32) {
    %c0_i32 = arith.constant 0 : i32
    %c0_i32_0 = arith.constant 0 : i32
    %c0_i32_1 = arith.constant 0 : i32
    return %c0_i32, %c0_i32_0 : i32, i32
  }
  func.func @transform_6(%arg0: i32) -> (i32, i32) {
    %c0_i32 = arith.constant 0 : i32
    %c0_i32_0 = arith.constant 0 : i32
    %c0_i32_1 = arith.constant 0 : i32
    return %c0_i32, %c0_i32_0 : i32, i32
  }
}

</mosaic_0001>

<llo_original>
// kernel: pmlp_sgc_forward.1
$region0: #{pmlp_sgc_forward.1}
  #allocation0 [shape = 'u32[]', space=smem, size = 0x4, offset = 0x4, fixed_abs, tag = 'smem constant byte address 0x4 - core index']
  #allocation1 [shape = 'u32[144,128]{1,0:T(1,128)}', space=vmem, size = 0x12000, scoped, tag = 'internal scratch']
  %s0 = inlined_call_operand.hbm [shape: bf16[512,512], index: 0, kind: input, shape index: {}]
  %s1 = inlined_call_operand.hbm [shape: bf16[512,128], index: 1, kind: input, shape index: {}]
  %s2 = inlined_call_operand.hbm [shape: bf16[128,128], index: 2, kind: input, shape index: {}]
  %s3 = inlined_call_operand.hbm [shape: bf16[128,128], index: 3, kind: input, shape index: {}]
  %s4 = inlined_call_operand.hbm [shape: bf16[128,128], index: 4, kind: input, shape index: {}]
  %s5 = inlined_call_operand.hbm [shape: f32[1,128], index: 5, kind: input, shape index: {}]
  %s6 = inlined_call_operand.hbm [shape: f32[512,128], index: 6, kind: output, shape index: {}]
  %s7 = sld [smem:[#allocation0]]
  $region58: #{pmlp_sgc_forward.1} parent=0
    _
  %s9 = ssub.s32 1, %s7
  %s10 = scalar_select 0, %s9, %s7
  $region1: #{pmlp_sgc_forward.1} parent=0
    #allocation2 [shape = 'u8[524288]{0}', space=vmem, size = 0x80000, scoped, tag = 'input window, operand 0, single buffered']
    #allocation3 [shape = 's32[1]{0}', space=sflag, size = 0x4, scoped, tag = 'scoped memory for pmlp_sgc_forward.1']
    #allocation4 [shape = 's32[1]{0}', space=sflag, size = 0x4, scoped, tag = 'scoped memory for pmlp_sgc_forward.1']
    #allocation5 [shape = 'u8[131072]{0}', space=vmem, size = 0x20000, scoped, tag = 'input window, operand 1, single buffered']
    #allocation6 [shape = 's32[1]{0}', space=sflag, size = 0x4, scoped, tag = 'scoped memory for pmlp_sgc_forward.1']
    #allocation7 [shape = 'u8[32768]{0}', space=vmem, size = 0x8000, scoped, tag = 'input window, operand 2, single buffered']
    #allocation8 [shape = 'u8[32768]{0}', space=vmem, size = 0x8000, scoped, tag = 'input window, operand 3, single buffered']
    #allocation9 [shape = 's32[1]{0}', space=sflag, size = 0x4, scoped, tag = 'scoped memory for pmlp_sgc_forward.1']
    #allocation10 [shape = 'u8[32768]{0}', space=vmem, size = 0x8000, scoped, tag = 'input window, operand 4, single buffered']
    #allocation11 [shape = 'u8[512]{0}', space=vmem, size = 0x400, scoped, tag = 'input window, operand 5, single buffered']
    #allocation12 [shape = 's32[1]{0}', space=sflag, size = 0x4, scoped, tag = 'scoped memory for pmlp_sgc_forward.1']
    #allocation13 [shape = 'u8[262144]{0}', space=vmem, size = 0x40000, scoped, tag = 'output window, operand 0, single buffered']
    %11 = vsyncpa [#allocation3], 0
    %12 = vsyncpa [#allocation6], 0
    %13 = vsyncpa [#allocation9], 0
    %14 = vsyncpa [#allocation12], 0
    %15 = vsyncpa [#allocation4], 0
    // Predicated region
    $region2: #{pmlp_sgc_forward.1} parent=1 // pred_check
      _
    $region3: #{pmlp_sgc_forward.1} parent=1 // pred_check_branch
      %17 = sbr.rel (0) target = $region5
    $region4: #{pmlp_sgc_forward.1} parent=1 // pred_region
      %s19 = ssub.s32 16384, 16384
      %20 = vsyncadd [#allocation3], %s19
      %s21 = sshll.u32 [#allocation2], 4
      %s22 = int_to_ptr.vmem [resolvable:$true] %s21
      %27 = dma.hbm_to_vmem [thread:$0]  %s0, 16384, %s22, [#allocation3], 256, 256, 16
    $region5: #{pmlp_sgc_forward.1} parent=1 // pred_fallthru
      _
    // Predicated region
    $region6: #{pmlp_sgc_forward.1} parent=1 // pred_check
      _
    $region7: #{pmlp_sgc_forward.1} parent=1 // pred_check_branch
      %29 = sbr.rel (0) target = $region9
    $region8: #{pmlp_sgc_forward.1} parent=1 // pred_region
      %s31 = ssub.s32 4096, 4096
      %32 = vsyncadd [#allocation6], %s31
      %s33 = sshll.u32 [#allocation5], 4
      %s34 = int_to_ptr.vmem [resolvable:$true] %s33
      %39 = dma.hbm_to_vmem [thread:$0]  %s1, 4096, %s34, [#allocation6], 64, 64, 4
    $region9: #{pmlp_sgc_forward.1} parent=1 // pred_fallthru
      _
    // Predicated region
    $region10: #{pmlp_sgc_forward.1} parent=1 // pred_check
      _
    $region11: #{pmlp_sgc_forward.1} parent=1 // pred_check_branch
      %41 = sbr.rel (0) target = $region13
    $region12: #{pmlp_sgc_forward.1} parent=1 // pred_region
      %s43 = ssub.s32 1024, 1024
      %44 = vsyncadd [#allocation6], %s43
      %s45 = sshll.u32 [#allocation7], 4
      %s46 = int_to_ptr.vmem [resolvable:$true] %s45
      %51 = dma.hbm_to_vmem [thread:$0]  %s2, 1024, %s46, [#allocation6], 64, 64, 4
    $region13: #{pmlp_sgc_forward.1} parent=1 // pred_fallthru
      _
    // Predicated region
    $region14: #{pmlp_sgc_forward.1} parent=1 // pred_check
      _
    $region15: #{pmlp_sgc_forward.1} parent=1 // pred_check_branch
      %53 = sbr.rel (0) target = $region17
    $region16: #{pmlp_sgc_forward.1} parent=1 // pred_region
      %s55 = ssub.s32 1024, 1024
      %56 = vsyncadd [#allocation9], %s55
      %s57 = sshll.u32 [#allocation8], 4
      %s58 = int_to_ptr.vmem [resolvable:$true] %s57
      %63 = dma.hbm_to_vmem [thread:$0]  %s3, 1024, %s58, [#allocation9], 64, 64, 4
    $region17: #{pmlp_sgc_forward.1} parent=1 // pred_fallthru
      _
    // Predicated region
    $region18: #{pmlp_sgc_forward.1} parent=1 // pred_check
      _
    $region19: #{pmlp_sgc_forward.1} parent=1 // pred_check_branch
      %65 = sbr.rel (0) target = $region21
    $region20: #{pmlp_sgc_forward.1} parent=1 // pred_region
      %s67 = ssub.s32 1024, 1024
      %68 = vsyncadd [#allocation9], %s67
      %s69 = sshll.u32 [#allocation10], 4
      %s70 = int_to_ptr.vmem [resolvable:$true] %s69
      %75 = dma.hbm_to_vmem [thread:$0]  %s4, 1024, %s70, [#allocation9], 64, 64, 4
    $region21: #{pmlp_sgc_forward.1} parent=1 // pred_fallthru
      _
    // Predicated region
    $region22: #{pmlp_sgc_forward.1} parent=1 // pred_check
      _
    $region23: #{pmlp_sgc_forward.1} parent=1 // pred_check_branch
      %77 = sbr.rel (0) target = $region25
    $region24: #{pmlp_sgc_forward.1} parent=1 // pred_region
      %s79 = ssub.s32 16, 16
      %80 = vsyncadd [#allocation12], %s79
      %s82 = sshll.u32 [#allocation11], 4
      %s83 = int_to_ptr.vmem [resolvable:$true] %s82
      %85 = dma.hbm_to_vmem [thread:$0]  %s5, 16, %s83, [#allocation12]
    $region25: #{pmlp_sgc_forward.1} parent=1 // pred_fallthru
      _
    // Predicated region
    $region26: #{pmlp_sgc_forward.1} parent=1 // pred_check
      _
    $region27: #{pmlp_sgc_forward.1} parent=1 // pred_check_branch
      %87 = sbr.rel (0) target = $region29
    $region28: #{pmlp_sgc_forward.1} parent=1 // pred_region
      %88 = dma.done [#allocation3], 16384
    $region29: #{pmlp_sgc_forward.1} parent=1 // pred_fallthru
      _
    // Predicated region
    $region30: #{pmlp_sgc_forward.1} parent=1 // pred_check
      _
    $region31: #{pmlp_sgc_forward.1} parent=1 // pred_check_branch
      %90 = sbr.rel (0) target = $region33
    $region32: #{pmlp_sgc_forward.1} parent=1 // pred_region
      %91 = dma.done [#allocation6], 4096
    $region33: #{pmlp_sgc_forward.1} parent=1 // pred_fallthru
      _
    // Predicated region
    $region34: #{pmlp_sgc_forward.1} parent=1 // pred_check
      _
    $region35: #{pmlp_sgc_forward.1} parent=1 // pred_check_branch
      %93 = sbr.rel (0) target = $region37
    $region36: #{pmlp_sgc_forward.1} parent=1 // pred_region
      %94 = dma.done [#allocation6], 1024
    $region37: #{pmlp_sgc_forward.1} parent=1 // pred_fallthru
      _
    // Predicated region
    $region38: #{pmlp_sgc_forward.1} parent=1 // pred_check
      _
    $region39: #{pmlp_sgc_forward.1} parent=1 // pred_check_branch
      %96 = sbr.rel (0) target = $region41
    $region40: #{pmlp_sgc_forward.1} parent=1 // pred_region
      %97 = dma.done [#allocation9], 1024
    $region41: #{pmlp_sgc_forward.1} parent=1 // pred_fallthru
      _
    // Predicated region
    $region42: #{pmlp_sgc_forward.1} parent=1 // pred_check
      _
    $region43: #{pmlp_sgc_forward.1} parent=1 // pred_check_branch
      %99 = sbr.rel (0) target = $region45
    $region44: #{pmlp_sgc_forward.1} parent=1 // pred_region
      %100 = dma.done [#allocation9], 1024
    $region45: #{pmlp_sgc_forward.1} parent=1 // pred_fallthru
      _
    // Predicated region
    $region46: #{pmlp_sgc_forward.1} parent=1 // pred_check
      _
    $region47: #{pmlp_sgc_forward.1} parent=1 // pred_check_branch
      %102 = sbr.rel (0) target = $region49
    $region48: #{pmlp_sgc_forward.1} parent=1 // pred_region
      %103 = dma.done [#allocation12], 16
    $region49: #{pmlp_sgc_forward.1} parent=1 // pred_fallthru
      _
    %v105 = vld [vmem:[#allocation5] sm:$0xf]
    %v106 = vld [vmem:[#allocation5 + $0x4] sm:$0xf]
    %v107 = vld [vmem:[#allocation5 + $0x8] sm:$0xf]
    %v108 = vld [vmem:[#allocation5 + $0xc] sm:$0xf]
    %v109 = vld [vmem:[#allocation5 + $0x10] sm:$0xf]
    %v110 = vld [vmem:[#allocation5 + $0x14] sm:$0xf]
    %v111 = vld [vmem:[#allocation5 + $0x18] sm:$0xf]
    %v112 = vld [vmem:[#allocation5 + $0x1c] sm:$0xf]
    %v113 = vld [vmem:[#allocation5 + $0x20] sm:$0xf]
    %v114 = vld [vmem:[#allocation5 + $0x24] sm:$0xf]
    %v115 = vld [vmem:[#allocation5 + $0x28] sm:$0xf]
    %v116 = vld [vmem:[#allocation5 + $0x2c] sm:$0xf]
    %v117 = vld [vmem:[#allocation5 + $0x30] sm:$0xf]
    %v118 = vld [vmem:[#allocation5 + $0x34] sm:$0xf]
    %v119 = vld [vmem:[#allocation5 + $0x38] sm:$0xf]
    %v120 = vld [vmem:[#allocation5 + $0x3c] sm:$0xf]
    %v121 = vld [vmem:[#allocation5 + $0x40] sm:$0xf]
    %v122 = vld [vmem:[#allocation5 + $0x44] sm:$0xf]
    %v123 = vld [vmem:[#allocation5 + $0x48] sm:$0xf]
    %v124 = vld [vmem:[#allocation5 + $0x4c] sm:$0xf]
    %v125 = vld [vmem:[#allocation5 + $0x50] sm:$0xf]
    %v126 = vld [vmem:[#allocation5 + $0x54] sm:$0xf]
    %v127 = vld [vmem:[#allocation5 + $0x58] sm:$0xf]
    %v128 = vld [vmem:[#allocation5 + $0x5c] sm:$0xf]
    %v129 = vld [vmem:[#allocation5 + $0x60] sm:$0xf]
    %v130 = vld [vmem:[#allocation5 + $0x64] sm:$0xf]
    %v131 = vld [vmem:[#allocation5 + $0x68] sm:$0xf]
    %v132 = vld [vmem:[#allocation5 + $0x6c] sm:$0xf]
    %v133 = vld [vmem:[#allocation5 + $0x70] sm:$0xf]
    %v134 = vld [vmem:[#allocation5 + $0x74] sm:$0xf]
    %v135 = vld [vmem:[#allocation5 + $0x78] sm:$0xf]
    %v136 = vld [vmem:[#allocation5 + $0x7c] sm:$0xf]
    %v137 = vld [vmem:[#allocation5 + $0x80] sm:$0xf]
    %v138 = vld [vmem:[#allocation5 + $0x84] sm:$0xf]
    %v139 = vld [vmem:[#allocation5 + $0x88] sm:$0xf]
    %v140 = vld [vmem:[#allocation5 + $0x8c] sm:$0xf]
    %v141 = vld [vmem:[#allocation5 + $0x90] sm:$0xf]
    %v142 = vld [vmem:[#allocation5 + $0x94] sm:$0xf]
    %v143 = vld [vmem:[#allocation5 + $0x98] sm:$0xf]
    %v144 = vld [vmem:[#allocation5 + $0x9c] sm:$0xf]
    %v145 = vld [vmem:[#allocation5 + $0xa0] sm:$0xf]
    %v146 = vld [vmem:[#allocation5 + $0xa4] sm:$0xf]
    %v147 = vld [vmem:[#allocation5 + $0xa8] sm:$0xf]
    %v148 = vld [vmem:[#allocation5 + $0xac] sm:$0xf]
    %v149 = vld [vmem:[#allocation5 + $0xb0] sm:$0xf]
    %v150 = vld [vmem:[#allocation5 + $0xb4] sm:$0xf]
    %v151 = vld [vmem:[#allocation5 + $0xb8] sm:$0xf]
    %v152 = vld [vmem:[#allocation5 + $0xbc] sm:$0xf]
    %v153 = vld [vmem:[#allocation5 + $0xc0] sm:$0xf]
    %v154 = vld [vmem:[#allocation5 + $0xc4] sm:$0xf]
    %v155 = vld [vmem:[#allocation5 + $0xc8] sm:$0xf]
    %v156 = vld [vmem:[#allocation5 + $0xcc] sm:$0xf]
    %v157 = vld [vmem:[#allocation5 + $0xd0] sm:$0xf]
    %v158 = vld [vmem:[#allocation5 + $0xd4] sm:$0xf]
    %v159 = vld [vmem:[#allocation5 + $0xd8] sm:$0xf]
    %v160 = vld [vmem:[#allocation5 + $0xdc] sm:$0xf]
    %v161 = vld [vmem:[#allocation5 + $0xe0] sm:$0xf]
    %v162 = vld [vmem:[#allocation5 + $0xe4] sm:$0xf]
    %v163 = vld [vmem:[#allocation5 + $0xe8] sm:$0xf]
    %v164 = vld [vmem:[#allocation5 + $0xec] sm:$0xf]
    %v165 = vld [vmem:[#allocation5 + $0xf0] sm:$0xf]
    %v166 = vld [vmem:[#allocation5 + $0xf4] sm:$0xf]
    %v167 = vld [vmem:[#allocation5 + $0xf8] sm:$0xf]
    %v168 = vld [vmem:[#allocation5 + $0xfc] sm:$0xf]
    %v169 = vld [vmem:[#allocation2] sm:$0xff]
    %v170 = vld [vmem:[#allocation2 + $0x8] sm:$0xff]
    %v171 = vld [vmem:[#allocation2 + $0x10] sm:$0xff]
    %v172 = vld [vmem:[#allocation2 + $0x18] sm:$0xff]
    %v173 = vld [vmem:[#allocation2 + $0x20] sm:$0xff]
    %v174 = vld [vmem:[#allocation2 + $0x28] sm:$0xff]
    %v175 = vld [vmem:[#allocation2 + $0x30] sm:$0xff]
    %v176 = vld [vmem:[#allocation2 + $0x38] sm:$0xff]
    %v177 = vld [vmem:[#allocation2 + $0x40] sm:$0xff]
    %v178 = vld [vmem:[#allocation2 + $0x48] sm:$0xff]
    %v179 = vld [vmem:[#allocation2 + $0x50] sm:$0xff]
    %v180 = vld [vmem:[#allocation2 + $0x58] sm:$0xff]
    %v181 = vld [vmem:[#allocation2 + $0x60] sm:$0xff]
    %v182 = vld [vmem:[#allocation2 + $0x68] sm:$0xff]
    %v183 = vld [vmem:[#allocation2 + $0x70] sm:$0xff]
    %v184 = vld [vmem:[#allocation2 + $0x78] sm:$0xff]
    %v185 = vld [vmem:[#allocation2 + $0x80] sm:$0xff]
    %v186 = vld [vmem:[#allocation2 + $0x88] sm:$0xff]
    %v187 = vld [vmem:[#allocation2 + $0x90] sm:$0xff]
    %v188 = vld [vmem:[#allocation2 + $0x98] sm:$0xff]
    %v189 = vld [vmem:[#allocation2 + $0xa0] sm:$0xff]
    %v190 = vld [vmem:[#allocation2 + $0xa8] sm:$0xff]
    %v191 = vld [vmem:[#allocation2 + $0xb0] sm:$0xff]
    %v192 = vld [vmem:[#allocation2 + $0xb8] sm:$0xff]
    %v193 = vld [vmem:[#allocation2 + $0xc0] sm:$0xff]
    %v194 = vld [vmem:[#allocation2 + $0xc8] sm:$0xff]
    %v195 = vld [vmem:[#allocation2 + $0xd0] sm:$0xff]
    %v196 = vld [vmem:[#allocation2 + $0xd8] sm:$0xff]
    %v197 = vld [vmem:[#allocation2 + $0xe0] sm:$0xff]
    %v198 = vld [vmem:[#allocation2 + $0xe8] sm:$0xff]
    %v199 = vld [vmem:[#allocation2 + $0xf0] sm:$0xff]
    %v200 = vld [vmem:[#allocation2 + $0xf8] sm:$0xff]
    %v201 = vld [vmem:[#allocation2 + $0x100] sm:$0xff]
    %v202 = vld [vmem:[#allocation2 + $0x108] sm:$0xff]
    %v203 = vld [vmem:[#allocation2 + $0x110] sm:$0xff]
    %v204 = vld [vmem:[#allocation2 + $0x118] sm:$0xff]
    %v205 = vld [vmem:[#allocation2 + $0x120] sm:$0xff]
    %v206 = vld [vmem:[#allocation2 + $0x128] sm:$0xff]
    %v207 = vld [vmem:[#allocation2 + $0x130] sm:$0xff]
    %v208 = vld [vmem:[#allocation2 + $0x138] sm:$0xff]
    %v209 = vld [vmem:[#allocation2 + $0x140] sm:$0xff]
    %v210 = vld [vmem:[#allocation2 + $0x148] sm:$0xff]
    %v211 = vld [vmem:[#allocation2 + $0x150] sm:$0xff]
    %v212 = vld [vmem:[#allocation2 + $0x158] sm:$0xff]
    %v213 = vld [vmem:[#allocation2 + $0x160] sm:$0xff]
    %v214 = vld [vmem:[#allocation2 + $0x168] sm:$0xff]
    %v215 = vld [vmem:[#allocation2 + $0x170] sm:$0xff]
    %v216 = vld [vmem:[#allocation2 + $0x178] sm:$0xff]
    %v217 = vld [vmem:[#allocation2 + $0x180] sm:$0xff]
    %v218 = vld [vmem:[#allocation2 + $0x188] sm:$0xff]
    %v219 = vld [vmem:[#allocation2 + $0x190] sm:$0xff]
    %v220 = vld [vmem:[#allocation2 + $0x198] sm:$0xff]
    %v221 = vld [vmem:[#allocation2 + $0x1a0] sm:$0xff]
    %v222 = vld [vmem:[#allocation2 + $0x1a8] sm:$0xff]
    %v223 = vld [vmem:[#allocation2 + $0x1b0] sm:$0xff]
    %v224 = vld [vmem:[#allocation2 + $0x1b8] sm:$0xff]
    %v225 = vld [vmem:[#allocation2 + $0x1c0] sm:$0xff]
    %v226 = vld [vmem:[#allocation2 + $0x1c8] sm:$0xff]
    %v227 = vld [vmem:[#allocation2 + $0x1d0] sm:$0xff]
    %v228 = vld [vmem:[#allocation2 + $0x1d8] sm:$0xff]
    %v229 = vld [vmem:[#allocation2 + $0x1e0] sm:$0xff]
    %v230 = vld [vmem:[#allocation2 + $0x1e8] sm:$0xff]
    %v231 = vld [vmem:[#allocation2 + $0x1f0] sm:$0xff]
    %v232 = vld [vmem:[#allocation2 + $0x1f8] sm:$0xff]
    %v233 = vld [vmem:[#allocation2 + $0x200] sm:$0xff]
    %v234 = vld [vmem:[#allocation2 + $0x208] sm:$0xff]
    %v235 = vld [vmem:[#allocation2 + $0x210] sm:$0xff]
    %v236 = vld [vmem:[#allocation2 + $0x218] sm:$0xff]
    %v237 = vld [vmem:[#allocation2 + $0x220] sm:$0xff]
    %v238 = vld [vmem:[#allocation2 + $0x228] sm:$0xff]
    %v239 = vld [vmem:[#allocation2 + $0x230] sm:$0xff]
    %v240 = vld [vmem:[#allocation2 + $0x238] sm:$0xff]
    %v241 = vld [vmem:[#allocation2 + $0x240] sm:$0xff]
    %v242 = vld [vmem:[#allocation2 + $0x248] sm:$0xff]
    %v243 = vld [vmem:[#allocation2 + $0x250] sm:$0xff]
    %v244 = vld [vmem:[#allocation2 + $0x258] sm:$0xff]
    %v245 = vld [vmem:[#allocation2 + $0x260] sm:$0xff]
    %v246 = vld [vmem:[#allocation2 + $0x268] sm:$0xff]
    %v247 = vld [vmem:[#allocation2 + $0x270] sm:$0xff]
    %v248 = vld [vmem:[#allocation2 + $0x278] sm:$0xff]
    %v249 = vld [vmem:[#allocation2 + $0x280] sm:$0xff]
    %v250 = vld [vmem:[#allocation2 + $0x288] sm:$0xff]
    %v251 = vld [vmem:[#allocation2 + $0x290] sm:$0xff]
    %v252 = vld [vmem:[#allocation2 + $0x298] sm:$0xff]
    %v253 = vld [vmem:[#allocation2 + $0x2a0] sm:$0xff]
    %v254 = vld [vmem:[#allocation2 + $0x2a8] sm:$0xff]
    %v255 = vld [vmem:[#allocation2 + $0x2b0] sm:$0xff]
    %v256 = vld [vmem:[#allocation2 + $0x2b8] sm:$0xff]
    %v257 = vld [vmem:[#allocation2 + $0x2c0] sm:$0xff]
    %v258 = vld [vmem:[#allocation2 + $0x2c8] sm:$0xff]
    %v259 = vld [vmem:[#allocation2 + $0x2d0] sm:$0xff]
    %v260 = vld [vmem:[#allocation2 + $0x2d8] sm:$0xff]
    %v261 = vld [vmem:[#allocation2 + $0x2e0] sm:$0xff]
    %v262 = vld [vmem:[#allocation2 + $0x2e8] sm:$0xff]
    %v263 = vld [vmem:[#allocation2 + $0x2f0] sm:$0xff]
    %v264 = vld [vmem:[#allocation2 + $0x2f8] sm:$0xff]
    %v265 = vld [vmem:[#allocation2 + $0x300] sm:$0xff]
    %v266 = vld [vmem:[#allocation2 + $0x308] sm:$0xff]
    %v267 = vld [vmem:[#allocation2 + $0x310] sm:$0xff]
    %v268 = vld [vmem:[#allocation2 + $0x318] sm:$0xff]
    %v269 = vld [vmem:[#allocation2 + $0x320] sm:$0xff]
    %v270 = vld [vmem:[#allocation2 + $0x328] sm:$0xff]
    %v271 = vld [vmem:[#allocation2 + $0x330] sm:$0xff]
    %v272 = vld [vmem:[#allocation2 + $0x338] sm:$0xff]
    %v273 = vld [vmem:[#allocation2 + $0x340] sm:$0xff]
    %v274 = vld [vmem:[#allocation2 + $0x348] sm:$0xff]
    %v275 = vld [vmem:[#allocation2 + $0x350] sm:$0xff]
    %v276 = vld [vmem:[#allocation2 + $0x358] sm:$0xff]
    %v277 = vld [vmem:[#allocation2 + $0x360] sm:$0xff]
    %v278 = vld [vmem:[#allocation2 + $0x368] sm:$0xff]
    %v279 = vld [vmem:[#allocation2 + $0x370] sm:$0xff]
    %v280 = vld [vmem:[#allocation2 + $0x378] sm:$0xff]
    %v281 = vld [vmem:[#allocation2 + $0x380] sm:$0xff]
    %v282 = vld [vmem:[#allocation2 + $0x388] sm:$0xff]
    %v283 = vld [vmem:[#allocation2 + $0x390] sm:$0xff]
    %v284 = vld [vmem:[#allocation2 + $0x398] sm:$0xff]
    %v285 = vld [vmem:[#allocation2 + $0x3a0] sm:$0xff]
    %v286 = vld [vmem:[#allocation2 + $0x3a8] sm:$0xff]
    %v287 = vld [vmem:[#allocation2 + $0x3b0] sm:$0xff]
    %v288 = vld [vmem:[#allocation2 + $0x3b8] sm:$0xff]
    %v289 = vld [vmem:[#allocation2 + $0x3c0] sm:$0xff]
    %v290 = vld [vmem:[#allocation2 + $0x3c8] sm:$0xff]
    %v291 = vld [vmem:[#allocation2 + $0x3d0] sm:$0xff]
    %v292 = vld [vmem:[#allocation2 + $0x3d8] sm:$0xff]
    %v293 = vld [vmem:[#allocation2 + $0x3e0] sm:$0xff]
    %v294 = vld [vmem:[#allocation2 + $0x3e8] sm:$0xff]
    %v295 = vld [vmem:[#allocation2 + $0x3f0] sm:$0xff]
    %v296 = vld [vmem:[#allocation2 + $0x3f8] sm:$0xff]
    %v425 = vunpack.c.l.b16 %v169
    %v426 = vunpack.c.h.b16 %v169
    %v427 = vunpack.c.l.b16 %v170
    %v428 = vunpack.c.h.b16 %v170
    %v429 = vunpack.c.l.b16 %v171
    %v430 = vunpack.c.h.b16 %v171
    %v431 = vunpack.c.l.b16 %v172
    %v432 = vunpack.c.h.b16 %v172
    %v433 = vunpack.c.l.b16 %v173
    %v434 = vunpack.c.h.b16 %v173
    %v435 = vunpack.c.l.b16 %v174
    %v436 = vunpack.c.h.b16 %v174
    %v437 = vunpack.c.l.b16 %v175
    %v438 = vunpack.c.h.b16 %v175
    %v439 = vunpack.c.l.b16 %v176
    %v440 = vunpack.c.h.b16 %v176
    %v441 = vunpack.c.l.b16 %v177
    %v442 = vunpack.c.h.b16 %v177
    %v443 = vunpack.c.l.b16 %v178
    %v444 = vunpack.c.h.b16 %v178
    %v445 = vunpack.c.l.b16 %v179
    %v446 = vunpack.c.h.b16 %v179
    %v447 = vunpack.c.l.b16 %v180
    %v448 = vunpack.c.h.b16 %v180
    %v449 = vunpack.c.l.b16 %v181
    %v450 = vunpack.c.h.b16 %v181
    %v451 = vunpack.c.l.b16 %v182
    %v452 = vunpack.c.h.b16 %v182
    %v453 = vunpack.c.l.b16 %v183
    %v454 = vunpack.c.h.b16 %v183
    %v455 = vunpack.c.l.b16 %v184
    %v456 = vunpack.c.h.b16 %v184
    %v457 = vunpack.c.l.b16 %v185
    %v458 = vunpack.c.h.b16 %v185
    %v459 = vunpack.c.l.b16 %v186
    %v460 = vunpack.c.h.b16 %v186
    %v461 = vunpack.c.l.b16 %v187
    %v462 = vunpack.c.h.b16 %v187
    %v463 = vunpack.c.l.b16 %v188
    %v464 = vunpack.c.h.b16 %v188
    %v465 = vunpack.c.l.b16 %v189
    %v466 = vunpack.c.h.b16 %v189
    %v467 = vunpack.c.l.b16 %v190
    %v468 = vunpack.c.h.b16 %v190
    %v469 = vunpack.c.l.b16 %v191
    %v470 = vunpack.c.h.b16 %v191
    %v471 = vunpack.c.l.b16 %v192
    %v472 = vunpack.c.h.b16 %v192
    %v473 = vunpack.c.l.b16 %v193
    %v474 = vunpack.c.h.b16 %v193
    %v475 = vunpack.c.l.b16 %v194
    %v476 = vunpack.c.h.b16 %v194
    %v477 = vunpack.c.l.b16 %v195
    %v478 = vunpack.c.h.b16 %v195
    %v479 = vunpack.c.l.b16 %v196
    %v480 = vunpack.c.h.b16 %v196
    %v481 = vunpack.c.l.b16 %v197
    %v482 = vunpack.c.h.b16 %v197
    %v483 = vunpack.c.l.b16 %v198
    %v484 = vunpack.c.h.b16 %v198
    %v485 = vunpack.c.l.b16 %v199
    %v486 = vunpack.c.h.b16 %v199
    %v487 = vunpack.c.l.b16 %v200
    %v488 = vunpack.c.h.b16 %v200
    %v489 = vunpack.c.l.b16 %v201
    %v490 = vunpack.c.h.b16 %v201
    %v491 = vunpack.c.l.b16 %v202
    %v492 = vunpack.c.h.b16 %v202
    %v493 = vunpack.c.l.b16 %v203
    %v494 = vunpack.c.h.b16 %v203
    %v495 = vunpack.c.l.b16 %v204
    %v496 = vunpack.c.h.b16 %v204
    %v497 = vunpack.c.l.b16 %v205
    %v498 = vunpack.c.h.b16 %v205
    %v499 = vunpack.c.l.b16 %v206
    %v500 = vunpack.c.h.b16 %v206
    %v501 = vunpack.c.l.b16 %v207
    %v502 = vunpack.c.h.b16 %v207
    %v503 = vunpack.c.l.b16 %v208
    %v504 = vunpack.c.h.b16 %v208
    %v505 = vunpack.c.l.b16 %v209
    %v506 = vunpack.c.h.b16 %v209
    %v507 = vunpack.c.l.b16 %v210
    %v508 = vunpack.c.h.b16 %v210
    %v509 = vunpack.c.l.b16 %v211
    %v510 = vunpack.c.h.b16 %v211
    %v511 = vunpack.c.l.b16 %v212
    %v512 = vunpack.c.h.b16 %v212
    %v513 = vunpack.c.l.b16 %v213
    %v514 = vunpack.c.h.b16 %v213
    %v515 = vunpack.c.l.b16 %v214
    %v516 = vunpack.c.h.b16 %v214
    %v517 = vunpack.c.l.b16 %v215
    %v518 = vunpack.c.h.b16 %v215
    %v519 = vunpack.c.l.b16 %v216
    %v520 = vunpack.c.h.b16 %v216
    %v521 = vunpack.c.l.b16 %v217
    %v522 = vunpack.c.h.b16 %v217
    %v523 = vunpack.c.l.b16 %v218
    %v524 = vunpack.c.h.b16 %v218
    %v525 = vunpack.c.l.b16 %v219
    %v526 = vunpack.c.h.b16 %v219
    %v527 = vunpack.c.l.b16 %v220
    %v528 = vunpack.c.h.b16 %v220
    %v529 = vunpack.c.l.b16 %v221
    %v530 = vunpack.c.h.b16 %v221
    %v531 = vunpack.c.l.b16 %v222
    %v532 = vunpack.c.h.b16 %v222
    %v533 = vunpack.c.l.b16 %v223
    %v534 = vunpack.c.h.b16 %v223
    %v535 = vunpack.c.l.b16 %v224
    %v536 = vunpack.c.h.b16 %v224
    %v537 = vunpack.c.l.b16 %v225
    %v538 = vunpack.c.h.b16 %v225
    %v539 = vunpack.c.l.b16 %v226
    %v540 = vunpack.c.h.b16 %v226
    %v541 = vunpack.c.l.b16 %v227
    %v542 = vunpack.c.h.b16 %v227
    %v543 = vunpack.c.l.b16 %v228
    %v544 = vunpack.c.h.b16 %v228
    %v545 = vunpack.c.l.b16 %v229
    %v546 = vunpack.c.h.b16 %v229
    %v547 = vunpack.c.l.b16 %v230
    %v548 = vunpack.c.h.b16 %v230
    %v549 = vunpack.c.l.b16 %v231
    %v550 = vunpack.c.h.b16 %v231
    %v551 = vunpack.c.l.b16 %v232
    %v552 = vunpack.c.h.b16 %v232
    %v553 = vunpack.c.l.b16 %v233
    %v554 = vunpack.c.h.b16 %v233
    %v555 = vunpack.c.l.b16 %v234
    %v556 = vunpack.c.h.b16 %v234
    %v557 = vunpack.c.l.b16 %v235
    %v558 = vunpack.c.h.b16 %v235
    %v559 = vunpack.c.l.b16 %v236
    %v560 = vunpack.c.h.b16 %v236
    %v561 = vunpack.c.l.b16 %v237
    %v562 = vunpack.c.h.b16 %v237
    %v563 = vunpack.c.l.b16 %v238
    %v564 = vunpack.c.h.b16 %v238
    %v565 = vunpack.c.l.b16 %v239
    %v566 = vunpack.c.h.b16 %v239
    %v567 = vunpack.c.l.b16 %v240
    %v568 = vunpack.c.h.b16 %v240
    %v569 = vunpack.c.l.b16 %v241
    %v570 = vunpack.c.h.b16 %v241
    %v571 = vunpack.c.l.b16 %v242
    %v572 = vunpack.c.h.b16 %v242
    %v573 = vunpack.c.l.b16 %v243
    %v574 = vunpack.c.h.b16 %v243
    %v575 = vunpack.c.l.b16 %v244
    %v576 = vunpack.c.h.b16 %v244
    %v577 = vunpack.c.l.b16 %v245
    %v578 = vunpack.c.h.b16 %v245
    %v579 = vunpack.c.l.b16 %v246
    %v580 = vunpack.c.h.b16 %v246
    %v581 = vunpack.c.l.b16 %v247
    %v582 = vunpack.c.h.b16 %v247
    %v583 = vunpack.c.l.b16 %v248
    %v584 = vunpack.c.h.b16 %v248
    %v585 = vunpack.c.l.b16 %v249
    %v586 = vunpack.c.h.b16 %v249
    %v587 = vunpack.c.l.b16 %v250
    %v588 = vunpack.c.h.b16 %v250
    %v589 = vunpack.c.l.b16 %v251
    %v590 = vunpack.c.h.b16 %v251
    %v591 = vunpack.c.l.b16 %v252
    %v592 = vunpack.c.h.b16 %v252
    %v593 = vunpack.c.l.b16 %v253
    %v594 = vunpack.c.h.b16 %v253
    %v595 = vunpack.c.l.b16 %v254
    %v596 = vunpack.c.h.b16 %v254
    %v597 = vunpack.c.l.b16 %v255
    %v598 = vunpack.c.h.b16 %v255
    %v599 = vunpack.c.l.b16 %v256
    %v600 = vunpack.c.h.b16 %v256
    %v601 = vunpack.c.l.b16 %v257
    %v602 = vunpack.c.h.b16 %v257
    %v603 = vunpack.c.l.b16 %v258
    %v604 = vunpack.c.h.b16 %v258
    %v605 = vunpack.c.l.b16 %v259
    %v606 = vunpack.c.h.b16 %v259
    %v607 = vunpack.c.l.b16 %v260
    %v608 = vunpack.c.h.b16 %v260
    %v609 = vunpack.c.l.b16 %v261
    %v610 = vunpack.c.h.b16 %v261
    %v611 = vunpack.c.l.b16 %v262
    %v612 = vunpack.c.h.b16 %v262
    %v613 = vunpack.c.l.b16 %v263
    %v614 = vunpack.c.h.b16 %v263
    %v615 = vunpack.c.l.b16 %v264
    %v616 = vunpack.c.h.b16 %v264
    %v617 = vunpack.c.l.b16 %v265
    %v618 = vunpack.c.h.b16 %v265
    %v619 = vunpack.c.l.b16 %v266
    %v620 = vunpack.c.h.b16 %v266
    %v621 = vunpack.c.l.b16 %v267
    %v622 = vunpack.c.h.b16 %v267
    %v623 = vunpack.c.l.b16 %v268
    %v624 = vunpack.c.h.b16 %v268
    %v625 = vunpack.c.l.b16 %v269
    %v626 = vunpack.c.h.b16 %v269
    %v627 = vunpack.c.l.b16 %v270
    %v628 = vunpack.c.h.b16 %v270
    %v629 = vunpack.c.l.b16 %v271
    %v630 = vunpack.c.h.b16 %v271
    %v631 = vunpack.c.l.b16 %v272
    %v632 = vunpack.c.h.b16 %v272
    %v633 = vunpack.c.l.b16 %v273
    %v634 = vunpack.c.h.b16 %v273
    %v635 = vunpack.c.l.b16 %v274
    %v636 = vunpack.c.h.b16 %v274
    %v637 = vunpack.c.l.b16 %v275
    %v638 = vunpack.c.h.b16 %v275
    %v639 = vunpack.c.l.b16 %v276
    %v640 = vunpack.c.h.b16 %v276
    %v641 = vunpack.c.l.b16 %v277
    %v642 = vunpack.c.h.b16 %v277
    %v643 = vunpack.c.l.b16 %v278
    %v644 = vunpack.c.h.b16 %v278
    %v645 = vunpack.c.l.b16 %v279
    %v646 = vunpack.c.h.b16 %v279
    %v647 = vunpack.c.l.b16 %v280
    %v648 = vunpack.c.h.b16 %v280
    %v649 = vunpack.c.l.b16 %v281
    %v650 = vunpack.c.h.b16 %v281
    %v651 = vunpack.c.l.b16 %v282
    %v652 = vunpack.c.h.b16 %v282
    %v653 = vunpack.c.l.b16 %v283
    %v654 = vunpack.c.h.b16 %v283
    %v655 = vunpack.c.l.b16 %v284
    %v656 = vunpack.c.h.b16 %v284
    %v657 = vunpack.c.l.b16 %v285
    %v658 = vunpack.c.h.b16 %v285
    %v659 = vunpack.c.l.b16 %v286
    %v660 = vunpack.c.h.b16 %v286
    %v661 = vunpack.c.l.b16 %v287
    %v662 = vunpack.c.h.b16 %v287
    %v663 = vunpack.c.l.b16 %v288
    %v664 = vunpack.c.h.b16 %v288
    %v665 = vunpack.c.l.b16 %v289
    %v666 = vunpack.c.h.b16 %v289
    %v667 = vunpack.c.l.b16 %v290
    %v668 = vunpack.c.h.b16 %v290
    %v669 = vunpack.c.l.b16 %v291
    %v670 = vunpack.c.h.b16 %v291
    %v671 = vunpack.c.l.b16 %v292
    %v672 = vunpack.c.h.b16 %v292
    %v673 = vunpack.c.l.b16 %v293
    %v674 = vunpack.c.h.b16 %v293
    %v675 = vunpack.c.l.b16 %v294
    %v676 = vunpack.c.h.b16 %v294
    %v677 = vunpack.c.l.b16 %v295
    %v678 = vunpack.c.h.b16 %v295
    %v679 = vunpack.c.l.b16 %v296
    %v680 = vunpack.c.h.b16 %v296
    %v681 = vpack.c.b16 %v429, %v425
    %v682 = vpack.c.b16 %v430, %v426
    %v683 = vpack.c.b16 %v431, %v427
    %v684 = vpack.c.b16 %v432, %v428
    %v685 = vpack.c.b16 %v437, %v433
    %v686 = vpack.c.b16 %v438, %v434
    %v687 = vpack.c.b16 %v439, %v435
    %v688 = vpack.c.b16 %v440, %v436
    %v689 = vpack.c.b16 %v445, %v441
    %v690 = vpack.c.b16 %v446, %v442
    %v691 = vpack.c.b16 %v447, %v443
    %v692 = vpack.c.b16 %v448, %v444
    %v693 = vpack.c.b16 %v453, %v449
    %v694 = vpack.c.b16 %v454, %v450
    %v695 = vpack.c.b16 %v455, %v451
    %v696 = vpack.c.b16 %v456, %v452
    %v697 = vpack.c.b16 %v461, %v457
    %v698 = vpack.c.b16 %v462, %v458
    %v699 = vpack.c.b16 %v463, %v459
    %v700 = vpack.c.b16 %v464, %v460
    %v701 = vpack.c.b16 %v469, %v465
    %v702 = vpack.c.b16 %v470, %v466
    %v703 = vpack.c.b16 %v471, %v467
    %v704 = vpack.c.b16 %v472, %v468
    %v705 = vpack.c.b16 %v477, %v473
    %v706 = vpack.c.b16 %v478, %v474
    %v707 = vpack.c.b16 %v479, %v475
    %v708 = vpack.c.b16 %v480, %v476
    %v709 = vpack.c.b16 %v485, %v481
    %v710 = vpack.c.b16 %v486, %v482
    %v711 = vpack.c.b16 %v487, %v483
    %v712 = vpack.c.b16 %v488, %v484
    %v713 = vpack.c.b16 %v493, %v489
    %v714 = vpack.c.b16 %v494, %v490
    %v715 = vpack.c.b16 %v495, %v491
    %v716 = vpack.c.b16 %v496, %v492
    %v717 = vpack.c.b16 %v501, %v497
    %v718 = vpack.c.b16 %v502, %v498
    %v719 = vpack.c.b16 %v503, %v499
    %v720 = vpack.c.b16 %v504, %v500
    %v721 = vpack.c.b16 %v509, %v505
    %v722 = vpack.c.b16 %v510, %v506
    %v723 = vpack.c.b16 %v511, %v507
    %v724 = vpack.c.b16 %v512, %v508
    %v725 = vpack.c.b16 %v517, %v513
    %v726 = vpack.c.b16 %v518, %v514
    %v727 = vpack.c.b16 %v519, %v515
    %v728 = vpack.c.b16 %v520, %v516
    %v729 = vpack.c.b16 %v525, %v521
    %v730 = vpack.c.b16 %v526, %v522
    %v731 = vpack.c.b16 %v527, %v523
    %v732 = vpack.c.b16 %v528, %v524
    %v733 = vpack.c.b16 %v533, %v529
    %v734 = vpack.c.b16 %v534, %v530
    %v735 = vpack.c.b16 %v535, %v531
    %v736 = vpack.c.b16 %v536, %v532
    %v737 = vpack.c.b16 %v541, %v537
    %v738 = vpack.c.b16 %v542, %v538
    %v739 = vpack.c.b16 %v543, %v539
    %v740 = vpack.c.b16 %v544, %v540
    %v741 = vpack.c.b16 %v549, %v545
    %v742 = vpack.c.b16 %v550, %v546
    %v743 = vpack.c.b16 %v551, %v547
    %v744 = vpack.c.b16 %v552, %v548
    %v745 = vpack.c.b16 %v557, %v553
    %v746 = vpack.c.b16 %v558, %v554
    %v747 = vpack.c.b16 %v559, %v555
    %v748 = vpack.c.b16 %v560, %v556
    %v749 = vpack.c.b16 %v565, %v561
    %v750 = vpack.c.b16 %v566, %v562
    %v751 = vpack.c.b16 %v567, %v563
    %v752 = vpack.c.b16 %v568, %v564
    %v753 = vpack.c.b16 %v573, %v569
    %v754 = vpack.c.b16 %v574, %v570
    %v755 = vpack.c.b16 %v575, %v571
    %v756 = vpack.c.b16 %v576, %v572
    %v757 = vpack.c.b16 %v581, %v577
    %v758 = vpack.c.b16 %v582, %v578
    %v759 = vpack.c.b16 %v583, %v579
    %v760 = vpack.c.b16 %v584, %v580
    %v761 = vpack.c.b16 %v589, %v585
    %v762 = vpack.c.b16 %v590, %v586
    %v763 = vpack.c.b16 %v591, %v587
    %v764 = vpack.c.b16 %v592, %v588
    %v765 = vpack.c.b16 %v597, %v593
    %v766 = vpack.c.b16 %v598, %v594
    %v767 = vpack.c.b16 %v599, %v595
    %v768 = vpack.c.b16 %v600, %v596
    %v769 = vpack.c.b16 %v605, %v601
    %v770 = vpack.c.b16 %v606, %v602
    %v771 = vpack.c.b16 %v607, %v603
    %v772 = vpack.c.b16 %v608, %v604
    %v773 = vpack.c.b16 %v613, %v609
    %v774 = vpack.c.b16 %v614, %v610
    %v775 = vpack.c.b16 %v615, %v611
    %v776 = vpack.c.b16 %v616, %v612
    %v777 = vpack.c.b16 %v621, %v617
    %v778 = vpack.c.b16 %v622, %v618
    %v779 = vpack.c.b16 %v623, %v619
    %v780 = vpack.c.b16 %v624, %v620
    %v781 = vpack.c.b16 %v629, %v625
    %v782 = vpack.c.b16 %v630, %v626
    %v783 = vpack.c.b16 %v631, %v627
    %v784 = vpack.c.b16 %v632, %v628
    %v785 = vpack.c.b16 %v637, %v633
    %v786 = vpack.c.b16 %v638, %v634
    %v787 = vpack.c.b16 %v639, %v635
    %v788 = vpack.c.b16 %v640, %v636
    %v789 = vpack.c.b16 %v645, %v641
    %v790 = vpack.c.b16 %v646, %v642
    %v791 = vpack.c.b16 %v647, %v643
    %v792 = vpack.c.b16 %v648, %v644
    %v793 = vpack.c.b16 %v653, %v649
    %v794 = vpack.c.b16 %v654, %v650
    %v795 = vpack.c.b16 %v655, %v651
    %v796 = vpack.c.b16 %v656, %v652
    %v797 = vpack.c.b16 %v661, %v657
    %v798 = vpack.c.b16 %v662, %v658
    %v799 = vpack.c.b16 %v663, %v659
    %v800 = vpack.c.b16 %v664, %v660
    %v801 = vpack.c.b16 %v669, %v665
    %v802 = vpack.c.b16 %v670, %v666
    %v803 = vpack.c.b16 %v671, %v667
    %v804 = vpack.c.b16 %v672, %v668
    %v805 = vpack.c.b16 %v677, %v673
    %v806 = vpack.c.b16 %v678, %v674
    %v807 = vpack.c.b16 %v679, %v675
    %v808 = vpack.c.b16 %v680, %v676
    %v1001 = vunpack.c.l.b16 %v105
    %v1002 = vunpack.c.l.b16 %v106
    %v1003 = vunpack.c.l.b16 %v107
    %v1004 = vunpack.c.l.b16 %v108
    %v1005 = vunpack.c.l.b16 %v109
    %v1006 = vunpack.c.l.b16 %v110
    %v1007 = vunpack.c.l.b16 %v111
    %v1008 = vunpack.c.l.b16 %v112
    %v1009 = vunpack.c.l.b16 %v113
    %v1010 = vunpack.c.l.b16 %v114
    %v1011 = vunpack.c.l.b16 %v115
    %v1012 = vunpack.c.l.b16 %v116
    %v1013 = vunpack.c.l.b16 %v117
    %v1014 = vunpack.c.l.b16 %v118
    %v1015 = vunpack.c.l.b16 %v119
    %v1016 = vunpack.c.l.b16 %v120
    %v1017 = vunpack.c.l.b16 %v121
    %v1018 = vunpack.c.l.b16 %v122
    %v1019 = vunpack.c.l.b16 %v123
    %v1020 = vunpack.c.l.b16 %v124
    %v1021 = vunpack.c.l.b16 %v125
    %v1022 = vunpack.c.l.b16 %v126
    %v1023 = vunpack.c.l.b16 %v127
    %v1024 = vunpack.c.l.b16 %v128
    %v1025 = vunpack.c.l.b16 %v129
    %v1026 = vunpack.c.l.b16 %v130
    %v1027 = vunpack.c.l.b16 %v131
    %v1028 = vunpack.c.l.b16 %v132
    %v1029 = vunpack.c.l.b16 %v133
    %v1030 = vunpack.c.l.b16 %v134
    %v1031 = vunpack.c.l.b16 %v135
    %v1032 = vunpack.c.l.b16 %v136
    %v1033 = vunpack.c.l.b16 %v137
    %v1034 = vunpack.c.l.b16 %v138
    %v1035 = vunpack.c.l.b16 %v139
    %v1036 = vunpack.c.l.b16 %v140
    %v1037 = vunpack.c.l.b16 %v141
    %v1038 = vunpack.c.l.b16 %v142
    %v1039 = vunpack.c.l.b16 %v143
    %v1040 = vunpack.c.l.b16 %v144
    %v1041 = vunpack.c.l.b16 %v145
    %v1042 = vunpack.c.l.b16 %v146
    %v1043 = vunpack.c.l.b16 %v147
    %v1044 = vunpack.c.l.b16 %v148
    %v1045 = vunpack.c.l.b16 %v149
    %v1046 = vunpack.c.l.b16 %v150
    %v1047 = vunpack.c.l.b16 %v151
    %v1048 = vunpack.c.l.b16 %v152
    %v1049 = vunpack.c.l.b16 %v153
    %v1050 = vunpack.c.l.b16 %v154
    %v1051 = vunpack.c.l.b16 %v155
    %v1052 = vunpack.c.l.b16 %v156
    %v1053 = vunpack.c.l.b16 %v157
    %v1054 = vunpack.c.l.b16 %v158
    %v1055 = vunpack.c.l.b16 %v159
    %v1056 = vunpack.c.l.b16 %v160
    %v1057 = vunpack.c.l.b16 %v161
    %v1058 = vunpack.c.l.b16 %v162
    %v1059 = vunpack.c.l.b16 %v163
    %v1060 = vunpack.c.l.b16 %v164
    %v1061 = vunpack.c.l.b16 %v165
    %v1062 = vunpack.c.l.b16 %v166
    %v1063 = vunpack.c.l.b16 %v167
    %v1064 = vunpack.c.l.b16 %v168
    %v1065 = vpack.c.b16 %v1002, %v1001
    %v1066 = vpack.c.b16 %v1004, %v1003
    %v1067 = vpack.c.b16 %v1006, %v1005
    %v1068 = vpack.c.b16 %v1008, %v1007
    %v1069 = vpack.c.b16 %v1010, %v1009
    %v1070 = vpack.c.b16 %v1012, %v1011
    %v1071 = vpack.c.b16 %v1014, %v1013
    %v1072 = vpack.c.b16 %v1016, %v1015
    %v1073 = vpack.c.b16 %v1018, %v1017
    %v1074 = vpack.c.b16 %v1020, %v1019
    %v1075 = vpack.c.b16 %v1022, %v1021
    %v1076 = vpack.c.b16 %v1024, %v1023
    %v1077 = vpack.c.b16 %v1026, %v1025
    %v1078 = vpack.c.b16 %v1028, %v1027
    %v1079 = vpack.c.b16 %v1030, %v1029
    %v1080 = vpack.c.b16 %v1032, %v1031
    %v1081 = vpack.c.b16 %v1034, %v1033
    %v1082 = vpack.c.b16 %v1036, %v1035
    %v1083 = vpack.c.b16 %v1038, %v1037
    %v1084 = vpack.c.b16 %v1040, %v1039
    %v1085 = vpack.c.b16 %v1042, %v1041
    %v1086 = vpack.c.b16 %v1044, %v1043
    %v1087 = vpack.c.b16 %v1046, %v1045
    %v1088 = vpack.c.b16 %v1048, %v1047
    %v1089 = vpack.c.b16 %v1050, %v1049
    %v1090 = vpack.c.b16 %v1052, %v1051
    %v1091 = vpack.c.b16 %v1054, %v1053
    %v1092 = vpack.c.b16 %v1056, %v1055
    %v1093 = vpack.c.b16 %v1058, %v1057
    %v1094 = vpack.c.b16 %v1060, %v1059
    %v1095 = vpack.c.b16 %v1062, %v1061
    %v1096 = vpack.c.b16 %v1064, %v1063
    %1129 = vmatprep.subr.bf16.mxu0 0
    %1130 = vmatpush1.bf16.msra.mxu0 %v1065
    %1131 = vmatprep.subr.bf16.mxu0 0
    %1132 = vmatpush1.bf16.msra.mxu0 %v1066
    %1133 = vmatprep.subr.bf16.mxu0 0
    %1134 = vmatpush1.bf16.msra.mxu0 %v1067
    %1135 = vmatprep.subr.bf16.mxu0 0
    %1136 = vmatpush1.bf16.msra.mxu0 %v1068
    %1137 = vmatprep.subr.bf16.mxu0 0
    %1138 = vmatpush1.bf16.msra.mxu0 %v1069
    %1139 = vmatprep.subr.bf16.mxu0 0
    %1140 = vmatpush1.bf16.msra.mxu0 %v1070
    %1141 = vmatprep.subr.bf16.mxu0 0
    %1142 = vmatpush1.bf16.msra.mxu0 %v1071
    %1143 = vmatprep.subr.bf16.mxu0 0
    %1144 = vmatpush1.bf16.msra.mxu0 %v1072
    %1145 = vmatprep.subr.bf16.mxu0 0
    %1146 = vmatpush1.bf16.msra.mxu0 %v1073
    %1147 = vmatprep.subr.bf16.mxu0 0
    %1148 = vmatpush1.bf16.msra.mxu0 %v1074
    %1149 = vmatprep.subr.bf16.mxu0 0
    %1150 = vmatpush1.bf16.msra.mxu0 %v1075
    %1151 = vmatprep.subr.bf16.mxu0 0
    %1152 = vmatpush1.bf16.msra.mxu0 %v1076
    %1153 = vmatprep.subr.bf16.mxu0 0
    %1154 = vmatpush1.bf16.msra.mxu0 %v1077
    %1155 = vmatprep.subr.bf16.mxu0 0
    %1156 = vmatpush1.bf16.msra.mxu0 %v1078
    %1157 = vmatprep.subr.bf16.mxu0 0
    %1158 = vmatpush1.bf16.msra.mxu0 %v1079
    %1159 = vmatprep.subr.bf16.mxu0 0
    %1160 = vmatpush1.bf16.msra.mxu0 %v1080
    %1161 = vmatprep.mubr.bf16.mxu0 %v682
    %1162 = vmatmul.mubr.bf16.gmra.mrb[0].mxu0 %v681
    %v1163 = vpop.f32.mrb[0].mxu0
    %v1164 = vadd.f32 0.0, %v1163
    %v1165 = vpop.f32.mrb[0].mxu0
    %v1166 = vpop.f32.mrb[0].mxu0
    %v1167 = vadd.f32 0.0, %v1166
    %v1168 = vpop.f32.mrb[0].mxu0
    %1169 = vmatprep.mubr.bf16.mxu0 %v686
    %1170 = vmatmul.mubr.bf16.gmra.mrb[0].mxu0 %v685
    %v1171 = vpop.f32.mrb[0].mxu0
    %v1172 = vadd.f32 0.0, %v1171
    %v1173 = vpop.f32.mrb[0].mxu0
    %v1174 = vpop.f32.mrb[0].mxu0
    %v1175 = vadd.f32 0.0, %v1174
    %v1176 = vpop.f32.mrb[0].mxu0
    %1177 = vmatprep.mubr.bf16.mxu0 %v690
    %1178 = vmatmul.mubr.bf16.gmra.mrb[0].mxu0 %v689
    %v1179 = vpop.f32.mrb[0].mxu0
    %v1180 = vadd.f32 0.0, %v1179
    %v1181 = vpop.f32.mrb[0].mxu0
    %v1182 = vpop.f32.mrb[0].mxu0
    %v1183 = vadd.f32 0.0, %v1182
    %v1184 = vpop.f32.mrb[0].mxu0
    %1185 = vmatprep.mubr.bf16.mxu0 %v694
    %1186 = vmatmul.mubr.bf16.gmra.mrb[0].mxu0 %v693
    %v1187 = vpop.f32.mrb[0].mxu0
    %v1188 = vadd.f32 0.0, %v1187
    %v1189 = vpop.f32.mrb[0].mxu0
    %v1190 = vpop.f32.mrb[0].mxu0
    %v1191 = vadd.f32 0.0, %v1190
    %v1192 = vpop.f32.mrb[0].mxu0
    %1193 = vmatprep.mubr.bf16.mxu0 %v698
    %1194 = vmatmul.mubr.bf16.gmra.mrb[0].mxu0 %v697
    %v1195 = vpop.f32.mrb[0].mxu0
    %v1196 = vadd.f32 0.0, %v1195
    %v1197 = vpop.f32.mrb[0].mxu0
    %v1198 = vpop.f32.mrb[0].mxu0
    %v1199 = vadd.f32 0.0, %v1198
    %v1200 = vpop.f32.mrb[0].mxu0
    %1201 = vmatprep.mubr.bf16.mxu0 %v702
    %1202 = vmatmul.mubr.bf16.gmra.mrb[0].mxu0 %v701
    %v1203 = vpop.f32.mrb[0].mxu0
    %v1204 = vadd.f32 0.0, %v1203
    %v1205 = vpop.f32.mrb[0].mxu0
    %v1206 = vpop.f32.mrb[0].mxu0
    %v1207 = vadd.f32 0.0, %v1206
    %v1208 = vpop.f32.mrb[0].mxu0
    %1209 = vmatprep.mubr.bf16.mxu0 %v706
    %1210 = vmatmul.mubr.bf16.gmra.mrb[0].mxu0 %v705
    %v1211 = vpop.f32.mrb[0].mxu0
    %v1212 = vadd.f32 0.0, %v1211
    %v1213 = vpop.f32.mrb[0].mxu0
    %v1214 = vpop.f32.mrb[0].mxu0
    %v1215 = vadd.f32 0.0, %v1214
    %v1216 = vpop.f32.mrb[0].mxu0
    %1217 = vmatprep.mubr.bf16.mxu0 %v710
    %1218 = vmatmul.mubr.bf16.gmra.mrb[0].mxu0 %v709
    %v1219 = vpop.f32.mrb[0].mxu0
    %v1220 = vadd.f32 0.0, %v1219
    %v1221 = vpop.f32.mrb[0].mxu0
    %v1222 = vpop.f32.mrb[0].mxu0
    %v1223 = vadd.f32 0.0, %v1222
    %v1224 = vpop.f32.mrb[0].mxu0
    %1225 = vmatprep.mubr.bf16.mxu0 %v714
    %1226 = vmatmul.mubr.bf16.gmra.mrb[0].mxu0 %v713
    %v1227 = vpop.f32.mrb[0].mxu0
    %v1228 = vadd.f32 0.0, %v1227
    %v1229 = vpop.f32.mrb[0].mxu0
    %v1230 = vpop.f32.mrb[0].mxu0
    %v1231 = vadd.f32 0.0, %v1230
    %v1232 = vpop.f32.mrb[0].mxu0
    %1233 = vmatprep.mubr.bf16.mxu0 %v718
    %1234 = vmatmul.mubr.bf16.gmra.mrb[0].mxu0 %v717
    %v1235 = vpop.f32.mrb[0].mxu0
    %v1236 = vadd.f32 0.0, %v1235
    %v1237 = vpop.f32.mrb[0].mxu0
    %v1238 = vpop.f32.mrb[0].mxu0
    %v1239 = vadd.f32 0.0, %v1238
    %v1240 = vpop.f32.mrb[0].mxu0
    %1241 = vmatprep.mubr.bf16.mxu0 %v722
    %1242 = vmatmul.mubr.bf16.gmra.mrb[0].mxu0 %v721
    %v1243 = vpop.f32.mrb[0].mxu0
    %v1244 = vadd.f32 0.0, %v1243
    %v1245 = vpop.f32.mrb[0].mxu0
    %v1246 = vpop.f32.mrb[0].mxu0
    %v1247 = vadd.f32 0.0, %v1246
    %v1248 = vpop.f32.mrb[0].mxu0
    %1249 = vmatprep.mubr.bf16.mxu0 %v726
    %1250 = vmatmul.mubr.bf16.gmra.mrb[0].mxu0 %v725
    %v1251 = vpop.f32.mrb[0].mxu0
    %v1252 = vadd.f32 0.0, %v1251
    %v1253 = vpop.f32.mrb[0].mxu0
    %v1254 = vpop.f32.mrb[0].mxu0
    %v1255 = vadd.f32 0.0, %v1254
    %v1256 = vpop.f32.mrb[0].mxu0
    %1257 = vmatprep.mubr.bf16.mxu0 %v730
    %1258 = vmatmul.mubr.bf16.gmra.mrb[0].mxu0 %v729
    %v1259 = vpop.f32.mrb[0].mxu0
    %v1260 = vadd.f32 0.0, %v1259
    %v1261 = vpop.f32.mrb[0].mxu0
    %v1262 = vpop.f32.mrb[0].mxu0
    %v1263 = vadd.f32 0.0, %v1262
    %v1264 = vpop.f32.mrb[0].mxu0
    %1265 = vmatprep.mubr.bf16.mxu0 %v734
    %1266 = vmatmul.mubr.bf16.gmra.mrb[0].mxu0 %v733
    %v1267 = vpop.f32.mrb[0].mxu0
    %v1268 = vadd.f32 0.0, %v1267
    %v1269 = vpop.f32.mrb[0].mxu0
    %v1270 = vpop.f32.mrb[0].mxu0
    %v1271 = vadd.f32 0.0, %v1270
    %v1272 = vpop.f32.mrb[0].mxu0
    %1273 = vmatprep.mubr.bf16.mxu0 %v738
    %1274 = vmatmul.mubr.bf16.gmra.mrb[0].mxu0 %v737
    %v1275 = vpop.f32.mrb[0].mxu0
    %v1276 = vadd.f32 0.0, %v1275
    %v1277 = vpop.f32.mrb[0].mxu0
    %v1278 = vpop.f32.mrb[0].mxu0
    %v1279 = vadd.f32 0.0, %v1278
    %v1280 = vpop.f32.mrb[0].mxu0
    %1281 = vmatprep.mubr.bf16.mxu0 %v742
    %1282 = vmatmul.mubr.bf16.gmra.mrb[0].mxu0 %v741
    %v1283 = vpop.f32.mrb[0].mxu0
    %v1284 = vadd.f32 0.0, %v1283
    %v1285 = vpop.f32.mrb[0].mxu0
    %v1286 = vpop.f32.mrb[0].mxu0
    %v1287 = vadd.f32 0.0, %v1286
    %v1288 = vpop.f32.mrb[0].mxu0
    %1289 = vmatprep.mubr.bf16.mxu0 %v746
    %1290 = vmatmul.mubr.bf16.gmra.mrb[0].mxu0 %v745
    %v1291 = vpop.f32.mrb[0].mxu0
    %v1292 = vadd.f32 0.0, %v1291
    %v1293 = vpop.f32.mrb[0].mxu0
    %v1294 = vpop.f32.mrb[0].mxu0
    %v1295 = vadd.f32 0.0, %v1294
    %v1296 = vpop.f32.mrb[0].mxu0
    %1297 = vmatprep.mubr.bf16.mxu0 %v750
    %1298 = vmatmul.mubr.bf16.gmra.mrb[0].mxu0 %v749
    %v1299 = vpop.f32.mrb[0].mxu0
    %v1300 = vadd.f32 0.0, %v1299
    %v1301 = vpop.f32.mrb[0].mxu0
    %v1302 = vpop.f32.mrb[0].mxu0
    %v1303 = vadd.f32 0.0, %v1302
    %v1304 = vpop.f32.mrb[0].mxu0
    %1305 = vmatprep.mubr.bf16.mxu0 %v754
    %1306 = vmatmul.mubr.bf16.gmra.mrb[0].mxu0 %v753
    %v1307 = vpop.f32.mrb[0].mxu0
    %v1308 = vadd.f32 0.0, %v1307
    %v1309 = vpop.f32.mrb[0].mxu0
    %v1310 = vpop.f32.mrb[0].mxu0
    %v1311 = vadd.f32 0.0, %v1310
    %v1312 = vpop.f32.mrb[0].mxu0
    %1313 = vmatprep.mubr.bf16.mxu0 %v758
    %1314 = vmatmul.mubr.bf16.gmra.mrb[0].mxu0 %v757
    %v1315 = vpop.f32.mrb[0].mxu0
    %v1316 = vadd.f32 0.0, %v1315
    %v1317 = vpop.f32.mrb[0].mxu0
    %v1318 = vpop.f32.mrb[0].mxu0
    %v1319 = vadd.f32 0.0, %v1318
    %v1320 = vpop.f32.mrb[0].mxu0
    %1321 = vmatprep.mubr.bf16.mxu0 %v762
    %1322 = vmatmul.mubr.bf16.gmra.mrb[0].mxu0 %v761
    %v1323 = vpop.f32.mrb[0].mxu0
    %v1324 = vadd.f32 0.0, %v1323
    %v1325 = vpop.f32.mrb[0].mxu0
    %v1326 = vpop.f32.mrb[0].mxu0
    %v1327 = vadd.f32 0.0, %v1326
    %v1328 = vpop.f32.mrb[0].mxu0
    %1329 = vmatprep.mubr.bf16.mxu0 %v766
    %1330 = vmatmul.mubr.bf16.gmra.mrb[0].mxu0 %v765
    %v1331 = vpop.f32.mrb[0].mxu0
    %v1332 = vadd.f32 0.0, %v1331
    %v1333 = vpop.f32.mrb[0].mxu0
    %v1334 = vpop.f32.mrb[0].mxu0
    %v1335 = vadd.f32 0.0, %v1334
    %v1336 = vpop.f32.mrb[0].mxu0
    %1337 = vmatprep.mubr.bf16.mxu0 %v770
    %1338 = vmatmul.mubr.bf16.gmra.mrb[0].mxu0 %v769
    %v1339 = vpop.f32.mrb[0].mxu0
    %v1340 = vadd.f32 0.0, %v1339
    %v1341 = vpop.f32.mrb[0].mxu0
    %v1342 = vpop.f32.mrb[0].mxu0
    %v1343 = vadd.f32 0.0, %v1342
    %v1344 = vpop.f32.mrb[0].mxu0
    %1345 = vmatprep.mubr.bf16.mxu0 %v774
    %1346 = vmatmul.mubr.bf16.gmra.mrb[0].mxu0 %v773
    %v1347 = vpop.f32.mrb[0].mxu0
    %v1348 = vadd.f32 0.0, %v1347
    %v1349 = vpop.f32.mrb[0].mxu0
    %v1350 = vpop.f32.mrb[0].mxu0
    %v1351 = vadd.f32 0.0, %v1350
    %v1352 = vpop.f32.mrb[0].mxu0
    %1353 = vmatprep.mubr.bf16.mxu0 %v778
    %1354 = vmatmul.mubr.bf16.gmra.mrb[0].mxu0 %v777
    %v1355 = vpop.f32.mrb[0].mxu0
    %v1356 = vadd.f32 0.0, %v1355
    %v1357 = vpop.f32.mrb[0].mxu0
    %v1358 = vpop.f32.mrb[0].mxu0
    %v1359 = vadd.f32 0.0, %v1358
    %v1360 = vpop.f32.mrb[0].mxu0
    %1361 = vmatprep.mubr.bf16.mxu0 %v782
    %1362 = vmatmul.mubr.bf16.gmra.mrb[0].mxu0 %v781
    %v1363 = vpop.f32.mrb[0].mxu0
    %v1364 = vadd.f32 0.0, %v1363
    %v1365 = vpop.f32.mrb[0].mxu0
    %v1366 = vpop.f32.mrb[0].mxu0
    %v1367 = vadd.f32 0.0, %v1366
    %v1368 = vpop.f32.mrb[0].mxu0
    %1369 = vmatprep.mubr.bf16.mxu0 %v786
    %1370 = vmatmul.mubr.bf16.gmra.mrb[0].mxu0 %v785
    %v1371 = vpop.f32.mrb[0].mxu0
    %v1372 = vadd.f32 0.0, %v1371
    %v1373 = vpop.f32.mrb[0].mxu0
    %v1374 = vpop.f32.mrb[0].mxu0
    %v1375 = vadd.f32 0.0, %v1374
    %v1376 = vpop.f32.mrb[0].mxu0
    %1377 = vmatprep.mubr.bf16.mxu0 %v790
    %1378 = vmatmul.mubr.bf16.gmra.mrb[0].mxu0 %v789
    %v1379 = vpop.f32.mrb[0].mxu0
    %v1380 = vadd.f32 0.0, %v1379
    %v1381 = vpop.f32.mrb[0].mxu0
    %v1382 = vpop.f32.mrb[0].mxu0
    %v1383 = vadd.f32 0.0, %v1382
    %v1384 = vpop.f32.mrb[0].mxu0
    %1385 = vmatprep.mubr.bf16.mxu0 %v794
    %1386 = vmatmul.mubr.bf16.gmra.mrb[0].mxu0 %v793
    %v1387 = vpop.f32.mrb[0].mxu0
    %v1388 = vadd.f32 0.0, %v1387
    %v1389 = vpop.f32.mrb[0].mxu0
    %v1390 = vpop.f32.mrb[0].mxu0
    %v1391 = vadd.f32 0.0, %v1390
    %v1392 = vpop.f32.mrb[0].mxu0
    %1393 = vmatprep.mubr.bf16.mxu0 %v798
    %1394 = vmatmul.mubr.bf16.gmra.mrb[0].mxu0 %v797
    %v1395 = vpop.f32.mrb[0].mxu0
    %v1396 = vadd.f32 0.0, %v1395
    %v1397 = vpop.f32.mrb[0].mxu0
    %v1398 = vpop.f32.mrb[0].mxu0
    %v1399 = vadd.f32 0.0, %v1398
    %v1400 = vpop.f32.mrb[0].mxu0
    %1401 = vmatprep.mubr.bf16.mxu0 %v802
    %1402 = vmatmul.mubr.bf16.gmra.mrb[0].mxu0 %v801
    %v1403 = vpop.f32.mrb[0].mxu0
    %v1404 = vadd.f32 0.0, %v1403
    %v1405 = vpop.f32.mrb[0].mxu0
    %v1406 = vpop.f32.mrb[0].mxu0
    %v1407 = vadd.f32 0.0, %v1406
    %v1408 = vpop.f32.mrb[0].mxu0
    %1409 = vmatprep.mubr.bf16.mxu0 %v806
    %1410 = vmatmul.mubr.bf16.gmra.mrb[0].mxu0 %v805
    %v1411 = vpop.f32.mrb[0].mxu0
    %v1412 = vadd.f32 0.0, %v1411
    %v1413 = vpop.f32.mrb[0].mxu0
    %v1414 = vpop.f32.mrb[0].mxu0
    %v1415 = vadd.f32 0.0, %v1414
    %v1416 = vpop.f32.mrb[0].mxu0
    %1417 = vdwg.mxu0
    %1418 = vmatprep.subr.bf16.mxu0 0
    %1419 = vmatpush1.bf16.msra.mxu0 %v1081
    %1420 = vmatprep.subr.bf16.mxu0 0
    %1421 = vmatpush1.bf16.msra.mxu0 %v1082
    %1422 = vmatprep.subr.bf16.mxu0 0
    %1423 = vmatpush1.bf16.msra.mxu0 %v1083
    %1424 = vmatprep.subr.bf16.mxu0 0
    %1425 = vmatpush1.bf16.msra.mxu0 %v1084
    %1426 = vmatprep.subr.bf16.mxu0 0
    %1427 = vmatpush1.bf16.msra.mxu0 %v1085
    %1428 = vmatprep.subr.bf16.mxu0 0
    %1429 = vmatpush1.bf16.msra.mxu0 %v1086
    %1430 = vmatprep.subr.bf16.mxu0 0
    %1431 = vmatpush1.bf16.msra.mxu0 %v1087
    %1432 = vmatprep.subr.bf16.mxu0 0
    %1433 = vmatpush1.bf16.msra.mxu0 %v1088
    %1434 = vmatprep.subr.bf16.mxu0 0
    %1435 = vmatpush1.bf16.msra.mxu0 %v1089
    %1436 = vmatprep.subr.bf16.mxu0 0
    %1437 = vmatpush1.bf16.msra.mxu0 %v1090
    %1438 = vmatprep.subr.bf16.mxu0 0
    %1439 = vmatpush1.bf16.msra.mxu0 %v1091
    %1440 = vmatprep.subr.bf16.mxu0 0
    %1441 = vmatpush1.bf16.msra.mxu0 %v1092
    %1442 = vmatprep.subr.bf16.mxu0 0
    %1443 = vmatpush1.bf16.msra.mxu0 %v1093
    %1444 = vmatprep.subr.bf16.mxu0 0
    %1445 = vmatpush1.bf16.msra.mxu0 %v1094
    %1446 = vmatprep.subr.bf16.mxu0 0
    %1447 = vmatpush1.bf16.msra.mxu0 %v1095
    %1448 = vmatprep.subr.bf16.mxu0 0
    %1449 = vmatpush1.bf16.msra.mxu0 %v1096
    %1450 = vmatprep.mubr.bf16.mxu0 %v684
    %1451 = vmatmul.mubr.bf16.gmra.mrb[0].mxu0 %v683
    %v1452 = vpop.f32.mrb[0].mxu0
    %v1453 = vadd.f32 %v1164, %v1452
    %v1454 = vpop.f32.mrb[0].mxu0
    %v1455 = vpop.f32.mrb[0].mxu0
    %v1456 = vadd.f32 %v1167, %v1455
    %v1457 = vpop.f32.mrb[0].mxu0
    %1458 = vmatprep.mubr.bf16.mxu0 %v688
    %1459 = vmatmul.mubr.bf16.gmra.mrb[0].mxu0 %v687
    %v1460 = vpop.f32.mrb[0].mxu0
    %v1461 = vadd.f32 %v1172, %v1460
    %v1462 = vpop.f32.mrb[0].mxu0
    %v1463 = vpop.f32.mrb[0].mxu0
    %v1464 = vadd.f32 %v1175, %v1463
    %v1465 = vpop.f32.mrb[0].mxu0
    %1466 = vmatprep.mubr.bf16.mxu0 %v692
    %1467 = vmatmul.mubr.bf16.gmra.mrb[0].mxu0 %v691
    %v1468 = vpop.f32.mrb[0].mxu0
    %v1469 = vadd.f32 %v1180, %v1468
    %v1470 = vpop.f32.mrb[0].mxu0
    %v1471 = vpop.f32.mrb[0].mxu0
    %v1472 = vadd.f32 %v1183, %v1471
    %v1473 = vpop.f32.mrb[0].mxu0
    %1474 = vmatprep.mubr.bf16.mxu0 %v696
    %1475 = vmatmul.mubr.bf16.gmra.mrb[0].mxu0 %v695
    %v1476 = vpop.f32.mrb[0].mxu0
    %v1477 = vadd.f32 %v1188, %v1476
    %v1478 = vpop.f32.mrb[0].mxu0
    %v1479 = vpop.f32.mrb[0].mxu0
    %v1480 = vadd.f32 %v1191, %v1479
    %v1481 = vpop.f32.mrb[0].mxu0
    %1482 = vmatprep.mubr.bf16.mxu0 %v700
    %1483 = vmatmul.mubr.bf16.gmra.mrb[0].mxu0 %v699
    %v1484 = vpop.f32.mrb[0].mxu0
    %v1485 = vadd.f32 %v1196, %v1484
    %v1486 = vpop.f32.mrb[0].mxu0
    %v1487 = vpop.f32.mrb[0].mxu0
    %v1488 = vadd.f32 %v1199, %v1487
    %v1489 = vpop.f32.mrb[0].mxu0
    %1490 = vmatprep.mubr.bf16.mxu0 %v704
    %1491 = vmatmul.mubr.bf16.gmra.mrb[0].mxu0 %v703
    %v1492 = vpop.f32.mrb[0].mxu0
    %v1493 = vadd.f32 %v1204, %v1492
    %v1494 = vpop.f32.mrb[0].mxu0
    %v1495 = vpop.f32.mrb[0].mxu0
    %v1496 = vadd.f32 %v1207, %v1495
    %v1497 = vpop.f32.mrb[0].mxu0
    %1498 = vmatprep.mubr.bf16.mxu0 %v708
    %1499 = vmatmul.mubr.bf16.gmra.mrb[0].mxu0 %v707
    %v1500 = vpop.f32.mrb[0].mxu0
    %v1501 = vadd.f32 %v1212, %v1500
    %v1502 = vpop.f32.mrb[0].mxu0
    %v1503 = vpop.f32.mrb[0].mxu0
    %v1504 = vadd.f32 %v1215, %v1503
    %v1505 = vpop.f32.mrb[0].mxu0
    %1506 = vmatprep.mubr.bf16.mxu0 %v712
    %1507 = vmatmul.mubr.bf16.gmra.mrb[0].mxu0 %v711
    %v1508 = vpop.f32.mrb[0].mxu0
    %v1509 = vadd.f32 %v1220, %v1508
    %v1510 = vpop.f32.mrb[0].mxu0
    %v1511 = vpop.f32.mrb[0].mxu0
    %v1512 = vadd.f32 %v1223, %v1511
    %v1513 = vpop.f32.mrb[0].mxu0
    %1514 = vmatprep.mubr.bf16.mxu0 %v716
    %1515 = vmatmul.mubr.bf16.gmra.mrb[0].mxu0 %v715
    %v1516 = vpop.f32.mrb[0].mxu0
    %v1517 = vadd.f32 %v1228, %v1516
    %v1518 = vpop.f32.mrb[0].mxu0
    %v1519 = vpop.f32.mrb[0].mxu0
    %v1520 = vadd.f32 %v1231, %v1519
    %v1521 = vpop.f32.mrb[0].mxu0
    %1522 = vmatprep.mubr.bf16.mxu0 %v720
    %1523 = vmatmul.mubr.bf16.gmra.mrb[0].mxu0 %v719
    %v1524 = vpop.f32.mrb[0].mxu0
    %v1525 = vadd.f32 %v1236, %v1524
    %v1526 = vpop.f32.mrb[0].mxu0
    %v1527 = vpop.f32.mrb[0].mxu0
    %v1528 = vadd.f32 %v1239, %v1527
    %v1529 = vpop.f32.mrb[0].mxu0
    %1530 = vmatprep.mubr.bf16.mxu0 %v724
    %1531 = vmatmul.mubr.bf16.gmra.mrb[0].mxu0 %v723
    %v1532 = vpop.f32.mrb[0].mxu0
    %v1533 = vadd.f32 %v1244, %v1532
    %v1534 = vpop.f32.mrb[0].mxu0
    %v1535 = vpop.f32.mrb[0].mxu0
    %v1536 = vadd.f32 %v1247, %v1535
    %v1537 = vpop.f32.mrb[0].mxu0
    %1538 = vmatprep.mubr.bf16.mxu0 %v728
    %1539 = vmatmul.mubr.bf16.gmra.mrb[0].mxu0 %v727
    %v1540 = vpop.f32.mrb[0].mxu0
    %v1541 = vadd.f32 %v1252, %v1540
    %v1542 = vpop.f32.mrb[0].mxu0
    %v1543 = vpop.f32.mrb[0].mxu0
    %v1544 = vadd.f32 %v1255, %v1543
    %v1545 = vpop.f32.mrb[0].mxu0
    %1546 = vmatprep.mubr.bf16.mxu0 %v732
    %1547 = vmatmul.mubr.bf16.gmra.mrb[0].mxu0 %v731
    %v1548 = vpop.f32.mrb[0].mxu0
    %v1549 = vadd.f32 %v1260, %v1548
    %v1550 = vpop.f32.mrb[0].mxu0
    %v1551 = vpop.f32.mrb[0].mxu0
    %v1552 = vadd.f32 %v1263, %v1551
    %v1553 = vpop.f32.mrb[0].mxu0
    %1554 = vmatprep.mubr.bf16.mxu0 %v736
    %1555 = vmatmul.mubr.bf16.gmra.mrb[0].mxu0 %v735
    %v1556 = vpop.f32.mrb[0].mxu0
    %v1557 = vadd.f32 %v1268, %v1556
    %v1558 = vpop.f32.mrb[0].mxu0
    %v1559 = vpop.f32.mrb[0].mxu0
    %v1560 = vadd.f32 %v1271, %v1559
    %v1561 = vpop.f32.mrb[0].mxu0
    %1562 = vmatprep.mubr.bf16.mxu0 %v740
    %1563 = vmatmul.mubr.bf16.gmra.mrb[0].mxu0 %v739
    %v1564 = vpop.f32.mrb[0].mxu0
    %v1565 = vadd.f32 %v1276, %v1564
    %v1566 = vpop.f32.mrb[0].mxu0
    %v1567 = vpop.f32.mrb[0].mxu0
    %v1568 = vadd.f32 %v1279, %v1567
    %v1569 = vpop.f32.mrb[0].mxu0
    %1570 = vmatprep.mubr.bf16.mxu0 %v744
    %1571 = vmatmul.mubr.bf16.gmra.mrb[0].mxu0 %v743
    %v1572 = vpop.f32.mrb[0].mxu0
    %v1573 = vadd.f32 %v1284, %v1572
    %v1574 = vpop.f32.mrb[0].mxu0
    %v1575 = vpop.f32.mrb[0].mxu0
    %v1576 = vadd.f32 %v1287, %v1575
    %v1577 = vpop.f32.mrb[0].mxu0
    %1578 = vmatprep.mubr.bf16.mxu0 %v748
    %1579 = vmatmul.mubr.bf16.gmra.mrb[0].mxu0 %v747
    %v1580 = vpop.f32.mrb[0].mxu0
    %v1581 = vadd.f32 %v1292, %v1580
    %v1582 = vpop.f32.mrb[0].mxu0
    %v1583 = vpop.f32.mrb[0].mxu0
    %v1584 = vadd.f32 %v1295, %v1583
    %v1585 = vpop.f32.mrb[0].mxu0
    %1586 = vmatprep.mubr.bf16.mxu0 %v752
    %1587 = vmatmul.mubr.bf16.gmra.mrb[0].mxu0 %v751
    %v1588 = vpop.f32.mrb[0].mxu0
    %v1589 = vadd.f32 %v1300, %v1588
    %v1590 = vpop.f32.mrb[0].mxu0
    %v1591 = vpop.f32.mrb[0].mxu0
    %v1592 = vadd.f32 %v1303, %v1591
    %v1593 = vpop.f32.mrb[0].mxu0
    %1594 = vmatprep.mubr.bf16.mxu0 %v756
    %1595 = vmatmul.mubr.bf16.gmra.mrb[0].mxu0 %v755
    %v1596 = vpop.f32.mrb[0].mxu0
    %v1597 = vadd.f32 %v1308, %v1596
    %v1598 = vpop.f32.mrb[0].mxu0
    %v1599 = vpop.f32.mrb[0].mxu0
    %v1600 = vadd.f32 %v1311, %v1599
    %v1601 = vpop.f32.mrb[0].mxu0
    %1602 = vmatprep.mubr.bf16.mxu0 %v760
    %1603 = vmatmul.mubr.bf16.gmra.mrb[0].mxu0 %v759
    %v1604 = vpop.f32.mrb[0].mxu0
    %v1605 = vadd.f32 %v1316, %v1604
    %v1606 = vpop.f32.mrb[0].mxu0
    %v1607 = vpop.f32.mrb[0].mxu0
    %v1608 = vadd.f32 %v1319, %v1607
    %v1609 = vpop.f32.mrb[0].mxu0
    %1610 = vmatprep.mubr.bf16.mxu0 %v764
    %1611 = vmatmul.mubr.bf16.gmra.mrb[0].mxu0 %v763
    %v1612 = vpop.f32.mrb[0].mxu0
    %v1613 = vadd.f32 %v1324, %v1612
    %v1614 = vpop.f32.mrb[0].mxu0
    %v1615 = vpop.f32.mrb[0].mxu0
    %v1616 = vadd.f32 %v1327, %v1615
    %v1617 = vpop.f32.mrb[0].mxu0
    %1618 = vmatprep.mubr.bf16.mxu0 %v768
    %1619 = vmatmul.mubr.bf16.gmra.mrb[0].mxu0 %v767
    %v1620 = vpop.f32.mrb[0].mxu0
    %v1621 = vadd.f32 %v1332, %v1620
    %v1622 = vpop.f32.mrb[0].mxu0
    %v1623 = vpop.f32.mrb[0].mxu0
    %v1624 = vadd.f32 %v1335, %v1623
    %v1625 = vpop.f32.mrb[0].mxu0
    %1626 = vmatprep.mubr.bf16.mxu0 %v772
    %1627 = vmatmul.mubr.bf16.gmra.mrb[0].mxu0 %v771
    %v1628 = vpop.f32.mrb[0].mxu0
    %v1629 = vadd.f32 %v1340, %v1628
    %v1630 = vpop.f32.mrb[0].mxu0
    %v1631 = vpop.f32.mrb[0].mxu0
    %v1632 = vadd.f32 %v1343, %v1631
    %v1633 = vpop.f32.mrb[0].mxu0
    %1634 = vmatprep.mubr.bf16.mxu0 %v776
    %1635 = vmatmul.mubr.bf16.gmra.mrb[0].mxu0 %v775
    %v1636 = vpop.f32.mrb[0].mxu0
    %v1637 = vadd.f32 %v1348, %v1636
    %v1638 = vpop.f32.mrb[0].mxu0
    %v1639 = vpop.f32.mrb[0].mxu0
    %v1640 = vadd.f32 %v1351, %v1639
    %v1641 = vpop.f32.mrb[0].mxu0
    %1642 = vmatprep.mubr.bf16.mxu0 %v780
    %1643 = vmatmul.mubr.bf16.gmra.mrb[0].mxu0 %v779
    %v1644 = vpop.f32.mrb[0].mxu0
    %v1645 = vadd.f32 %v1356, %v1644
    %v1646 = vpop.f32.mrb[0].mxu0
    %v1647 = vpop.f32.mrb[0].mxu0
    %v1648 = vadd.f32 %v1359, %v1647
    %v1649 = vpop.f32.mrb[0].mxu0
    %1650 = vmatprep.mubr.bf16.mxu0 %v784
    %1651 = vmatmul.mubr.bf16.gmra.mrb[0].mxu0 %v783
    %v1652 = vpop.f32.mrb[0].mxu0
    %v1653 = vadd.f32 %v1364, %v1652
    %v1654 = vpop.f32.mrb[0].mxu0
    %v1655 = vpop.f32.mrb[0].mxu0
    %v1656 = vadd.f32 %v1367, %v1655
    %v1657 = vpop.f32.mrb[0].mxu0
    %1658 = vmatprep.mubr.bf16.mxu0 %v788
    %1659 = vmatmul.mubr.bf16.gmra.mrb[0].mxu0 %v787
    %v1660 = vpop.f32.mrb[0].mxu0
    %v1661 = vadd.f32 %v1372, %v1660
    %v1662 = vpop.f32.mrb[0].mxu0
    %v1663 = vpop.f32.mrb[0].mxu0
    %v1664 = vadd.f32 %v1375, %v1663
    %v1665 = vpop.f32.mrb[0].mxu0
    %1666 = vmatprep.mubr.bf16.mxu0 %v792
    %1667 = vmatmul.mubr.bf16.gmra.mrb[0].mxu0 %v791
    %v1668 = vpop.f32.mrb[0].mxu0
    %v1669 = vadd.f32 %v1380, %v1668
    %v1670 = vpop.f32.mrb[0].mxu0
    %v1671 = vpop.f32.mrb[0].mxu0
    %v1672 = vadd.f32 %v1383, %v1671
    %v1673 = vpop.f32.mrb[0].mxu0
    %1674 = vmatprep.mubr.bf16.mxu0 %v796
    %1675 = vmatmul.mubr.bf16.gmra.mrb[0].mxu0 %v795
    %v1676 = vpop.f32.mrb[0].mxu0
    %v1677 = vadd.f32 %v1388, %v1676
    %v1678 = vpop.f32.mrb[0].mxu0
    %v1679 = vpop.f32.mrb[0].mxu0
    %v1680 = vadd.f32 %v1391, %v1679
    %v1681 = vpop.f32.mrb[0].mxu0
    %1682 = vmatprep.mubr.bf16.mxu0 %v800
    %1683 = vmatmul.mubr.bf16.gmra.mrb[0].mxu0 %v799
    %v1684 = vpop.f32.mrb[0].mxu0
    %v1685 = vadd.f32 %v1396, %v1684
    %v1686 = vpop.f32.mrb[0].mxu0
    %v1687 = vpop.f32.mrb[0].mxu0
    %v1688 = vadd.f32 %v1399, %v1687
    %v1689 = vpop.f32.mrb[0].mxu0
    %1690 = vmatprep.mubr.bf16.mxu0 %v804
    %1691 = vmatmul.mubr.bf16.gmra.mrb[0].mxu0 %v803
    %v1692 = vpop.f32.mrb[0].mxu0
    %v1693 = vadd.f32 %v1404, %v1692
    %v1694 = vpop.f32.mrb[0].mxu0
    %v1695 = vpop.f32.mrb[0].mxu0
    %v1696 = vadd.f32 %v1407, %v1695
    %v1697 = vpop.f32.mrb[0].mxu0
    %1698 = vmatprep.mubr.bf16.mxu0 %v808
    %1699 = vmatmul.mubr.bf16.gmra.mrb[0].mxu0 %v807
    %v1700 = vpop.f32.mrb[0].mxu0
    %v1701 = vadd.f32 %v1412, %v1700
    %v1702 = vpop.f32.mrb[0].mxu0
    %v1703 = vpop.f32.mrb[0].mxu0
    %v1704 = vadd.f32 %v1415, %v1703
    %v1705 = vpop.f32.mrb[0].mxu0
    %1706 = vdwg.mxu0
    %v1707 = vpack.c.bf16 %v1456, %v1453
    %v1708 = vpack.c.bf16 %v1464, %v1461
    %v1709 = vpack.c.bf16 %v1472, %v1469
    %v1710 = vpack.c.bf16 %v1480, %v1477
    %v1711 = vpack.c.bf16 %v1488, %v1485
    %v1712 = vpack.c.bf16 %v1496, %v1493
    %v1713 = vpack.c.bf16 %v1504, %v1501
    %v1714 = vpack.c.bf16 %v1512, %v1509
    %v1715 = vpack.c.bf16 %v1520, %v1517
    %v1716 = vpack.c.bf16 %v1528, %v1525
    %v1717 = vpack.c.bf16 %v1536, %v1533
    %v1718 = vpack.c.bf16 %v1544, %v1541
    %v1719 = vpack.c.bf16 %v1552, %v1549
    %v1720 = vpack.c.bf16 %v1560, %v1557
    %v1721 = vpack.c.bf16 %v1568, %v1565
    %v1722 = vpack.c.bf16 %v1576, %v1573
    %v1723 = vpack.c.bf16 %v1584, %v1581
    %v1724 = vpack.c.bf16 %v1592, %v1589
    %v1725 = vpack.c.bf16 %v1600, %v1597
    %v1726 = vpack.c.bf16 %v1608, %v1605
    %v1727 = vpack.c.bf16 %v1616, %v1613
    %v1728 = vpack.c.bf16 %v1624, %v1621
    %v1729 = vpack.c.bf16 %v1632, %v1629
    %v1730 = vpack.c.bf16 %v1640, %v1637
    %v1731 = vpack.c.bf16 %v1648, %v1645
    %v1732 = vpack.c.bf16 %v1656, %v1653
    %v1733 = vpack.c.bf16 %v1664, %v1661
    %v1734 = vpack.c.bf16 %v1672, %v1669
    %v1735 = vpack.c.bf16 %v1680, %v1677
    %v1736 = vpack.c.bf16 %v1688, %v1685
    %v1737 = vpack.c.bf16 %v1696, %v1693
    %v1738 = vpack.c.bf16 %v1704, %v1701
    %1739 = vmatprep.subr.bf16.mxu0 0
    %1740 = vmatpush1.bf16.msra.mxu0 %v1707
    %1741 = vmatprep.subr.bf16.mxu0 0
    %1742 = vmatpush1.bf16.msra.mxu0 %v1708
    %1743 = vmatprep.subr.bf16.mxu0 0
    %1744 = vmatpush1.bf16.msra.mxu0 %v1709
    %1745 = vmatprep.subr.bf16.mxu0 0
    %1746 = vmatpush1.bf16.msra.mxu0 %v1710
    %1747 = vmatprep.subr.bf16.mxu0 0
    %1748 = vmatpush1.bf16.msra.mxu0 %v1711
    %1749 = vmatprep.subr.bf16.mxu0 0
    %1750 = vmatpush1.bf16.msra.mxu0 %v1712
    %1751 = vmatprep.subr.bf16.mxu0 0
    %1752 = vmatpush1.bf16.msra.mxu0 %v1713
    %1753 = vmatprep.subr.bf16.mxu0 0
    %1754 = vmatpush1.bf16.msra.mxu0 %v1714
    %1755 = vmatprep.subr.bf16.mxu0 0
    %1756 = vmatpush1.bf16.msra.mxu0 %v1715
    %1757 = vmatprep.subr.bf16.mxu0 0
    %1758 = vmatpush1.bf16.msra.mxu0 %v1716
    %1759 = vmatprep.subr.bf16.mxu0 0
    %1760 = vmatpush1.bf16.msra.mxu0 %v1717
    %1761 = vmatprep.subr.bf16.mxu0 0
    %1762 = vmatpush1.bf16.msra.mxu0 %v1718
    %1763 = vmatprep.subr.bf16.mxu0 0
    %1764 = vmatpush1.bf16.msra.mxu0 %v1719
    %1765 = vmatprep.subr.bf16.mxu0 0
    %1766 = vmatpush1.bf16.msra.mxu0 %v1720
    %1767 = vmatprep.subr.bf16.mxu0 0
    %1768 = vmatpush1.bf16.msra.mxu0 %v1721
    %1769 = vmatprep.subr.bf16.mxu0 0
    %1770 = vmatpush1.bf16.msra.mxu0 %v1722
    %1771 = vmatprep.mubr.bf16.mxu0 %v682
    %1772 = vmatmul.mubr.bf16.gmra.mrb[0].mxu0 %v681
    %v1773 = vpop.f32.mrb[0].mxu0
    %v1774 = vadd.f32 0.0, %v1773
    %v1775 = vpop.f32.mrb[0].mxu0
    %v1776 = vpop.f32.mrb[0].mxu0
    %v1777 = vadd.f32 0.0, %v1776
    %v1778 = vpop.f32.mrb[0].mxu0
    %1779 = vmatprep.mubr.bf16.mxu0 %v686
    %1780 = vmatmul.mubr.bf16.gmra.mrb[0].mxu0 %v685
    %v1781 = vpop.f32.mrb[0].mxu0
    %v1782 = vadd.f32 0.0, %v1781
    %v1783 = vpop.f32.mrb[0].mxu0
    %v1784 = vpop.f32.mrb[0].mxu0
    %v1785 = vadd.f32 0.0, %v1784
    %v1786 = vpop.f32.mrb[0].mxu0
    %1787 = vmatprep.mubr.bf16.mxu0 %v690
    %1788 = vmatmul.mubr.bf16.gmra.mrb[0].mxu0 %v689
    %v1789 = vpop.f32.mrb[0].mxu0
    %v1790 = vadd.f32 0.0, %v1789
    %v1791 = vpop.f32.mrb[0].mxu0
    %v1792 = vpop.f32.mrb[0].mxu0
    %v1793 = vadd.f32 0.0, %v1792
    %v1794 = vpop.f32.mrb[0].mxu0
    %1795 = vmatprep.mubr.bf16.mxu0 %v694
    %1796 = vmatmul.mubr.bf16.gmra.mrb[0].mxu0 %v693
    %v1797 = vpop.f32.mrb[0].mxu0
    %v1798 = vadd.f32 0.0, %v1797
    %v1799 = vpop.f32.mrb[0].mxu0
    %v1800 = vpop.f32.mrb[0].mxu0
    %v1801 = vadd.f32 0.0, %v1800
    %v1802 = vpop.f32.mrb[0].mxu0
    %1803 = vmatprep.mubr.bf16.mxu0 %v698
    %1804 = vmatmul.mubr.bf16.gmra.mrb[0].mxu0 %v697
    %v1805 = vpop.f32.mrb[0].mxu0
    %v1806 = vadd.f32 0.0, %v1805
    %v1807 = vpop.f32.mrb[0].mxu0
    %v1808 = vpop.f32.mrb[0].mxu0
    %v1809 = vadd.f32 0.0, %v1808
    %v1810 = vpop.f32.mrb[0].mxu0
    %1811 = vmatprep.mubr.bf16.mxu0 %v702
    %1812 = vmatmul.mubr.bf16.gmra.mrb[0].mxu0 %v701
    %v1813 = vpop.f32.mrb[0].mxu0
    %v1814 = vadd.f32 0.0, %v1813
    %v1815 = vpop.f32.mrb[0].mxu0
    %v1816 = vpop.f32.mrb[0].mxu0
    %v1817 = vadd.f32 0.0, %v1816
    %v1818 = vpop.f32.mrb[0].mxu0
    %1819 = vmatprep.mubr.bf16.mxu0 %v706
    %1820 = vmatmul.mubr.bf16.gmra.mrb[0].mxu0 %v705
    %v1821 = vpop.f32.mrb[0].mxu0
    %v1822 = vadd.f32 0.0, %v1821
    %v1823 = vpop.f32.mrb[0].mxu0
    %v1824 = vpop.f32.mrb[0].mxu0
    %v1825 = vadd.f32 0.0, %v1824
    %v1826 = vpop.f32.mrb[0].mxu0
    %1827 = vmatprep.mubr.bf16.mxu0 %v710
    %1828 = vmatmul.mubr.bf16.gmra.mrb[0].mxu0 %v709
    %v1829 = vpop.f32.mrb[0].mxu0
    %v1830 = vadd.f32 0.0, %v1829
    %v1831 = vpop.f32.mrb[0].mxu0
    %v1832 = vpop.f32.mrb[0].mxu0
    %v1833 = vadd.f32 0.0, %v1832
    %v1834 = vpop.f32.mrb[0].mxu0
    %1835 = vmatprep.mubr.bf16.mxu0 %v714
    %1836 = vmatmul.mubr.bf16.gmra.mrb[0].mxu0 %v713
    %v1837 = vpop.f32.mrb[0].mxu0
    %v1838 = vadd.f32 0.0, %v1837
    %v1839 = vpop.f32.mrb[0].mxu0
    %v1840 = vpop.f32.mrb[0].mxu0
    %v1841 = vadd.f32 0.0, %v1840
    %v1842 = vpop.f32.mrb[0].mxu0
    %1843 = vmatprep.mubr.bf16.mxu0 %v718
    %1844 = vmatmul.mubr.bf16.gmra.mrb[0].mxu0 %v717
    %v1845 = vpop.f32.mrb[0].mxu0
    %v1846 = vadd.f32 0.0, %v1845
    %v1847 = vpop.f32.mrb[0].mxu0
    %v1848 = vpop.f32.mrb[0].mxu0
    %v1849 = vadd.f32 0.0, %v1848
    %v1850 = vpop.f32.mrb[0].mxu0
    %1851 = vmatprep.mubr.bf16.mxu0 %v722
    %1852 = vmatmul.mubr.bf16.gmra.mrb[0].mxu0 %v721
    %v1853 = vpop.f32.mrb[0].mxu0
    %v1854 = vadd.f32 0.0, %v1853
    %v1855 = vpop.f32.mrb[0].mxu0
    %v1856 = vpop.f32.mrb[0].mxu0
    %v1857 = vadd.f32 0.0, %v1856
    %v1858 = vpop.f32.mrb[0].mxu0
    %1859 = vmatprep.mubr.bf16.mxu0 %v726
    %1860 = vmatmul.mubr.bf16.gmra.mrb[0].mxu0 %v725
    %v1861 = vpop.f32.mrb[0].mxu0
    %v1862 = vadd.f32 0.0, %v1861
    %v1863 = vpop.f32.mrb[0].mxu0
    %v1864 = vpop.f32.mrb[0].mxu0
    %v1865 = vadd.f32 0.0, %v1864
    %v1866 = vpop.f32.mrb[0].mxu0
    %1867 = vmatprep.mubr.bf16.mxu0 %v730
    %1868 = vmatmul.mubr.bf16.gmra.mrb[0].mxu0 %v729
    %v1869 = vpop.f32.mrb[0].mxu0
    %v1870 = vadd.f32 0.0, %v1869
    %v1871 = vpop.f32.mrb[0].mxu0
    %v1872 = vpop.f32.mrb[0].mxu0
    %v1873 = vadd.f32 0.0, %v1872
    %v1874 = vpop.f32.mrb[0].mxu0
    %1875 = vmatprep.mubr.bf16.mxu0 %v734
    %1876 = vmatmul.mubr.bf16.gmra.mrb[0].mxu0 %v733
    %v1877 = vpop.f32.mrb[0].mxu0
    %v1878 = vadd.f32 0.0, %v1877
    %v1879 = vpop.f32.mrb[0].mxu0
    %v1880 = vpop.f32.mrb[0].mxu0
    %v1881 = vadd.f32 0.0, %v1880
    %v1882 = vpop.f32.mrb[0].mxu0
    %1883 = vmatprep.mubr.bf16.mxu0 %v738
    %1884 = vmatmul.mubr.bf16.gmra.mrb[0].mxu0 %v737
    %v1885 = vpop.f32.mrb[0].mxu0
    %v1886 = vadd.f32 0.0, %v1885
    %v1887 = vpop.f32.mrb[0].mxu0
    %v1888 = vpop.f32.mrb[0].mxu0
    %v1889 = vadd.f32 0.0, %v1888
    %v1890 = vpop.f32.mrb[0].mxu0
    %1891 = vmatprep.mubr.bf16.mxu0 %v742
    %1892 = vmatmul.mubr.bf16.gmra.mrb[0].mxu0 %v741
    %v1893 = vpop.f32.mrb[0].mxu0
    %v1894 = vadd.f32 0.0, %v1893
    %v1895 = vpop.f32.mrb[0].mxu0
    %v1896 = vpop.f32.mrb[0].mxu0
    %v1897 = vadd.f32 0.0, %v1896
    %v1898 = vpop.f32.mrb[0].mxu0
    %1899 = vmatprep.mubr.bf16.mxu0 %v746
    %1900 = vmatmul.mubr.bf16.gmra.mrb[0].mxu0 %v745
    %v1901 = vpop.f32.mrb[0].mxu0
    %v1902 = vadd.f32 0.0, %v1901
    %v1903 = vpop.f32.mrb[0].mxu0
    %v1904 = vpop.f32.mrb[0].mxu0
    %v1905 = vadd.f32 0.0, %v1904
    %v1906 = vpop.f32.mrb[0].mxu0
    %1907 = vmatprep.mubr.bf16.mxu0 %v750
    %1908 = vmatmul.mubr.bf16.gmra.mrb[0].mxu0 %v749
    %v1909 = vpop.f32.mrb[0].mxu0
    %v1910 = vadd.f32 0.0, %v1909
    %v1911 = vpop.f32.mrb[0].mxu0
    %v1912 = vpop.f32.mrb[0].mxu0
    %v1913 = vadd.f32 0.0, %v1912
    %v1914 = vpop.f32.mrb[0].mxu0
    %1915 = vmatprep.mubr.bf16.mxu0 %v754
    %1916 = vmatmul.mubr.bf16.gmra.mrb[0].mxu0 %v753
    %v1917 = vpop.f32.mrb[0].mxu0
    %v1918 = vadd.f32 0.0, %v1917
    %v1919 = vpop.f32.mrb[0].mxu0
    %v1920 = vpop.f32.mrb[0].mxu0
    %v1921 = vadd.f32 0.0, %v1920
    %v1922 = vpop.f32.mrb[0].mxu0
    %1923 = vmatprep.mubr.bf16.mxu0 %v758
    %1924 = vmatmul.mubr.bf16.gmra.mrb[0].mxu0 %v757
    %v1925 = vpop.f32.mrb[0].mxu0
    %v1926 = vadd.f32 0.0, %v1925
    %v1927 = vpop.f32.mrb[0].mxu0
    %v1928 = vpop.f32.mrb[0].mxu0
    %v1929 = vadd.f32 0.0, %v1928
    %v1930 = vpop.f32.mrb[0].mxu0
    %1931 = vmatprep.mubr.bf16.mxu0 %v762
    %1932 = vmatmul.mubr.bf16.gmra.mrb[0].mxu0 %v761
    %v1933 = vpop.f32.mrb[0].mxu0
    %v1934 = vadd.f32 0.0, %v1933
    %v1935 = vpop.f32.mrb[0].mxu0
    %v1936 = vpop.f32.mrb[0].mxu0
    %v1937 = vadd.f32 0.0, %v1936
    %v1938 = vpop.f32.mrb[0].mxu0
    %1939 = vmatprep.mubr.bf16.mxu0 %v766
    %1940 = vmatmul.mubr.bf16.gmra.mrb[0].mxu0 %v765
    %v1941 = vpop.f32.mrb[0].mxu0
    %v1942 = vadd.f32 0.0, %v1941
    %v1943 = vpop.f32.mrb[0].mxu0
    %v1944 = vpop.f32.mrb[0].mxu0
    %v1945 = vadd.f32 0.0, %v1944
    %v1946 = vpop.f32.mrb[0].mxu0
    %1947 = vmatprep.mubr.bf16.mxu0 %v770
    %1948 = vmatmul.mubr.bf16.gmra.mrb[0].mxu0 %v769
    %v1949 = vpop.f32.mrb[0].mxu0
    %v1950 = vadd.f32 0.0, %v1949
    %v1951 = vpop.f32.mrb[0].mxu0
    %v1952 = vpop.f32.mrb[0].mxu0
    %v1953 = vadd.f32 0.0, %v1952
    %v1954 = vpop.f32.mrb[0].mxu0
    %1955 = vmatprep.mubr.bf16.mxu0 %v774
    %1956 = vmatmul.mubr.bf16.gmra.mrb[0].mxu0 %v773
    %v1957 = vpop.f32.mrb[0].mxu0
    %v1958 = vadd.f32 0.0, %v1957
    %v1959 = vpop.f32.mrb[0].mxu0
    %v1960 = vpop.f32.mrb[0].mxu0
    %v1961 = vadd.f32 0.0, %v1960
    %v1962 = vpop.f32.mrb[0].mxu0
    %1963 = vmatprep.mubr.bf16.mxu0 %v778
    %1964 = vmatmul.mubr.bf16.gmra.mrb[0].mxu0 %v777
    %v1965 = vpop.f32.mrb[0].mxu0
    %v1966 = vadd.f32 0.0, %v1965
    %v1967 = vpop.f32.mrb[0].mxu0
    %v1968 = vpop.f32.mrb[0].mxu0
    %v1969 = vadd.f32 0.0, %v1968
    %v1970 = vpop.f32.mrb[0].mxu0
    %1971 = vmatprep.mubr.bf16.mxu0 %v782
    %1972 = vmatmul.mubr.bf16.gmra.mrb[0].mxu0 %v781
    %v1973 = vpop.f32.mrb[0].mxu0
    %v1974 = vadd.f32 0.0, %v1973
    %v1975 = vpop.f32.mrb[0].mxu0
    %v1976 = vpop.f32.mrb[0].mxu0
    %v1977 = vadd.f32 0.0, %v1976
    %v1978 = vpop.f32.mrb[0].mxu0
    %1979 = vmatprep.mubr.bf16.mxu0 %v786
    %1980 = vmatmul.mubr.bf16.gmra.mrb[0].mxu0 %v785
    %v1981 = vpop.f32.mrb[0].mxu0
    %v1982 = vadd.f32 0.0, %v1981
    %v1983 = vpop.f32.mrb[0].mxu0
    %v1984 = vpop.f32.mrb[0].mxu0
    %v1985 = vadd.f32 0.0, %v1984
    %v1986 = vpop.f32.mrb[0].mxu0
    %1987 = vmatprep.mubr.bf16.mxu0 %v790
    %1988 = vmatmul.mubr.bf16.gmra.mrb[0].mxu0 %v789
    %v1989 = vpop.f32.mrb[0].mxu0
    %v1990 = vadd.f32 0.0, %v1989
    %v1991 = vpop.f32.mrb[0].mxu0
    %v1992 = vpop.f32.mrb[0].mxu0
    %v1993 = vadd.f32 0.0, %v1992
    %v1994 = vpop.f32.mrb[0].mxu0
    %1995 = vmatprep.mubr.bf16.mxu0 %v794
    %1996 = vmatmul.mubr.bf16.gmra.mrb[0].mxu0 %v793
    %v1997 = vpop.f32.mrb[0].mxu0
    %v1998 = vadd.f32 0.0, %v1997
    %v1999 = vpop.f32.mrb[0].mxu0
    %v2000 = vpop.f32.mrb[0].mxu0
    %v2001 = vadd.f32 0.0, %v2000
    %v2002 = vpop.f32.mrb[0].mxu0
    %2003 = vmatprep.mubr.bf16.mxu0 %v798
    %2004 = vmatmul.mubr.bf16.gmra.mrb[0].mxu0 %v797
    %v2005 = vpop.f32.mrb[0].mxu0
    %v2006 = vadd.f32 0.0, %v2005
    %v2007 = vpop.f32.mrb[0].mxu0
    %v2008 = vpop.f32.mrb[0].mxu0
    %v2009 = vadd.f32 0.0, %v2008
    %v2010 = vpop.f32.mrb[0].mxu0
    %2011 = vmatprep.mubr.bf16.mxu0 %v802
    %2012 = vmatmul.mubr.bf16.gmra.mrb[0].mxu0 %v801
    %v2013 = vpop.f32.mrb[0].mxu0
    %v2014 = vadd.f32 0.0, %v2013
    %v2015 = vpop.f32.mrb[0].mxu0
    %v2016 = vpop.f32.mrb[0].mxu0
    %v2017 = vadd.f32 0.0, %v2016
    %v2018 = vpop.f32.mrb[0].mxu0
    %2019 = vmatprep.mubr.bf16.mxu0 %v806
    %2020 = vmatmul.mubr.bf16.gmra.mrb[0].mxu0 %v805
    %v2021 = vpop.f32.mrb[0].mxu0
    %v2022 = vadd.f32 0.0, %v2021
    %v2023 = vpop.f32.mrb[0].mxu0
    %v2024 = vpop.f32.mrb[0].mxu0
    %v2025 = vadd.f32 0.0, %v2024
    %v2026 = vpop.f32.mrb[0].mxu0
    %2027 = vdwg.mxu0
    %2028 = vmatprep.subr.bf16.mxu0 0
    %2029 = vmatpush1.bf16.msra.mxu0 %v1723
    %2030 = vmatprep.subr.bf16.mxu0 0
    %2031 = vmatpush1.bf16.msra.mxu0 %v1724
    %2032 = vmatprep.subr.bf16.mxu0 0
    %2033 = vmatpush1.bf16.msra.mxu0 %v1725
    %2034 = vmatprep.subr.bf16.mxu0 0
    %2035 = vmatpush1.bf16.msra.mxu0 %v1726
    %2036 = vmatprep.subr.bf16.mxu0 0
    %2037 = vmatpush1.bf16.msra.mxu0 %v1727
    %2038 = vmatprep.subr.bf16.mxu0 0
    %2039 = vmatpush1.bf16.msra.mxu0 %v1728
    %2040 = vmatprep.subr.bf16.mxu0 0
    %2041 = vmatpush1.bf16.msra.mxu0 %v1729
    %2042 = vmatprep.subr.bf16.mxu0 0
    %2043 = vmatpush1.bf16.msra.mxu0 %v1730
    %2044 = vmatprep.subr.bf16.mxu0 0
    %2045 = vmatpush1.bf16.msra.mxu0 %v1731
    %2046 = vmatprep.subr.bf16.mxu0 0
    %2047 = vmatpush1.bf16.msra.mxu0 %v1732
    %2048 = vmatprep.subr.bf16.mxu0 0
    %2049 = vmatpush1.bf16.msra.mxu0 %v1733
    %2050 = vmatprep.subr.bf16.mxu0 0
    %2051 = vmatpush1.bf16.msra.mxu0 %v1734
    %2052 = vmatprep.subr.bf16.mxu0 0
    %2053 = vmatpush1.bf16.msra.mxu0 %v1735
    %2054 = vmatprep.subr.bf16.mxu0 0
    %2055 = vmatpush1.bf16.msra.mxu0 %v1736
    %2056 = vmatprep.subr.bf16.mxu0 0
    %2057 = vmatpush1.bf16.msra.mxu0 %v1737
    %2058 = vmatprep.subr.bf16.mxu0 0
    %2059 = vmatpush1.bf16.msra.mxu0 %v1738
    %2060 = vmatprep.mubr.bf16.mxu0 %v684
    %2061 = vmatmul.mubr.bf16.gmra.mrb[0].mxu0 %v683
    %v2062 = vpop.f32.mrb[0].mxu0
    %v2063 = vadd.f32 %v1774, %v2062
    %v2064 = vpop.f32.mrb[0].mxu0
    %v2065 = vpop.f32.mrb[0].mxu0
    %v2066 = vadd.f32 %v1777, %v2065
    %v2067 = vpop.f32.mrb[0].mxu0
    %2068 = vmatprep.mubr.bf16.mxu0 %v688
    %2069 = vmatmul.mubr.bf16.gmra.mrb[0].mxu0 %v687
    %v2070 = vpop.f32.mrb[0].mxu0
    %v2071 = vadd.f32 %v1782, %v2070
    %v2072 = vpop.f32.mrb[0].mxu0
    %v2073 = vpop.f32.mrb[0].mxu0
    %v2074 = vadd.f32 %v1785, %v2073
    %v2075 = vpop.f32.mrb[0].mxu0
    %2076 = vmatprep.mubr.bf16.mxu0 %v692
    %2077 = vmatmul.mubr.bf16.gmra.mrb[0].mxu0 %v691
    %v2078 = vpop.f32.mrb[0].mxu0
    %v2079 = vadd.f32 %v1790, %v2078
    %v2080 = vpop.f32.mrb[0].mxu0
    %v2081 = vpop.f32.mrb[0].mxu0
    %v2082 = vadd.f32 %v1793, %v2081
    %v2083 = vpop.f32.mrb[0].mxu0
    %2084 = vmatprep.mubr.bf16.mxu0 %v696
    %2085 = vmatmul.mubr.bf16.gmra.mrb[0].mxu0 %v695
    %v2086 = vpop.f32.mrb[0].mxu0
    %v2087 = vadd.f32 %v1798, %v2086
    %v2088 = vpop.f32.mrb[0].mxu0
    %v2089 = vpop.f32.mrb[0].mxu0
    %v2090 = vadd.f32 %v1801, %v2089
    %v2091 = vpop.f32.mrb[0].mxu0
    %2092 = vmatprep.mubr.bf16.mxu0 %v700
    %2093 = vmatmul.mubr.bf16.gmra.mrb[0].mxu0 %v699
    %v2094 = vpop.f32.mrb[0].mxu0
    %v2095 = vadd.f32 %v1806, %v2094
    %v2096 = vpop.f32.mrb[0].mxu0
    %v2097 = vpop.f32.mrb[0].mxu0
    %v2098 = vadd.f32 %v1809, %v2097
    %v2099 = vpop.f32.mrb[0].mxu0
    %2100 = vmatprep.mubr.bf16.mxu0 %v704
    %2101 = vmatmul.mubr.bf16.gmra.mrb[0].mxu0 %v703
    %v2102 = vpop.f32.mrb[0].mxu0
    %v2103 = vadd.f32 %v1814, %v2102
    %v2104 = vpop.f32.mrb[0].mxu0
    %v2105 = vpop.f32.mrb[0].mxu0
    %v2106 = vadd.f32 %v1817, %v2105
    %v2107 = vpop.f32.mrb[0].mxu0
    %2108 = vmatprep.mubr.bf16.mxu0 %v708
    %2109 = vmatmul.mubr.bf16.gmra.mrb[0].mxu0 %v707
    %v2110 = vpop.f32.mrb[0].mxu0
    %v2111 = vadd.f32 %v1822, %v2110
    %v2112 = vpop.f32.mrb[0].mxu0
    %v2113 = vpop.f32.mrb[0].mxu0
    %v2114 = vadd.f32 %v1825, %v2113
    %v2115 = vpop.f32.mrb[0].mxu0
    %2116 = vmatprep.mubr.bf16.mxu0 %v712
    %2117 = vmatmul.mubr.bf16.gmra.mrb[0].mxu0 %v711
    %v2118 = vpop.f32.mrb[0].mxu0
    %v2119 = vadd.f32 %v1830, %v2118
    %v2120 = vpop.f32.mrb[0].mxu0
    %v2121 = vpop.f32.mrb[0].mxu0
    %v2122 = vadd.f32 %v1833, %v2121
    %v2123 = vpop.f32.mrb[0].mxu0
    %2124 = vmatprep.mubr.bf16.mxu0 %v716
    %2125 = vmatmul.mubr.bf16.gmra.mrb[0].mxu0 %v715
    %v2126 = vpop.f32.mrb[0].mxu0
    %v2127 = vadd.f32 %v1838, %v2126
    %v2128 = vpop.f32.mrb[0].mxu0
    %v2129 = vpop.f32.mrb[0].mxu0
    %v2130 = vadd.f32 %v1841, %v2129
    %v2131 = vpop.f32.mrb[0].mxu0
    %2132 = vmatprep.mubr.bf16.mxu0 %v720
    %2133 = vmatmul.mubr.bf16.gmra.mrb[0].mxu0 %v719
    %v2134 = vpop.f32.mrb[0].mxu0
    %v2135 = vadd.f32 %v1846, %v2134
    %v2136 = vpop.f32.mrb[0].mxu0
    %v2137 = vpop.f32.mrb[0].mxu0
    %v2138 = vadd.f32 %v1849, %v2137
    %v2139 = vpop.f32.mrb[0].mxu0
    %2140 = vmatprep.mubr.bf16.mxu0 %v724
    %2141 = vmatmul.mubr.bf16.gmra.mrb[0].mxu0 %v723
    %v2142 = vpop.f32.mrb[0].mxu0
    %v2143 = vadd.f32 %v1854, %v2142
    %v2144 = vpop.f32.mrb[0].mxu0
    %v2145 = vpop.f32.mrb[0].mxu0
    %v2146 = vadd.f32 %v1857, %v2145
    %v2147 = vpop.f32.mrb[0].mxu0
    %2148 = vmatprep.mubr.bf16.mxu0 %v728
    %2149 = vmatmul.mubr.bf16.gmra.mrb[0].mxu0 %v727
    %v2150 = vpop.f32.mrb[0].mxu0
    %v2151 = vadd.f32 %v1862, %v2150
    %v2152 = vpop.f32.mrb[0].mxu0
    %v2153 = vpop.f32.mrb[0].mxu0
    %v2154 = vadd.f32 %v1865, %v2153
    %v2155 = vpop.f32.mrb[0].mxu0
    %2156 = vmatprep.mubr.bf16.mxu0 %v732
    %2157 = vmatmul.mubr.bf16.gmra.mrb[0].mxu0 %v731
    %v2158 = vpop.f32.mrb[0].mxu0
    %v2159 = vadd.f32 %v1870, %v2158
    %v2160 = vpop.f32.mrb[0].mxu0
    %v2161 = vpop.f32.mrb[0].mxu0
    %v2162 = vadd.f32 %v1873, %v2161
    %v2163 = vpop.f32.mrb[0].mxu0
    %2164 = vmatprep.mubr.bf16.mxu0 %v736
    %2165 = vmatmul.mubr.bf16.gmra.mrb[0].mxu0 %v735
    %v2166 = vpop.f32.mrb[0].mxu0
    %v2167 = vadd.f32 %v1878, %v2166
    %v2168 = vpop.f32.mrb[0].mxu0
    %v2169 = vpop.f32.mrb[0].mxu0
    %v2170 = vadd.f32 %v1881, %v2169
    %v2171 = vpop.f32.mrb[0].mxu0
    %2172 = vmatprep.mubr.bf16.mxu0 %v740
    %2173 = vmatmul.mubr.bf16.gmra.mrb[0].mxu0 %v739
    %v2174 = vpop.f32.mrb[0].mxu0
    %v2175 = vadd.f32 %v1886, %v2174
    %v2176 = vpop.f32.mrb[0].mxu0
    %v2177 = vpop.f32.mrb[0].mxu0
    %v2178 = vadd.f32 %v1889, %v2177
    %v2179 = vpop.f32.mrb[0].mxu0
    %2180 = vmatprep.mubr.bf16.mxu0 %v744
    %2181 = vmatmul.mubr.bf16.gmra.mrb[0].mxu0 %v743
    %v2182 = vpop.f32.mrb[0].mxu0
    %v2183 = vadd.f32 %v1894, %v2182
    %v2184 = vpop.f32.mrb[0].mxu0
    %v2185 = vpop.f32.mrb[0].mxu0
    %v2186 = vadd.f32 %v1897, %v2185
    %v2187 = vpop.f32.mrb[0].mxu0
    %2188 = vmatprep.mubr.bf16.mxu0 %v748
    %2189 = vmatmul.mubr.bf16.gmra.mrb[0].mxu0 %v747
    %v2190 = vpop.f32.mrb[0].mxu0
    %v2191 = vadd.f32 %v1902, %v2190
    %v2192 = vpop.f32.mrb[0].mxu0
    %v2193 = vpop.f32.mrb[0].mxu0
    %v2194 = vadd.f32 %v1905, %v2193
    %v2195 = vpop.f32.mrb[0].mxu0
    %2196 = vmatprep.mubr.bf16.mxu0 %v752
    %2197 = vmatmul.mubr.bf16.gmra.mrb[0].mxu0 %v751
    %v2198 = vpop.f32.mrb[0].mxu0
    %v2199 = vadd.f32 %v1910, %v2198
    %v2200 = vpop.f32.mrb[0].mxu0
    %v2201 = vpop.f32.mrb[0].mxu0
    %v2202 = vadd.f32 %v1913, %v2201
    %v2203 = vpop.f32.mrb[0].mxu0
    %2204 = vmatprep.mubr.bf16.mxu0 %v756
    %2205 = vmatmul.mubr.bf16.gmra.mrb[0].mxu0 %v755
    %v2206 = vpop.f32.mrb[0].mxu0
    %v2207 = vadd.f32 %v1918, %v2206
    %v2208 = vpop.f32.mrb[0].mxu0
    %v2209 = vpop.f32.mrb[0].mxu0
    %v2210 = vadd.f32 %v1921, %v2209
    %v2211 = vpop.f32.mrb[0].mxu0
    %2212 = vmatprep.mubr.bf16.mxu0 %v760
    %2213 = vmatmul.mubr.bf16.gmra.mrb[0].mxu0 %v759
    %v2214 = vpop.f32.mrb[0].mxu0
    %v2215 = vadd.f32 %v1926, %v2214
    %v2216 = vpop.f32.mrb[0].mxu0
    %v2217 = vpop.f32.mrb[0].mxu0
    %v2218 = vadd.f32 %v1929, %v2217
    %v2219 = vpop.f32.mrb[0].mxu0
    %2220 = vmatprep.mubr.bf16.mxu0 %v764
    %2221 = vmatmul.mubr.bf16.gmra.mrb[0].mxu0 %v763
    %v2222 = vpop.f32.mrb[0].mxu0
    %v2223 = vadd.f32 %v1934, %v2222
    %v2224 = vpop.f32.mrb[0].mxu0
    %v2225 = vpop.f32.mrb[0].mxu0
    %v2226 = vadd.f32 %v1937, %v2225
    %v2227 = vpop.f32.mrb[0].mxu0
    %2228 = vmatprep.mubr.bf16.mxu0 %v768
    %2229 = vmatmul.mubr.bf16.gmra.mrb[0].mxu0 %v767
    %v2230 = vpop.f32.mrb[0].mxu0
    %v2231 = vadd.f32 %v1942, %v2230
    %v2232 = vpop.f32.mrb[0].mxu0
    %v2233 = vpop.f32.mrb[0].mxu0
    %v2234 = vadd.f32 %v1945, %v2233
    %v2235 = vpop.f32.mrb[0].mxu0
    %2236 = vmatprep.mubr.bf16.mxu0 %v772
    %2237 = vmatmul.mubr.bf16.gmra.mrb[0].mxu0 %v771
    %v2238 = vpop.f32.mrb[0].mxu0
    %v2239 = vadd.f32 %v1950, %v2238
    %v2240 = vpop.f32.mrb[0].mxu0
    %v2241 = vpop.f32.mrb[0].mxu0
    %v2242 = vadd.f32 %v1953, %v2241
    %v2243 = vpop.f32.mrb[0].mxu0
    %2244 = vmatprep.mubr.bf16.mxu0 %v776
    %2245 = vmatmul.mubr.bf16.gmra.mrb[0].mxu0 %v775
    %v2246 = vpop.f32.mrb[0].mxu0
    %v2247 = vadd.f32 %v1958, %v2246
    %v2248 = vpop.f32.mrb[0].mxu0
    %v2249 = vpop.f32.mrb[0].mxu0
    %v2250 = vadd.f32 %v1961, %v2249
    %v2251 = vpop.f32.mrb[0].mxu0
    %2252 = vmatprep.mubr.bf16.mxu0 %v780
    %2253 = vmatmul.mubr.bf16.gmra.mrb[0].mxu0 %v779
    %v2254 = vpop.f32.mrb[0].mxu0
    %v2255 = vadd.f32 %v1966, %v2254
    %v2256 = vpop.f32.mrb[0].mxu0
    %v2257 = vpop.f32.mrb[0].mxu0
    %v2258 = vadd.f32 %v1969, %v2257
    %v2259 = vpop.f32.mrb[0].mxu0
    %2260 = vmatprep.mubr.bf16.mxu0 %v784
    %2261 = vmatmul.mubr.bf16.gmra.mrb[0].mxu0 %v783
    %v2262 = vpop.f32.mrb[0].mxu0
    %v2263 = vadd.f32 %v1974, %v2262
    %v2264 = vpop.f32.mrb[0].mxu0
    %v2265 = vpop.f32.mrb[0].mxu0
    %v2266 = vadd.f32 %v1977, %v2265
    %v2267 = vpop.f32.mrb[0].mxu0
    %2268 = vmatprep.mubr.bf16.mxu0 %v788
    %2269 = vmatmul.mubr.bf16.gmra.mrb[0].mxu0 %v787
    %v2270 = vpop.f32.mrb[0].mxu0
    %v2271 = vadd.f32 %v1982, %v2270
    %v2272 = vpop.f32.mrb[0].mxu0
    %v2273 = vpop.f32.mrb[0].mxu0
    %v2274 = vadd.f32 %v1985, %v2273
    %v2275 = vpop.f32.mrb[0].mxu0
    %2276 = vmatprep.mubr.bf16.mxu0 %v792
    %2277 = vmatmul.mubr.bf16.gmra.mrb[0].mxu0 %v791
    %v2278 = vpop.f32.mrb[0].mxu0
    %v2279 = vadd.f32 %v1990, %v2278
    %v2280 = vpop.f32.mrb[0].mxu0
    %v2281 = vpop.f32.mrb[0].mxu0
    %v2282 = vadd.f32 %v1993, %v2281
    %v2283 = vpop.f32.mrb[0].mxu0
    %2284 = vmatprep.mubr.bf16.mxu0 %v796
    %2285 = vmatmul.mubr.bf16.gmra.mrb[0].mxu0 %v795
    %v2286 = vpop.f32.mrb[0].mxu0
    %v2287 = vadd.f32 %v1998, %v2286
    %v2288 = vpop.f32.mrb[0].mxu0
    %v2289 = vpop.f32.mrb[0].mxu0
    %v2290 = vadd.f32 %v2001, %v2289
    %v2291 = vpop.f32.mrb[0].mxu0
    %2292 = vmatprep.mubr.bf16.mxu0 %v800
    %2293 = vmatmul.mubr.bf16.gmra.mrb[0].mxu0 %v799
    %v2294 = vpop.f32.mrb[0].mxu0
    %v2295 = vadd.f32 %v2006, %v2294
    %v2296 = vpop.f32.mrb[0].mxu0
    %v2297 = vpop.f32.mrb[0].mxu0
    %v2298 = vadd.f32 %v2009, %v2297
    %v2299 = vpop.f32.mrb[0].mxu0
    %2300 = vmatprep.mubr.bf16.mxu0 %v804
    %2301 = vmatmul.mubr.bf16.gmra.mrb[0].mxu0 %v803
    %v2302 = vpop.f32.mrb[0].mxu0
    %v2303 = vadd.f32 %v2014, %v2302
    %v2304 = vpop.f32.mrb[0].mxu0
    %v2305 = vpop.f32.mrb[0].mxu0
    %v2306 = vadd.f32 %v2017, %v2305
    %v2307 = vpop.f32.mrb[0].mxu0
    %2308 = vmatprep.mubr.bf16.mxu0 %v808
    %2309 = vmatmul.mubr.bf16.gmra.mrb[0].mxu0 %v807
    %v2310 = vpop.f32.mrb[0].mxu0
    %v2311 = vadd.f32 %v2022, %v2310
    %v2312 = vpop.f32.mrb[0].mxu0
    %v2313 = vpop.f32.mrb[0].mxu0
    %v2314 = vadd.f32 %v2025, %v2313
    %v2315 = vpop.f32.mrb[0].mxu0
    %2316 = vdwg.mxu0
    %v2317 = vpack.c.bf16 %v2066, %v2063
    %v2318 = vpack.c.bf16 %v2074, %v2071
    %v2319 = vpack.c.bf16 %v2082, %v2079
    %v2320 = vpack.c.bf16 %v2090, %v2087
    %v2321 = vpack.c.bf16 %v2098, %v2095
    %v2322 = vpack.c.bf16 %v2106, %v2103
    %v2323 = vpack.c.bf16 %v2114, %v2111
    %v2324 = vpack.c.bf16 %v2122, %v2119
    %v2325 = vpack.c.bf16 %v2130, %v2127
    %v2326 = vpack.c.bf16 %v2138, %v2135
    %v2327 = vpack.c.bf16 %v2146, %v2143
    %v2328 = vpack.c.bf16 %v2154, %v2151
    %v2329 = vpack.c.bf16 %v2162, %v2159
    %v2330 = vpack.c.bf16 %v2170, %v2167
    %v2331 = vpack.c.bf16 %v2178, %v2175
    %v2332 = vpack.c.bf16 %v2186, %v2183
    %v2333 = vpack.c.bf16 %v2194, %v2191
    %v2334 = vpack.c.bf16 %v2202, %v2199
    %v2335 = vpack.c.bf16 %v2210, %v2207
    %v2336 = vpack.c.bf16 %v2218, %v2215
    %v2337 = vpack.c.bf16 %v2226, %v2223
    %v2338 = vpack.c.bf16 %v2234, %v2231
    %v2339 = vpack.c.bf16 %v2242, %v2239
    %v2340 = vpack.c.bf16 %v2250, %v2247
    %v2341 = vpack.c.bf16 %v2258, %v2255
    %v2342 = vpack.c.bf16 %v2266, %v2263
    %v2343 = vpack.c.bf16 %v2274, %v2271
    %v2344 = vpack.c.bf16 %v2282, %v2279
    %v2345 = vpack.c.bf16 %v2290, %v2287
    %v2346 = vpack.c.bf16 %v2298, %v2295
    %v2347 = vpack.c.bf16 %v2306, %v2303
    %v2348 = vpack.c.bf16 %v2314, %v2311
    %v2349 = vld [vmem:[#allocation7] sm:$0xf]
    %v2350 = vld [vmem:[#allocation7 + $0x4] sm:$0xf]
    %v2351 = vld [vmem:[#allocation7 + $0x8] sm:$0xf]
    %v2352 = vld [vmem:[#allocation7 + $0xc] sm:$0xf]
    %v2353 = vld [vmem:[#allocation7 + $0x10] sm:$0xf]
    %v2354 = vld [vmem:[#allocation7 + $0x14] sm:$0xf]
    %v2355 = vld [vmem:[#allocation7 + $0x18] sm:$0xf]
    %v2356 = vld [vmem:[#allocation7 + $0x1c] sm:$0xf]
    %v2357 = vld [vmem:[#allocation7 + $0x20] sm:$0xf]
    %v2358 = vld [vmem:[#allocation7 + $0x24] sm:$0xf]
    %v2359 = vld [vmem:[#allocation7 + $0x28] sm:$0xf]
    %v2360 = vld [vmem:[#allocation7 + $0x2c] sm:$0xf]
    %v2361 = vld [vmem:[#allocation7 + $0x30] sm:$0xf]
    %v2362 = vld [vmem:[#allocation7 + $0x34] sm:$0xf]
    %v2363 = vld [vmem:[#allocation7 + $0x38] sm:$0xf]
    %v2364 = vld [vmem:[#allocation7 + $0x3c] sm:$0xf]
    %v2381 = vunpack.c.l.b16 %v2349
    %v2382 = vunpack.c.l.b16 %v2350
    %v2383 = vunpack.c.l.b16 %v2351
    %v2384 = vunpack.c.l.b16 %v2352
    %v2385 = vunpack.c.l.b16 %v2353
    %v2386 = vunpack.c.l.b16 %v2354
    %v2387 = vunpack.c.l.b16 %v2355
    %v2388 = vunpack.c.l.b16 %v2356
    %v2389 = vunpack.c.l.b16 %v2357
    %v2390 = vunpack.c.l.b16 %v2358
    %v2391 = vunpack.c.l.b16 %v2359
    %v2392 = vunpack.c.l.b16 %v2360
    %v2393 = vunpack.c.l.b16 %v2361
    %v2394 = vunpack.c.l.b16 %v2362
    %v2395 = vunpack.c.l.b16 %v2363
    %v2396 = vunpack.c.l.b16 %v2364
    %v2397 = vpack.c.b16 %v2382, %v2381
    %v2398 = vpack.c.b16 %v2384, %v2383
    %v2399 = vpack.c.b16 %v2386, %v2385
    %v2400 = vpack.c.b16 %v2388, %v2387
    %v2401 = vpack.c.b16 %v2390, %v2389
    %v2402 = vpack.c.b16 %v2392, %v2391
    %v2403 = vpack.c.b16 %v2394, %v2393
    %v2404 = vpack.c.b16 %v2396, %v2395
    %2413 = vmatprep.subr.bf16.mxu0 0
    %2414 = vmatpush1.bf16.msra.mxu0 %v2397
    %2415 = vmatprep.subr.bf16.mxu0 0
    %2416 = vmatpush1.bf16.msra.mxu0 %v2398
    %2417 = vmatprep.subr.bf16.mxu0 0
    %2418 = vmatpush1.bf16.msra.mxu0 %v2399
    %2419 = vmatprep.subr.bf16.mxu0 0
    %2420 = vmatpush1.bf16.msra.mxu0 %v2400
    %2421 = vmatprep.subr.bf16.mxu0 0
    %2422 = vmatpush1.bf16.msra.mxu0 %v2401
    %2423 = vmatprep.subr.bf16.mxu0 0
    %2424 = vmatpush1.bf16.msra.mxu0 %v2402
    %2425 = vmatprep.subr.bf16.mxu0 0
    %2426 = vmatpush1.bf16.msra.mxu0 %v2403
    %2427 = vmatprep.subr.bf16.mxu0 0
    %2428 = vmatpush1.bf16.msra.mxu0 %v2404
    %2429 = vmatprep.subr.bf16.mxu0 0
    %2430 = vmatpush1.bf16.msra.mxu0 0
    %2431 = vmatprep.subr.bf16.mxu0 0
    %2432 = vmatpush1.bf16.msra.mxu0 0
    %2433 = vmatprep.subr.bf16.mxu0 0
    %2434 = vmatpush1.bf16.msra.mxu0 0
    %2435 = vmatprep.subr.bf16.mxu0 0
    %2436 = vmatpush1.bf16.msra.mxu0 0
    %2437 = vmatprep.subr.bf16.mxu0 0
    %2438 = vmatpush1.bf16.msra.mxu0 0
    %2439 = vmatprep.subr.bf16.mxu0 0
    %2440 = vmatpush1.bf16.msra.mxu0 0
    %2441 = vmatprep.subr.bf16.mxu0 0
    %2442 = vmatpush1.bf16.msra.mxu0 0
    %2443 = vmatprep.subr.bf16.mxu0 0
    %2444 = vmatpush1.bf16.msra.mxu0 0
    %2445 = vmatprep.mubr.bf16.mxu0 0
    %2446 = vmatmul.mubr.bf16.gmra.mrb[0].mxu0 %v2317
    %v2447 = vpop.f32.mrb[0].mxu0
    %v2448 = vadd.f32 0.0, %v2447
    %v2449 = vpop.f32.mrb[0].mxu0
    %v2450 = vpop.f32.mrb[0].mxu0
    %v2451 = vadd.f32 0.0, %v2450
    %v2452 = vpop.f32.mrb[0].mxu0
    %2453 = vmatprep.mubr.bf16.mxu0 0
    %2454 = vmatmul.mubr.bf16.gmra.mrb[0].mxu0 %v2318
    %v2455 = vpop.f32.mrb[0].mxu0
    %v2456 = vadd.f32 0.0, %v2455
    %v2457 = vpop.f32.mrb[0].mxu0
    %v2458 = vpop.f32.mrb[0].mxu0
    %v2459 = vadd.f32 0.0, %v2458
    %v2460 = vpop.f32.mrb[0].mxu0
    %2461 = vmatprep.mubr.bf16.mxu0 0
    %2462 = vmatmul.mubr.bf16.gmra.mrb[0].mxu0 %v2319
    %v2463 = vpop.f32.mrb[0].mxu0
    %v2464 = vadd.f32 0.0, %v2463
    %v2465 = vpop.f32.mrb[0].mxu0
    %v2466 = vpop.f32.mrb[0].mxu0
    %v2467 = vadd.f32 0.0, %v2466
    %v2468 = vpop.f32.mrb[0].mxu0
    %2469 = vmatprep.mubr.bf16.mxu0 0
    %2470 = vmatmul.mubr.bf16.gmra.mrb[0].mxu0 %v2320
    %v2471 = vpop.f32.mrb[0].mxu0
    %v2472 = vadd.f32 0.0, %v2471
    %v2473 = vpop.f32.mrb[0].mxu0
    %v2474 = vpop.f32.mrb[0].mxu0
    %v2475 = vadd.f32 0.0, %v2474
    %v2476 = vpop.f32.mrb[0].mxu0
    %2477 = vmatprep.mubr.bf16.mxu0 0
    %2478 = vmatmul.mubr.bf16.gmra.mrb[0].mxu0 %v2321
    %v2479 = vpop.f32.mrb[0].mxu0
    %v2480 = vadd.f32 0.0, %v2479
    %v2481 = vpop.f32.mrb[0].mxu0
    %v2482 = vpop.f32.mrb[0].mxu0
    %v2483 = vadd.f32 0.0, %v2482
    %v2484 = vpop.f32.mrb[0].mxu0
    %2485 = vmatprep.mubr.bf16.mxu0 0
    %2486 = vmatmul.mubr.bf16.gmra.mrb[0].mxu0 %v2322
    %v2487 = vpop.f32.mrb[0].mxu0
    %v2488 = vadd.f32 0.0, %v2487
    %v2489 = vpop.f32.mrb[0].mxu0
    %v2490 = vpop.f32.mrb[0].mxu0
    %v2491 = vadd.f32 0.0, %v2490
    %v2492 = vpop.f32.mrb[0].mxu0
    %2493 = vmatprep.mubr.bf16.mxu0 0
    %2494 = vmatmul.mubr.bf16.gmra.mrb[0].mxu0 %v2323
    %v2495 = vpop.f32.mrb[0].mxu0
    %v2496 = vadd.f32 0.0, %v2495
    %v2497 = vpop.f32.mrb[0].mxu0
    %v2498 = vpop.f32.mrb[0].mxu0
    %v2499 = vadd.f32 0.0, %v2498
    %v2500 = vpop.f32.mrb[0].mxu0
    %2501 = vmatprep.mubr.bf16.mxu0 0
    %2502 = vmatmul.mubr.bf16.gmra.mrb[0].mxu0 %v2324
    %v2503 = vpop.f32.mrb[0].mxu0
    %v2504 = vadd.f32 0.0, %v2503
    %v2505 = vpop.f32.mrb[0].mxu0
    %v2506 = vpop.f32.mrb[0].mxu0
    %v2507 = vadd.f32 0.0, %v2506
    %v2508 = vpop.f32.mrb[0].mxu0
    %2509 = vmatprep.mubr.bf16.mxu0 0
    %2510 = vmatmul.mubr.bf16.gmra.mrb[0].mxu0 %v2325
    %v2511 = vpop.f32.mrb[0].mxu0
    %v2512 = vadd.f32 0.0, %v2511
    %v2513 = vpop.f32.mrb[0].mxu0
    %v2514 = vpop.f32.mrb[0].mxu0
    %v2515 = vadd.f32 0.0, %v2514
    %v2516 = vpop.f32.mrb[0].mxu0
    %2517 = vmatprep.mubr.bf16.mxu0 0
    %2518 = vmatmul.mubr.bf16.gmra.mrb[0].mxu0 %v2326
    %v2519 = vpop.f32.mrb[0].mxu0
    %v2520 = vadd.f32 0.0, %v2519
    %v2521 = vpop.f32.mrb[0].mxu0
    %v2522 = vpop.f32.mrb[0].mxu0
    %v2523 = vadd.f32 0.0, %v2522
    %v2524 = vpop.f32.mrb[0].mxu0
    %2525 = vmatprep.mubr.bf16.mxu0 0
    %2526 = vmatmul.mubr.bf16.gmra.mrb[0].mxu0 %v2327
    %v2527 = vpop.f32.mrb[0].mxu0
    %v2528 = vadd.f32 0.0, %v2527
    %v2529 = vpop.f32.mrb[0].mxu0
    %v2530 = vpop.f32.mrb[0].mxu0
    %v2531 = vadd.f32 0.0, %v2530
    %v2532 = vpop.f32.mrb[0].mxu0
    %2533 = vmatprep.mubr.bf16.mxu0 0
    %2534 = vmatmul.mubr.bf16.gmra.mrb[0].mxu0 %v2328
    %v2535 = vpop.f32.mrb[0].mxu0
    %v2536 = vadd.f32 0.0, %v2535
    %v2537 = vpop.f32.mrb[0].mxu0
    %v2538 = vpop.f32.mrb[0].mxu0
    %v2539 = vadd.f32 0.0, %v2538
    %v2540 = vpop.f32.mrb[0].mxu0
    %2541 = vmatprep.mubr.bf16.mxu0 0
    %2542 = vmatmul.mubr.bf16.gmra.mrb[0].mxu0 %v2329
    %v2543 = vpop.f32.mrb[0].mxu0
    %v2544 = vadd.f32 0.0, %v2543
    %v2545 = vpop.f32.mrb[0].mxu0
    %v2546 = vpop.f32.mrb[0].mxu0
    %v2547 = vadd.f32 0.0, %v2546
    %v2548 = vpop.f32.mrb[0].mxu0
    %2549 = vmatprep.mubr.bf16.mxu0 0
    %2550 = vmatmul.mubr.bf16.gmra.mrb[0].mxu0 %v2330
    %v2551 = vpop.f32.mrb[0].mxu0
    %v2552 = vadd.f32 0.0, %v2551
    %v2553 = vpop.f32.mrb[0].mxu0
    %v2554 = vpop.f32.mrb[0].mxu0
    %v2555 = vadd.f32 0.0, %v2554
    %v2556 = vpop.f32.mrb[0].mxu0
    %2557 = vmatprep.mubr.bf16.mxu0 0
    %2558 = vmatmul.mubr.bf16.gmra.mrb[0].mxu0 %v2331
    %v2559 = vpop.f32.mrb[0].mxu0
    %v2560 = vadd.f32 0.0, %v2559
    %v2561 = vpop.f32.mrb[0].mxu0
    %v2562 = vpop.f32.mrb[0].mxu0
    %v2563 = vadd.f32 0.0, %v2562
    %v2564 = vpop.f32.mrb[0].mxu0
    %2565 = vmatprep.mubr.bf16.mxu0 0
    %2566 = vmatmul.mubr.bf16.gmra.mrb[0].mxu0 %v2332
    %v2567 = vpop.f32.mrb[0].mxu0
    %v2568 = vadd.f32 0.0, %v2567
    %v2569 = vpop.f32.mrb[0].mxu0
    %v2570 = vpop.f32.mrb[0].mxu0
    %v2571 = vadd.f32 0.0, %v2570
    %v2572 = vpop.f32.mrb[0].mxu0
    %2573 = vmatprep.mubr.bf16.mxu0 0
    %2574 = vmatmul.mubr.bf16.gmra.mrb[0].mxu0 %v2333
    %v2575 = vpop.f32.mrb[0].mxu0
    %v2576 = vadd.f32 0.0, %v2575
    %v2577 = vpop.f32.mrb[0].mxu0
    %v2578 = vpop.f32.mrb[0].mxu0
    %v2579 = vadd.f32 0.0, %v2578
    %v2580 = vpop.f32.mrb[0].mxu0
    %2581 = vmatprep.mubr.bf16.mxu0 0
    %2582 = vmatmul.mubr.bf16.gmra.mrb[0].mxu0 %v2334
    %v2583 = vpop.f32.mrb[0].mxu0
    %v2584 = vadd.f32 0.0, %v2583
    %v2585 = vpop.f32.mrb[0].mxu0
    %v2586 = vpop.f32.mrb[0].mxu0
    %v2587 = vadd.f32 0.0, %v2586
    %v2588 = vpop.f32.mrb[0].mxu0
    %2589 = vmatprep.mubr.bf16.mxu0 0
    %2590 = vmatmul.mubr.bf16.gmra.mrb[0].mxu0 %v2335
    %v2591 = vpop.f32.mrb[0].mxu0
    %v2592 = vadd.f32 0.0, %v2591
    %v2593 = vpop.f32.mrb[0].mxu0
    %v2594 = vpop.f32.mrb[0].mxu0
    %v2595 = vadd.f32 0.0, %v2594
    %v2596 = vpop.f32.mrb[0].mxu0
    %2597 = vmatprep.mubr.bf16.mxu0 0
    %2598 = vmatmul.mubr.bf16.gmra.mrb[0].mxu0 %v2336
    %v2599 = vpop.f32.mrb[0].mxu0
    %v2600 = vadd.f32 0.0, %v2599
    %v2601 = vpop.f32.mrb[0].mxu0
    %v2602 = vpop.f32.mrb[0].mxu0
    %v2603 = vadd.f32 0.0, %v2602
    %v2604 = vpop.f32.mrb[0].mxu0
    %2605 = vmatprep.mubr.bf16.mxu0 0
    %2606 = vmatmul.mubr.bf16.gmra.mrb[0].mxu0 %v2337
    %v2607 = vpop.f32.mrb[0].mxu0
    %v2608 = vadd.f32 0.0, %v2607
    %v2609 = vpop.f32.mrb[0].mxu0
    %v2610 = vpop.f32.mrb[0].mxu0
    %v2611 = vadd.f32 0.0, %v2610
    %v2612 = vpop.f32.mrb[0].mxu0
    %2613 = vmatprep.mubr.bf16.mxu0 0
    %2614 = vmatmul.mubr.bf16.gmra.mrb[0].mxu0 %v2338
    %v2615 = vpop.f32.mrb[0].mxu0
    %v2616 = vadd.f32 0.0, %v2615
    %v2617 = vpop.f32.mrb[0].mxu0
    %v2618 = vpop.f32.mrb[0].mxu0
    %v2619 = vadd.f32 0.0, %v2618
    %v2620 = vpop.f32.mrb[0].mxu0
    %2621 = vmatprep.mubr.bf16.mxu0 0
    %2622 = vmatmul.mubr.bf16.gmra.mrb[0].mxu0 %v2339
    %v2623 = vpop.f32.mrb[0].mxu0
    %v2624 = vadd.f32 0.0, %v2623
    %v2625 = vpop.f32.mrb[0].mxu0
    %v2626 = vpop.f32.mrb[0].mxu0
    %v2627 = vadd.f32 0.0, %v2626
    %v2628 = vpop.f32.mrb[0].mxu0
    %2629 = vmatprep.mubr.bf16.mxu0 0
    %2630 = vmatmul.mubr.bf16.gmra.mrb[0].mxu0 %v2340
    %v2631 = vpop.f32.mrb[0].mxu0
    %v2632 = vadd.f32 0.0, %v2631
    %v2633 = vpop.f32.mrb[0].mxu0
    %v2634 = vpop.f32.mrb[0].mxu0
    %v2635 = vadd.f32 0.0, %v2634
    %v2636 = vpop.f32.mrb[0].mxu0
    %2637 = vmatprep.mubr.bf16.mxu0 0
    %2638 = vmatmul.mubr.bf16.gmra.mrb[0].mxu0 %v2341
    %v2639 = vpop.f32.mrb[0].mxu0
    %v2640 = vadd.f32 0.0, %v2639
    %v2641 = vpop.f32.mrb[0].mxu0
    %v2642 = vpop.f32.mrb[0].mxu0
    %v2643 = vadd.f32 0.0, %v2642
    %v2644 = vpop.f32.mrb[0].mxu0
    %2645 = vmatprep.mubr.bf16.mxu0 0
    %2646 = vmatmul.mubr.bf16.gmra.mrb[0].mxu0 %v2342
    %v2647 = vpop.f32.mrb[0].mxu0
    %v2648 = vadd.f32 0.0, %v2647
    %v2649 = vpop.f32.mrb[0].mxu0
    %v2650 = vpop.f32.mrb[0].mxu0
    %v2651 = vadd.f32 0.0, %v2650
    %v2652 = vpop.f32.mrb[0].mxu0
    %2653 = vmatprep.mubr.bf16.mxu0 0
    %2654 = vmatmul.mubr.bf16.gmra.mrb[0].mxu0 %v2343
    %v2655 = vpop.f32.mrb[0].mxu0
    %v2656 = vadd.f32 0.0, %v2655
    %v2657 = vpop.f32.mrb[0].mxu0
    %v2658 = vpop.f32.mrb[0].mxu0
    %v2659 = vadd.f32 0.0, %v2658
    %v2660 = vpop.f32.mrb[0].mxu0
    %2661 = vmatprep.mubr.bf16.mxu0 0
    %2662 = vmatmul.mubr.bf16.gmra.mrb[0].mxu0 %v2344
    %v2663 = vpop.f32.mrb[0].mxu0
    %v2664 = vadd.f32 0.0, %v2663
    %v2665 = vpop.f32.mrb[0].mxu0
    %v2666 = vpop.f32.mrb[0].mxu0
    %v2667 = vadd.f32 0.0, %v2666
    %v2668 = vpop.f32.mrb[0].mxu0
    %2669 = vmatprep.mubr.bf16.mxu0 0
    %2670 = vmatmul.mubr.bf16.gmra.mrb[0].mxu0 %v2345
    %v2671 = vpop.f32.mrb[0].mxu0
    %v2672 = vadd.f32 0.0, %v2671
    %v2673 = vpop.f32.mrb[0].mxu0
    %v2674 = vpop.f32.mrb[0].mxu0
    %v2675 = vadd.f32 0.0, %v2674
    %v2676 = vpop.f32.mrb[0].mxu0
    %2677 = vmatprep.mubr.bf16.mxu0 0
    %2678 = vmatmul.mubr.bf16.gmra.mrb[0].mxu0 %v2346
    %v2679 = vpop.f32.mrb[0].mxu0
    %v2680 = vadd.f32 0.0, %v2679
    %v2681 = vpop.f32.mrb[0].mxu0
    %v2682 = vpop.f32.mrb[0].mxu0
    %v2683 = vadd.f32 0.0, %v2682
    %v2684 = vpop.f32.mrb[0].mxu0
    %2685 = vmatprep.mubr.bf16.mxu0 0
    %2686 = vmatmul.mubr.bf16.gmra.mrb[0].mxu0 %v2347
    %v2687 = vpop.f32.mrb[0].mxu0
    %v2688 = vadd.f32 0.0, %v2687
    %v2689 = vpop.f32.mrb[0].mxu0
    %v2690 = vpop.f32.mrb[0].mxu0
    %v2691 = vadd.f32 0.0, %v2690
    %v2692 = vpop.f32.mrb[0].mxu0
    %2693 = vmatprep.mubr.bf16.mxu0 0
    %2694 = vmatmul.mubr.bf16.gmra.mrb[0].mxu0 %v2348
    %v2695 = vpop.f32.mrb[0].mxu0
    %v2696 = vadd.f32 0.0, %v2695
    %v2697 = vpop.f32.mrb[0].mxu0
    %v2698 = vpop.f32.mrb[0].mxu0
    %v2699 = vadd.f32 0.0, %v2698
    %v2700 = vpop.f32.mrb[0].mxu0
    %2701 = vdwg.mxu0
    %v2702 = vadd.f32 %v2448, %v2451
    %v2703 = vadd.f32 %v2702, %v2456
    %v2704 = vadd.f32 %v2703, %v2459
    %v2705 = vadd.f32 %v2704, %v2464
    %v2706 = vadd.f32 %v2705, %v2467
    %v2707 = vadd.f32 %v2706, %v2472
    %v2708 = vadd.f32 %v2707, %v2475
    %v2709 = vadd.f32 %v2708, %v2480
    %v2710 = vadd.f32 %v2709, %v2483
    %v2711 = vadd.f32 %v2710, %v2488
    %v2712 = vadd.f32 %v2711, %v2491
    %v2713 = vadd.f32 %v2712, %v2496
    %v2714 = vadd.f32 %v2713, %v2499
    %v2715 = vadd.f32 %v2714, %v2504
    %v2716 = vadd.f32 %v2715, %v2507
    %v2717 = vadd.f32 %v2716, %v2512
    %v2718 = vadd.f32 %v2717, %v2515
    %v2719 = vadd.f32 %v2718, %v2520
    %v2720 = vadd.f32 %v2719, %v2523
    %v2721 = vadd.f32 %v2720, %v2528
    %v2722 = vadd.f32 %v2721, %v2531
    %v2723 = vadd.f32 %v2722, %v2536
    %v2724 = vadd.f32 %v2723, %v2539
    %v2725 = vadd.f32 %v2724, %v2544
    %v2726 = vadd.f32 %v2725, %v2547
    %v2727 = vadd.f32 %v2726, %v2552
    %v2728 = vadd.f32 %v2727, %v2555
    %v2729 = vadd.f32 %v2728, %v2560
    %v2730 = vadd.f32 %v2729, %v2563
    %v2731 = vadd.f32 %v2730, %v2568
    %v2732 = vadd.f32 %v2731, %v2571
    %v2733 = vadd.f32 %v2732, %v2576
    %v2734 = vadd.f32 %v2733, %v2579
    %v2735 = vadd.f32 %v2734, %v2584
    %v2736 = vadd.f32 %v2735, %v2587
    %v2737 = vadd.f32 %v2736, %v2592
    %v2738 = vadd.f32 %v2737, %v2595
    %v2739 = vadd.f32 %v2738, %v2600
    %v2740 = vadd.f32 %v2739, %v2603
    %v2741 = vadd.f32 %v2740, %v2608
    %v2742 = vadd.f32 %v2741, %v2611
    %v2743 = vadd.f32 %v2742, %v2616
    %v2744 = vadd.f32 %v2743, %v2619
    %v2745 = vadd.f32 %v2744, %v2624
    %v2746 = vadd.f32 %v2745, %v2627
    %v2747 = vadd.f32 %v2746, %v2632
    %v2748 = vadd.f32 %v2747, %v2635
    %v2749 = vadd.f32 %v2748, %v2640
    %v2750 = vadd.f32 %v2749, %v2643
    %v2751 = vadd.f32 %v2750, %v2648
    %v2752 = vadd.f32 %v2751, %v2651
    %v2753 = vadd.f32 %v2752, %v2656
    %v2754 = vadd.f32 %v2753, %v2659
    %v2755 = vadd.f32 %v2754, %v2664
    %v2756 = vadd.f32 %v2755, %v2667
    %v2757 = vadd.f32 %v2756, %v2672
    %v2758 = vadd.f32 %v2757, %v2675
    %v2759 = vadd.f32 %v2758, %v2680
    %v2760 = vadd.f32 %v2759, %v2683
    %v2761 = vadd.f32 %v2760, %v2688
    %v2762 = vadd.f32 %v2761, %v2691
    %v2763 = vadd.f32 %v2762, %v2696
    %v2764 = vadd.f32 %v2763, %v2699
    %v2765 = vrot.slane %v2764, 4
    %v2766 = vadd.f32 %v2764, %v2765
    %v2767 = vrot.slane %v2766, 2
    %v2768 = vadd.f32 %v2766, %v2767
    %v2769 = vrot.slane %v2768, 1
    %v2770 = vadd.f32 %v2768, %v2769
    %v2771 = vmul.f32 %v2770, 0.002
    %v2772 = vmul.f32 %v2448, %v2448
    %v2773 = vmul.f32 %v2451, %v2451
    %v2774 = vmul.f32 %v2456, %v2456
    %v2775 = vmul.f32 %v2459, %v2459
    %v2776 = vmul.f32 %v2464, %v2464
    %v2777 = vmul.f32 %v2467, %v2467
    %v2778 = vmul.f32 %v2472, %v2472
    %v2779 = vmul.f32 %v2475, %v2475
    %v2780 = vmul.f32 %v2480, %v2480
    %v2781 = vmul.f32 %v2483, %v2483
    %v2782 = vmul.f32 %v2488, %v2488
    %v2783 = vmul.f32 %v2491, %v2491
    %v2784 = vmul.f32 %v2496, %v2496
    %v2785 = vmul.f32 %v2499, %v2499
    %v2786 = vmul.f32 %v2504, %v2504
    %v2787 = vmul.f32 %v2507, %v2507
    %v2788 = vmul.f32 %v2512, %v2512
    %v2789 = vmul.f32 %v2515, %v2515
    %v2790 = vmul.f32 %v2520, %v2520
    %v2791 = vmul.f32 %v2523, %v2523
    %v2792 = vmul.f32 %v2528, %v2528
    %v2793 = vmul.f32 %v2531, %v2531
    %v2794 = vmul.f32 %v2536, %v2536
    %v2795 = vmul.f32 %v2539, %v2539
    %v2796 = vmul.f32 %v2544, %v2544
    %v2797 = vmul.f32 %v2547, %v2547
    %v2798 = vmul.f32 %v2552, %v2552
    %v2799 = vmul.f32 %v2555, %v2555
    %v2800 = vmul.f32 %v2560, %v2560
    %v2801 = vmul.f32 %v2563, %v2563
    %v2802 = vmul.f32 %v2568, %v2568
    %v2803 = vmul.f32 %v2571, %v2571
    %v2804 = vmul.f32 %v2576, %v2576
    %v2805 = vmul.f32 %v2579, %v2579
    %v2806 = vmul.f32 %v2584, %v2584
    %v2807 = vmul.f32 %v2587, %v2587
    %v2808 = vmul.f32 %v2592, %v2592
    %v2809 = vmul.f32 %v2595, %v2595
    %v2810 = vmul.f32 %v2600, %v2600
    %v2811 = vmul.f32 %v2603, %v2603
    %v2812 = vmul.f32 %v2608, %v2608
    %v2813 = vmul.f32 %v2611, %v2611
    %v2814 = vmul.f32 %v2616, %v2616
    %v2815 = vmul.f32 %v2619, %v2619
    %v2816 = vmul.f32 %v2624, %v2624
    %v2817 = vmul.f32 %v2627, %v2627
    %v2818 = vmul.f32 %v2632, %v2632
    %v2819 = vmul.f32 %v2635, %v2635
    %v2820 = vmul.f32 %v2640, %v2640
    %v2821 = vmul.f32 %v2643, %v2643
    %v2822 = vmul.f32 %v2648, %v2648
    %v2823 = vmul.f32 %v2651, %v2651
    %v2824 = vmul.f32 %v2656, %v2656
    %v2825 = vmul.f32 %v2659, %v2659
    %v2826 = vmul.f32 %v2664, %v2664
    %v2827 = vmul.f32 %v2667, %v2667
    %v2828 = vmul.f32 %v2672, %v2672
    %v2829 = vmul.f32 %v2675, %v2675
    %v2830 = vmul.f32 %v2680, %v2680
    %v2831 = vmul.f32 %v2683, %v2683
    %v2832 = vmul.f32 %v2688, %v2688
    %v2833 = vmul.f32 %v2691, %v2691
    %v2834 = vmul.f32 %v2696, %v2696
    %v2835 = vmul.f32 %v2699, %v2699
    %v2836 = vadd.f32 %v2772, %v2773
    %v2837 = vadd.f32 %v2836, %v2774
    %v2838 = vadd.f32 %v2837, %v2775
    %v2839 = vadd.f32 %v2838, %v2776
    %v2840 = vadd.f32 %v2839, %v2777
    %v2841 = vadd.f32 %v2840, %v2778
    %v2842 = vadd.f32 %v2841, %v2779
    %v2843 = vadd.f32 %v2842, %v2780
    %v2844 = vadd.f32 %v2843, %v2781
    %v2845 = vadd.f32 %v2844, %v2782
    %v2846 = vadd.f32 %v2845, %v2783
    %v2847 = vadd.f32 %v2846, %v2784
    %v2848 = vadd.f32 %v2847, %v2785
    %v2849 = vadd.f32 %v2848, %v2786
    %v2850 = vadd.f32 %v2849, %v2787
    %v2851 = vadd.f32 %v2850, %v2788
    %v2852 = vadd.f32 %v2851, %v2789
    %v2853 = vadd.f32 %v2852, %v2790
    %v2854 = vadd.f32 %v2853, %v2791
    %v2855 = vadd.f32 %v2854, %v2792
    %v2856 = vadd.f32 %v2855, %v2793
    %v2857 = vadd.f32 %v2856, %v2794
    %v2858 = vadd.f32 %v2857, %v2795
    %v2859 = vadd.f32 %v2858, %v2796
    %v2860 = vadd.f32 %v2859, %v2797
    %v2861 = vadd.f32 %v2860, %v2798
    %v2862 = vadd.f32 %v2861, %v2799
    %v2863 = vadd.f32 %v2862, %v2800
    %v2864 = vadd.f32 %v2863, %v2801
    %v2865 = vadd.f32 %v2864, %v2802
    %v2866 = vadd.f32 %v2865, %v2803
    %v2867 = vadd.f32 %v2866, %v2804
    %v2868 = vadd.f32 %v2867, %v2805
    %v2869 = vadd.f32 %v2868, %v2806
    %v2870 = vadd.f32 %v2869, %v2807
    %v2871 = vadd.f32 %v2870, %v2808
    %v2872 = vadd.f32 %v2871, %v2809
    %v2873 = vadd.f32 %v2872, %v2810
    %v2874 = vadd.f32 %v2873, %v2811
    %v2875 = vadd.f32 %v2874, %v2812
    %v2876 = vadd.f32 %v2875, %v2813
    %v2877 = vadd.f32 %v2876, %v2814
    %v2878 = vadd.f32 %v2877, %v2815
    %v2879 = vadd.f32 %v2878, %v2816
    %v2880 = vadd.f32 %v2879, %v2817
    %v2881 = vadd.f32 %v2880, %v2818
    %v2882 = vadd.f32 %v2881, %v2819
    %v2883 = vadd.f32 %v2882, %v2820
    %v2884 = vadd.f32 %v2883, %v2821
    %v2885 = vadd.f32 %v2884, %v2822
    %v2886 = vadd.f32 %v2885, %v2823
    %v2887 = vadd.f32 %v2886, %v2824
    %v2888 = vadd.f32 %v2887, %v2825
    %v2889 = vadd.f32 %v2888, %v2826
    %v2890 = vadd.f32 %v2889, %v2827
    %v2891 = vadd.f32 %v2890, %v2828
    %v2892 = vadd.f32 %v2891, %v2829
    %v2893 = vadd.f32 %v2892, %v2830
    %v2894 = vadd.f32 %v2893, %v2831
    %v2895 = vadd.f32 %v2894, %v2832
    %v2896 = vadd.f32 %v2895, %v2833
    %v2897 = vadd.f32 %v2896, %v2834
    %v2898 = vadd.f32 %v2897, %v2835
    %v2899 = vrot.slane %v2898, 4
    %v2900 = vadd.f32 %v2898, %v2899
    %v2901 = vrot.slane %v2900, 2
    %v2902 = vadd.f32 %v2900, %v2901
    %v2903 = vrot.slane %v2902, 1
    %v2904 = vadd.f32 %v2902, %v2903
    %v2905 = vmul.f32 %v2904, 0.002
    %v2906 = vmul.f32 %v2771, %v2771
    %v2907 = vsub.f32 %v2905, %v2906
    %v2908 = vmax.f32 %v2907, 0.0
    %v2909 = vsub.f32 %v2448, %v2771
    %v2910 = vsub.f32 %v2451, %v2771
    %v2911 = vsub.f32 %v2456, %v2771
    %v2912 = vsub.f32 %v2459, %v2771
    %v2913 = vsub.f32 %v2464, %v2771
    %v2914 = vsub.f32 %v2467, %v2771
    %v2915 = vsub.f32 %v2472, %v2771
    %v2916 = vsub.f32 %v2475, %v2771
    %v2917 = vsub.f32 %v2480, %v2771
    %v2918 = vsub.f32 %v2483, %v2771
    %v2919 = vsub.f32 %v2488, %v2771
    %v2920 = vsub.f32 %v2491, %v2771
    %v2921 = vsub.f32 %v2496, %v2771
    %v2922 = vsub.f32 %v2499, %v2771
    %v2923 = vsub.f32 %v2504, %v2771
    %v2924 = vsub.f32 %v2507, %v2771
    %v2925 = vsub.f32 %v2512, %v2771
    %v2926 = vsub.f32 %v2515, %v2771
    %v2927 = vsub.f32 %v2520, %v2771
    %v2928 = vsub.f32 %v2523, %v2771
    %v2929 = vsub.f32 %v2528, %v2771
    %v2930 = vsub.f32 %v2531, %v2771
    %v2931 = vsub.f32 %v2536, %v2771
    %v2932 = vsub.f32 %v2539, %v2771
    %v2933 = vsub.f32 %v2544, %v2771
    %v2934 = vsub.f32 %v2547, %v2771
    %v2935 = vsub.f32 %v2552, %v2771
    %v2936 = vsub.f32 %v2555, %v2771
    %v2937 = vsub.f32 %v2560, %v2771
    %v2938 = vsub.f32 %v2563, %v2771
    %v2939 = vsub.f32 %v2568, %v2771
    %v2940 = vsub.f32 %v2571, %v2771
    %v2941 = vsub.f32 %v2576, %v2771
    %v2942 = vsub.f32 %v2579, %v2771
    %v2943 = vsub.f32 %v2584, %v2771
    %v2944 = vsub.f32 %v2587, %v2771
    %v2945 = vsub.f32 %v2592, %v2771
    %v2946 = vsub.f32 %v2595, %v2771
    %v2947 = vsub.f32 %v2600, %v2771
    %v2948 = vsub.f32 %v2603, %v2771
    %v2949 = vsub.f32 %v2608, %v2771
    %v2950 = vsub.f32 %v2611, %v2771
    %v2951 = vsub.f32 %v2616, %v2771
    %v2952 = vsub.f32 %v2619, %v2771
    %v2953 = vsub.f32 %v2624, %v2771
    %v2954 = vsub.f32 %v2627, %v2771
    %v2955 = vsub.f32 %v2632, %v2771
    %v2956 = vsub.f32 %v2635, %v2771
    %v2957 = vsub.f32 %v2640, %v2771
    %v2958 = vsub.f32 %v2643, %v2771
    %v2959 = vsub.f32 %v2648, %v2771
    %v2960 = vsub.f32 %v2651, %v2771
    %v2961 = vsub.f32 %v2656, %v2771
    %v2962 = vsub.f32 %v2659, %v2771
    %v2963 = vsub.f32 %v2664, %v2771
    %v2964 = vsub.f32 %v2667, %v2771
    %v2965 = vsub.f32 %v2672, %v2771
    %v2966 = vsub.f32 %v2675, %v2771
    %v2967 = vsub.f32 %v2680, %v2771
    %v2968 = vsub.f32 %v2683, %v2771
    %v2969 = vsub.f32 %v2688, %v2771
    %v2970 = vsub.f32 %v2691, %v2771
    %v2971 = vsub.f32 %v2696, %v2771
    %v2972 = vsub.f32 %v2699, %v2771
    %v2973 = vadd.f32 %v2908, 1e-10
    %v2974 = vrsqrt.pop %v2973
    %v2975 = vmul.f32 %v2909, %v2974
    %v2976 = vmul.f32 %v2910, %v2974
    %v2977 = vmul.f32 %v2911, %v2974
    %v2978 = vmul.f32 %v2912, %v2974
    %v2979 = vmul.f32 %v2913, %v2974
    %v2980 = vmul.f32 %v2914, %v2974
    %v2981 = vmul.f32 %v2915, %v2974
    %v2982 = vmul.f32 %v2916, %v2974
    %v2983 = vmul.f32 %v2917, %v2974
    %v2984 = vmul.f32 %v2918, %v2974
    %v2985 = vmul.f32 %v2919, %v2974
    %v2986 = vmul.f32 %v2920, %v2974
    %v2987 = vmul.f32 %v2921, %v2974
    %v2988 = vmul.f32 %v2922, %v2974
    %v2989 = vmul.f32 %v2923, %v2974
    %v2990 = vmul.f32 %v2924, %v2974
    %v2991 = vmul.f32 %v2925, %v2974
    %v2992 = vmul.f32 %v2926, %v2974
    %v2993 = vmul.f32 %v2927, %v2974
    %v2994 = vmul.f32 %v2928, %v2974
    %v2995 = vmul.f32 %v2929, %v2974
    %v2996 = vmul.f32 %v2930, %v2974
    %v2997 = vmul.f32 %v2931, %v2974
    %v2998 = vmul.f32 %v2932, %v2974
    %v2999 = vmul.f32 %v2933, %v2974
    %v3000 = vmul.f32 %v2934, %v2974
    %v3001 = vmul.f32 %v2935, %v2974
    %v3002 = vmul.f32 %v2936, %v2974
    %v3003 = vmul.f32 %v2937, %v2974
    %v3004 = vmul.f32 %v2938, %v2974
    %v3005 = vmul.f32 %v2939, %v2974
    %v3006 = vmul.f32 %v2940, %v2974
    %v3007 = vmul.f32 %v2941, %v2974
    %v3008 = vmul.f32 %v2942, %v2974
    %v3009 = vmul.f32 %v2943, %v2974
    %v3010 = vmul.f32 %v2944, %v2974
    %v3011 = vmul.f32 %v2945, %v2974
    %v3012 = vmul.f32 %v2946, %v2974
    %v3013 = vmul.f32 %v2947, %v2974
    %v3014 = vmul.f32 %v2948, %v2974
    %v3015 = vmul.f32 %v2949, %v2974
    %v3016 = vmul.f32 %v2950, %v2974
    %v3017 = vmul.f32 %v2951, %v2974
    %v3018 = vmul.f32 %v2952, %v2974
    %v3019 = vmul.f32 %v2953, %v2974
    %v3020 = vmul.f32 %v2954, %v2974
    %v3021 = vmul.f32 %v2955, %v2974
    %v3022 = vmul.f32 %v2956, %v2974
    %v3023 = vmul.f32 %v2957, %v2974
    %v3024 = vmul.f32 %v2958, %v2974
    %v3025 = vmul.f32 %v2959, %v2974
    %v3026 = vmul.f32 %v2960, %v2974
    %v3027 = vmul.f32 %v2961, %v2974
    %v3028 = vmul.f32 %v2962, %v2974
    %v3029 = vmul.f32 %v2963, %v2974
    %v3030 = vmul.f32 %v2964, %v2974
    %v3031 = vmul.f32 %v2965, %v2974
    %v3032 = vmul.f32 %v2966, %v2974
    %v3033 = vmul.f32 %v2967, %v2974
    %v3034 = vmul.f32 %v2968, %v2974
    %v3035 = vmul.f32 %v2969, %v2974
    %v3036 = vmul.f32 %v2970, %v2974
    %v3037 = vmul.f32 %v2971, %v2974
    %v3038 = vmul.f32 %v2972, %v2974
    %v3039 = vmax.f32 %v2975, 0.0
    %v3040 = vmax.f32 %v2976, 0.0
    %v3041 = vmax.f32 %v2977, 0.0
    %v3042 = vmax.f32 %v2978, 0.0
    %v3043 = vmax.f32 %v2979, 0.0
    %v3044 = vmax.f32 %v2980, 0.0
    %v3045 = vmax.f32 %v2981, 0.0
    %v3046 = vmax.f32 %v2982, 0.0
    %v3047 = vmax.f32 %v2983, 0.0
    %v3048 = vmax.f32 %v2984, 0.0
    %v3049 = vmax.f32 %v2985, 0.0
    %v3050 = vmax.f32 %v2986, 0.0
    %v3051 = vmax.f32 %v2987, 0.0
    %v3052 = vmax.f32 %v2988, 0.0
    %v3053 = vmax.f32 %v2989, 0.0
    %v3054 = vmax.f32 %v2990, 0.0
    %v3055 = vmax.f32 %v2991, 0.0
    %v3056 = vmax.f32 %v2992, 0.0
    %v3057 = vmax.f32 %v2993, 0.0
    %v3058 = vmax.f32 %v2994, 0.0
    %v3059 = vmax.f32 %v2995, 0.0
    %v3060 = vmax.f32 %v2996, 0.0
    %v3061 = vmax.f32 %v2997, 0.0
    %v3062 = vmax.f32 %v2998, 0.0
    %v3063 = vmax.f32 %v2999, 0.0
    %v3064 = vmax.f32 %v3000, 0.0
    %v3065 = vmax.f32 %v3001, 0.0
    %v3066 = vmax.f32 %v3002, 0.0
    %v3067 = vmax.f32 %v3003, 0.0
    %v3068 = vmax.f32 %v3004, 0.0
    %v3069 = vmax.f32 %v3005, 0.0
    %v3070 = vmax.f32 %v3006, 0.0
    %v3071 = vmax.f32 %v3007, 0.0
    %v3072 = vmax.f32 %v3008, 0.0
    %v3073 = vmax.f32 %v3009, 0.0
    %v3074 = vmax.f32 %v3010, 0.0
    %v3075 = vmax.f32 %v3011, 0.0
    %v3076 = vmax.f32 %v3012, 0.0
    %v3077 = vmax.f32 %v3013, 0.0
    %v3078 = vmax.f32 %v3014, 0.0
    %v3079 = vmax.f32 %v3015, 0.0
    %v3080 = vmax.f32 %v3016, 0.0
    %v3081 = vmax.f32 %v3017, 0.0
    %v3082 = vmax.f32 %v3018, 0.0
    %v3083 = vmax.f32 %v3019, 0.0
    %v3084 = vmax.f32 %v3020, 0.0
    %v3085 = vmax.f32 %v3021, 0.0
    %v3086 = vmax.f32 %v3022, 0.0
    %v3087 = vmax.f32 %v3023, 0.0
    %v3088 = vmax.f32 %v3024, 0.0
    %v3089 = vmax.f32 %v3025, 0.0
    %v3090 = vmax.f32 %v3026, 0.0
    %v3091 = vmax.f32 %v3027, 0.0
    %v3092 = vmax.f32 %v3028, 0.0
    %v3093 = vmax.f32 %v3029, 0.0
    %v3094 = vmax.f32 %v3030, 0.0
    %v3095 = vmax.f32 %v3031, 0.0
    %v3096 = vmax.f32 %v3032, 0.0
    %v3097 = vmax.f32 %v3033, 0.0
    %v3098 = vmax.f32 %v3034, 0.0
    %v3099 = vmax.f32 %v3035, 0.0
    %v3100 = vmax.f32 %v3036, 0.0
    %v3101 = vmax.f32 %v3037, 0.0
    %v3102 = vmax.f32 %v3038, 0.0
    %v3103 = vlaneseq
    %v3104 = vshrl.u32 %v3103, 7
    %v3105 = vadd.s32 %v3104, 8
    %v3106 = vadd.s32 %v3104, 16
    %v3107 = vadd.s32 %v3104, 24
    %v3108 = vadd.s32 %v3104, 32
    %v3109 = vadd.s32 %v3104, 40
    %v3110 = vadd.s32 %v3104, 48
    %v3111 = vadd.s32 %v3104, 56
    %v3112 = vadd.s32 %v3104, 64
    %v3113 = vadd.s32 %v3104, 72
    %v3114 = vadd.s32 %v3104, 80
    %v3115 = vadd.s32 %v3104, 88
    %v3116 = vadd.s32 %v3104, 96
    %v3117 = vadd.s32 %v3104, 104
    %v3118 = vadd.s32 %v3104, 112
    %v3119 = vadd.s32 %v3104, 120
    %v3120 = vadd.s32 %v3104, 128
    %v3121 = vadd.s32 %v3104, 136
    %v3122 = vadd.s32 %v3104, 144
    %v3123 = vadd.s32 %v3104, 152
    %v3124 = vadd.s32 %v3104, 160
    %v3125 = vadd.s32 %v3104, 168
    %v3126 = vadd.s32 %v3104, 176
    %v3127 = vadd.s32 %v3104, 184
    %v3128 = vadd.s32 %v3104, 192
    %v3129 = vadd.s32 %v3104, 200
    %v3130 = vadd.s32 %v3104, 208
    %v3131 = vadd.s32 %v3104, 216
    %v3132 = vadd.s32 %v3104, 224
    %v3133 = vadd.s32 %v3104, 232
    %v3134 = vadd.s32 %v3104, 240
    %v3135 = vadd.s32 %v3104, 248
    %v3136 = vadd.s32 %v3104, 256
    %v3137 = vadd.s32 %v3104, 264
    %v3138 = vadd.s32 %v3104, 272
    %v3139 = vadd.s32 %v3104, 280
    %v3140 = vadd.s32 %v3104, 288
    %v3141 = vadd.s32 %v3104, 296
    %v3142 = vadd.s32 %v3104, 304
    %v3143 = vadd.s32 %v3104, 312
    %v3144 = vadd.s32 %v3104, 320
    %v3145 = vadd.s32 %v3104, 328
    %v3146 = vadd.s32 %v3104, 336
    %v3147 = vadd.s32 %v3104, 344
    %v3148 = vadd.s32 %v3104, 352
    %v3149 = vadd.s32 %v3104, 360
    %v3150 = vadd.s32 %v3104, 368
    %v3151 = vadd.s32 %v3104, 376
    %v3152 = vadd.s32 %v3104, 384
    %v3153 = vadd.s32 %v3104, 392
    %v3154 = vadd.s32 %v3104, 400
    %v3155 = vadd.s32 %v3104, 408
    %v3156 = vadd.s32 %v3104, 416
    %v3157 = vadd.s32 %v3104, 424
    %v3158 = vadd.s32 %v3104, 432
    %v3159 = vadd.s32 %v3104, 440
    %v3160 = vadd.s32 %v3104, 448
    %v3161 = vadd.s32 %v3104, 456
    %v3162 = vadd.s32 %v3104, 464
    %v3163 = vadd.s32 %v3104, 472
    %v3164 = vadd.s32 %v3104, 480
    %v3165 = vadd.s32 %v3104, 488
    %v3166 = vadd.s32 %v3104, 496
    %v3167 = vadd.s32 %v3104, 504
    %vm3168 = vcmp.lt.s32.totalorder %v3104, 500
    %vm3169 = vcmp.lt.s32.totalorder %v3105, 500
    %vm3170 = vcmp.lt.s32.totalorder %v3106, 500
    %vm3171 = vcmp.lt.s32.totalorder %v3107, 500
    %vm3172 = vcmp.lt.s32.totalorder %v3108, 500
    %vm3173 = vcmp.lt.s32.totalorder %v3109, 500
    %vm3174 = vcmp.lt.s32.totalorder %v3110, 500
    %vm3175 = vcmp.lt.s32.totalorder %v3111, 500
    %vm3176 = vcmp.lt.s32.totalorder %v3112, 500
    %vm3177 = vcmp.lt.s32.totalorder %v3113, 500
    %vm3178 = vcmp.lt.s32.totalorder %v3114, 500
    %vm3179 = vcmp.lt.s32.totalorder %v3115, 500
    %vm3180 = vcmp.lt.s32.totalorder %v3116, 500
    %vm3181 = vcmp.lt.s32.totalorder %v3117, 500
    %vm3182 = vcmp.lt.s32.totalorder %v3118, 500
    %vm3183 = vcmp.lt.s32.totalorder %v3119, 500
    %vm3184 = vcmp.lt.s32.totalorder %v3120, 500
    %vm3185 = vcmp.lt.s32.totalorder %v3121, 500
    %vm3186 = vcmp.lt.s32.totalorder %v3122, 500
    %vm3187 = vcmp.lt.s32.totalorder %v3123, 500
    %vm3188 = vcmp.lt.s32.totalorder %v3124, 500
    %vm3189 = vcmp.lt.s32.totalorder %v3125, 500
    %vm3190 = vcmp.lt.s32.totalorder %v3126, 500
    %vm3191 = vcmp.lt.s32.totalorder %v3127, 500
    %vm3192 = vcmp.lt.s32.totalorder %v3128, 500
    %vm3193 = vcmp.lt.s32.totalorder %v3129, 500
    %vm3194 = vcmp.lt.s32.totalorder %v3130, 500
    %vm3195 = vcmp.lt.s32.totalorder %v3131, 500
    %vm3196 = vcmp.lt.s32.totalorder %v3132, 500
    %vm3197 = vcmp.lt.s32.totalorder %v3133, 500
    %vm3198 = vcmp.lt.s32.totalorder %v3134, 500
    %vm3199 = vcmp.lt.s32.totalorder %v3135, 500
    %vm3200 = vcmp.lt.s32.totalorder %v3136, 500
    %vm3201 = vcmp.lt.s32.totalorder %v3137, 500
    %vm3202 = vcmp.lt.s32.totalorder %v3138, 500
    %vm3203 = vcmp.lt.s32.totalorder %v3139, 500
    %vm3204 = vcmp.lt.s32.totalorder %v3140, 500
    %vm3205 = vcmp.lt.s32.totalorder %v3141, 500
    %vm3206 = vcmp.lt.s32.totalorder %v3142, 500
    %vm3207 = vcmp.lt.s32.totalorder %v3143, 500
    %vm3208 = vcmp.lt.s32.totalorder %v3144, 500
    %vm3209 = vcmp.lt.s32.totalorder %v3145, 500
    %vm3210 = vcmp.lt.s32.totalorder %v3146, 500
    %vm3211 = vcmp.lt.s32.totalorder %v3147, 500
    %vm3212 = vcmp.lt.s32.totalorder %v3148, 500
    %vm3213 = vcmp.lt.s32.totalorder %v3149, 500
    %vm3214 = vcmp.lt.s32.totalorder %v3150, 500
    %vm3215 = vcmp.lt.s32.totalorder %v3151, 500
    %vm3216 = vcmp.lt.s32.totalorder %v3152, 500
    %vm3217 = vcmp.lt.s32.totalorder %v3153, 500
    %vm3218 = vcmp.lt.s32.totalorder %v3154, 500
    %vm3219 = vcmp.lt.s32.totalorder %v3155, 500
    %vm3220 = vcmp.lt.s32.totalorder %v3156, 500
    %vm3221 = vcmp.lt.s32.totalorder %v3157, 500
    %vm3222 = vcmp.lt.s32.totalorder %v3158, 500
    %vm3223 = vcmp.lt.s32.totalorder %v3159, 500
    %vm3224 = vcmp.lt.s32.totalorder %v3160, 500
    %vm3225 = vcmp.lt.s32.totalorder %v3161, 500
    %vm3226 = vcmp.lt.s32.totalorder %v3162, 500
    %vm3227 = vcmp.lt.s32.totalorder %v3163, 500
    %vm3228 = vcmp.lt.s32.totalorder %v3164, 500
    %vm3229 = vcmp.lt.s32.totalorder %v3165, 500
    %vm3230 = vcmp.lt.s32.totalorder %v3166, 500
    %vm3231 = vcmp.lt.s32.totalorder %v3167, 500
    %v3232 = vsel %vm3168, %v3039, 0.0
    %v3233 = vsel %vm3169, %v3040, 0.0
    %v3234 = vsel %vm3170, %v3041, 0.0
    %v3235 = vsel %vm3171, %v3042, 0.0
    %v3236 = vsel %vm3172, %v3043, 0.0
    %v3237 = vsel %vm3173, %v3044, 0.0
    %v3238 = vsel %vm3174, %v3045, 0.0
    %v3239 = vsel %vm3175, %v3046, 0.0
    %v3240 = vsel %vm3176, %v3047, 0.0
    %v3241 = vsel %vm3177, %v3048, 0.0
    %v3242 = vsel %vm3178, %v3049, 0.0
    %v3243 = vsel %vm3179, %v3050, 0.0
    %v3244 = vsel %vm3180, %v3051, 0.0
    %v3245 = vsel %vm3181, %v3052, 0.0
    %v3246 = vsel %vm3182, %v3053, 0.0
    %v3247 = vsel %vm3183, %v3054, 0.0
    %v3248 = vsel %vm3184, %v3055, 0.0
    %v3249 = vsel %vm3185, %v3056, 0.0
    %v3250 = vsel %vm3186, %v3057, 0.0
    %v3251 = vsel %vm3187, %v3058, 0.0
    %v3252 = vsel %vm3188, %v3059, 0.0
    %v3253 = vsel %vm3189, %v3060, 0.0
    %v3254 = vsel %vm3190, %v3061, 0.0
    %v3255 = vsel %vm3191, %v3062, 0.0
    %v3256 = vsel %vm3192, %v3063, 0.0
    %v3257 = vsel %vm3193, %v3064, 0.0
    %v3258 = vsel %vm3194, %v3065, 0.0
    %v3259 = vsel %vm3195, %v3066, 0.0
    %v3260 = vsel %vm3196, %v3067, 0.0
    %v3261 = vsel %vm3197, %v3068, 0.0
    %v3262 = vsel %vm3198, %v3069, 0.0
    %v3263 = vsel %vm3199, %v3070, 0.0
    %v3264 = vsel %vm3200, %v3071, 0.0
    %v3265 = vsel %vm3201, %v3072, 0.0
    %v3266 = vsel %vm3202, %v3073, 0.0
    %v3267 = vsel %vm3203, %v3074, 0.0
    %v3268 = vsel %vm3204, %v3075, 0.0
    %v3269 = vsel %vm3205, %v3076, 0.0
    %v3270 = vsel %vm3206, %v3077, 0.0
    %v3271 = vsel %vm3207, %v3078, 0.0
    %v3272 = vsel %vm3208, %v3079, 0.0
    %v3273 = vsel %vm3209, %v3080, 0.0
    %v3274 = vsel %vm3210, %v3081, 0.0
    %v3275 = vsel %vm3211, %v3082, 0.0
    %v3276 = vsel %vm3212, %v3083, 0.0
    %v3277 = vsel %vm3213, %v3084, 0.0
    %v3278 = vsel %vm3214, %v3085, 0.0
    %v3279 = vsel %vm3215, %v3086, 0.0
    %v3280 = vsel %vm3216, %v3087, 0.0
    %v3281 = vsel %vm3217, %v3088, 0.0
    %v3282 = vsel %vm3218, %v3089, 0.0
    %v3283 = vsel %vm3219, %v3090, 0.0
    %v3284 = vsel %vm3220, %v3091, 0.0
    %v3285 = vsel %vm3221, %v3092, 0.0
    %v3286 = vsel %vm3222, %v3093, 0.0
    %v3287 = vsel %vm3223, %v3094, 0.0
    %v3288 = vsel %vm3224, %v3095, 0.0
    %v3289 = vsel %vm3225, %v3096, 0.0
    %v3290 = vsel %vm3226, %v3097, 0.0
    %v3291 = vsel %vm3227, %v3098, 0.0
    %v3292 = vsel %vm3228, %v3099, 0.0
    %v3293 = vsel %vm3229, %v3100, 0.0
    %v3294 = vsel %vm3230, %v3101, 0.0
    %v3295 = vsel %vm3231, %v3102, 0.0
    %v3296 = vpack.c.bf16 %v3233, %v3232
    %v3297 = vpack.c.bf16 %v3235, %v3234
    %v3298 = vpack.c.bf16 %v3237, %v3236
    %v3299 = vpack.c.bf16 %v3239, %v3238
    %v3300 = vpack.c.bf16 %v3241, %v3240
    %v3301 = vpack.c.bf16 %v3243, %v3242
    %v3302 = vpack.c.bf16 %v3245, %v3244
    %v3303 = vpack.c.bf16 %v3247, %v3246
    %v3304 = vpack.c.bf16 %v3249, %v3248
    %v3305 = vpack.c.bf16 %v3251, %v3250
    %v3306 = vpack.c.bf16 %v3253, %v3252
    %v3307 = vpack.c.bf16 %v3255, %v3254
    %v3308 = vpack.c.bf16 %v3257, %v3256
    %v3309 = vpack.c.bf16 %v3259, %v3258
    %v3310 = vpack.c.bf16 %v3261, %v3260
    %v3311 = vpack.c.bf16 %v3263, %v3262
    %v3312 = vpack.c.bf16 %v3265, %v3264
    %v3313 = vpack.c.bf16 %v3267, %v3266
    %v3314 = vpack.c.bf16 %v3269, %v3268
    %v3315 = vpack.c.bf16 %v3271, %v3270
    %v3316 = vpack.c.bf16 %v3273, %v3272
    %v3317 = vpack.c.bf16 %v3275, %v3274
    %v3318 = vpack.c.bf16 %v3277, %v3276
    %v3319 = vpack.c.bf16 %v3279, %v3278
    %v3320 = vpack.c.bf16 %v3281, %v3280
    %v3321 = vpack.c.bf16 %v3283, %v3282
    %v3322 = vpack.c.bf16 %v3285, %v3284
    %v3323 = vpack.c.bf16 %v3287, %v3286
    %v3324 = vpack.c.bf16 %v3289, %v3288
    %v3325 = vpack.c.bf16 %v3291, %v3290
    %v3326 = vpack.c.bf16 %v3293, %v3292
    %v3327 = vpack.c.bf16 %v3295, %v3294
    %v3328 = vld [vmem:[#allocation8] sm:$0xf]
    %v3329 = vld [vmem:[#allocation8 + $0x4] sm:$0xf]
    %v3330 = vld [vmem:[#allocation8 + $0x8] sm:$0xf]
    %v3331 = vld [vmem:[#allocation8 + $0xc] sm:$0xf]
    %v3332 = vld [vmem:[#allocation8 + $0x10] sm:$0xf]
    %v3333 = vld [vmem:[#allocation8 + $0x14] sm:$0xf]
    %v3334 = vld [vmem:[#allocation8 + $0x18] sm:$0xf]
    %v3335 = vld [vmem:[#allocation8 + $0x1c] sm:$0xf]
    %v3336 = vld [vmem:[#allocation8 + $0x20] sm:$0xf]
    %v3337 = vld [vmem:[#allocation8 + $0x24] sm:$0xf]
    %v3338 = vld [vmem:[#allocation8 + $0x28] sm:$0xf]
    %v3339 = vld [vmem:[#allocation8 + $0x2c] sm:$0xf]
    %v3340 = vld [vmem:[#allocation8 + $0x30] sm:$0xf]
    %v3341 = vld [vmem:[#allocation8 + $0x34] sm:$0xf]
    %v3342 = vld [vmem:[#allocation8 + $0x38] sm:$0xf]
    %v3343 = vld [vmem:[#allocation8 + $0x3c] sm:$0xf]
    %v3360 = vunpack.c.l.b16 %v3328
    %v3361 = vunpack.c.l.b16 %v3329
    %v3362 = vunpack.c.l.b16 %v3330
    %v3363 = vunpack.c.l.b16 %v3331
    %v3364 = vunpack.c.l.b16 %v3332
    %v3365 = vunpack.c.l.b16 %v3333
    %v3366 = vunpack.c.l.b16 %v3334
    %v3367 = vunpack.c.l.b16 %v3335
    %v3368 = vunpack.c.l.b16 %v3336
    %v3369 = vunpack.c.l.b16 %v3337
    %v3370 = vunpack.c.l.b16 %v3338
    %v3371 = vunpack.c.l.b16 %v3339
    %v3372 = vunpack.c.l.b16 %v3340
    %v3373 = vunpack.c.l.b16 %v3341
    %v3374 = vunpack.c.l.b16 %v3342
    %v3375 = vunpack.c.l.b16 %v3343
    %v3376 = vpack.c.b16 %v3361, %v3360
    %v3377 = vpack.c.b16 %v3363, %v3362
    %v3378 = vpack.c.b16 %v3365, %v3364
    %v3379 = vpack.c.b16 %v3367, %v3366
    %v3380 = vpack.c.b16 %v3369, %v3368
    %v3381 = vpack.c.b16 %v3371, %v3370
    %v3382 = vpack.c.b16 %v3373, %v3372
    %v3383 = vpack.c.b16 %v3375, %v3374
    %3392 = vmatprep.subr.bf16.mxu0 0
    %3393 = vmatpush1.bf16.msra.mxu0 %v3376
    %3394 = vmatprep.subr.bf16.mxu0 0
    %3395 = vmatpush1.bf16.msra.mxu0 %v3377
    %3396 = vmatprep.subr.bf16.mxu0 0
    %3397 = vmatpush1.bf16.msra.mxu0 %v3378
    %3398 = vmatprep.subr.bf16.mxu0 0
    %3399 = vmatpush1.bf16.msra.mxu0 %v3379
    %3400 = vmatprep.subr.bf16.mxu0 0
    %3401 = vmatpush1.bf16.msra.mxu0 %v3380
    %3402 = vmatprep.subr.bf16.mxu0 0
    %3403 = vmatpush1.bf16.msra.mxu0 %v3381
    %3404 = vmatprep.subr.bf16.mxu0 0
    %3405 = vmatpush1.bf16.msra.mxu0 %v3382
    %3406 = vmatprep.subr.bf16.mxu0 0
    %3407 = vmatpush1.bf16.msra.mxu0 %v3383
    %3408 = vmatprep.subr.bf16.mxu0 0
    %3409 = vmatpush1.bf16.msra.mxu0 0
    %3410 = vmatprep.subr.bf16.mxu0 0
    %3411 = vmatpush1.bf16.msra.mxu0 0
    %3412 = vmatprep.subr.bf16.mxu0 0
    %3413 = vmatpush1.bf16.msra.mxu0 0
    %3414 = vmatprep.subr.bf16.mxu0 0
    %3415 = vmatpush1.bf16.msra.mxu0 0
    %3416 = vmatprep.subr.bf16.mxu0 0
    %3417 = vmatpush1.bf16.msra.mxu0 0
    %3418 = vmatprep.subr.bf16.mxu0 0
    %3419 = vmatpush1.bf16.msra.mxu0 0
    %3420 = vmatprep.subr.bf16.mxu0 0
    %3421 = vmatpush1.bf16.msra.mxu0 0
    %3422 = vmatprep.subr.bf16.mxu0 0
    %3423 = vmatpush1.bf16.msra.mxu0 0
    %3424 = vmatprep.mubr.bf16.mxu0 0
    %3425 = vmatmul.mubr.bf16.gmra.mrb[0].mxu0 %v3296
    %v3426 = vpop.f32.mrb[0].mxu0
    %v3427 = vadd.f32 0.0, %v3426
    %v3428 = vpop.f32.mrb[0].mxu0
    %v3429 = vpop.f32.mrb[0].mxu0
    %v3430 = vadd.f32 0.0, %v3429
    %v3431 = vpop.f32.mrb[0].mxu0
    %3432 = vmatprep.mubr.bf16.mxu0 0
    %3433 = vmatmul.mubr.bf16.gmra.mrb[0].mxu0 %v3297
    %v3434 = vpop.f32.mrb[0].mxu0
    %v3435 = vadd.f32 0.0, %v3434
    %v3436 = vpop.f32.mrb[0].mxu0
    %v3437 = vpop.f32.mrb[0].mxu0
    %v3438 = vadd.f32 0.0, %v3437
    %v3439 = vpop.f32.mrb[0].mxu0
    %3440 = vmatprep.mubr.bf16.mxu0 0
    %3441 = vmatmul.mubr.bf16.gmra.mrb[0].mxu0 %v3298
    %v3442 = vpop.f32.mrb[0].mxu0
    %v3443 = vadd.f32 0.0, %v3442
    %v3444 = vpop.f32.mrb[0].mxu0
    %v3445 = vpop.f32.mrb[0].mxu0
    %v3446 = vadd.f32 0.0, %v3445
    %v3447 = vpop.f32.mrb[0].mxu0
    %3448 = vmatprep.mubr.bf16.mxu0 0
    %3449 = vmatmul.mubr.bf16.gmra.mrb[0].mxu0 %v3299
    %v3450 = vpop.f32.mrb[0].mxu0
    %v3451 = vadd.f32 0.0, %v3450
    %v3452 = vpop.f32.mrb[0].mxu0
    %v3453 = vpop.f32.mrb[0].mxu0
    %v3454 = vadd.f32 0.0, %v3453
    %v3455 = vpop.f32.mrb[0].mxu0
    %3456 = vmatprep.mubr.bf16.mxu0 0
    %3457 = vmatmul.mubr.bf16.gmra.mrb[0].mxu0 %v3300
    %v3458 = vpop.f32.mrb[0].mxu0
    %v3459 = vadd.f32 0.0, %v3458
    %v3460 = vpop.f32.mrb[0].mxu0
    %v3461 = vpop.f32.mrb[0].mxu0
    %v3462 = vadd.f32 0.0, %v3461
    %v3463 = vpop.f32.mrb[0].mxu0
    %3464 = vmatprep.mubr.bf16.mxu0 0
    %3465 = vmatmul.mubr.bf16.gmra.mrb[0].mxu0 %v3301
    %v3466 = vpop.f32.mrb[0].mxu0
    %v3467 = vadd.f32 0.0, %v3466
    %v3468 = vpop.f32.mrb[0].mxu0
    %v3469 = vpop.f32.mrb[0].mxu0
    %v3470 = vadd.f32 0.0, %v3469
    %v3471 = vpop.f32.mrb[0].mxu0
    %3472 = vmatprep.mubr.bf16.mxu0 0
    %3473 = vmatmul.mubr.bf16.gmra.mrb[0].mxu0 %v3302
    %v3474 = vpop.f32.mrb[0].mxu0
    %v3475 = vadd.f32 0.0, %v3474
    %v3476 = vpop.f32.mrb[0].mxu0
    %v3477 = vpop.f32.mrb[0].mxu0
    %v3478 = vadd.f32 0.0, %v3477
    %v3479 = vpop.f32.mrb[0].mxu0
    %3480 = vmatprep.mubr.bf16.mxu0 0
    %3481 = vmatmul.mubr.bf16.gmra.mrb[0].mxu0 %v3303
    %v3482 = vpop.f32.mrb[0].mxu0
    %v3483 = vadd.f32 0.0, %v3482
    %v3484 = vpop.f32.mrb[0].mxu0
    %v3485 = vpop.f32.mrb[0].mxu0
    %v3486 = vadd.f32 0.0, %v3485
    %v3487 = vpop.f32.mrb[0].mxu0
    %3488 = vmatprep.mubr.bf16.mxu0 0
    %3489 = vmatmul.mubr.bf16.gmra.mrb[0].mxu0 %v3304
    %v3490 = vpop.f32.mrb[0].mxu0
    %v3491 = vadd.f32 0.0, %v3490
    %v3492 = vpop.f32.mrb[0].mxu0
    %v3493 = vpop.f32.mrb[0].mxu0
    %v3494 = vadd.f32 0.0, %v3493
    %v3495 = vpop.f32.mrb[0].mxu0
    %3496 = vmatprep.mubr.bf16.mxu0 0
    %3497 = vmatmul.mubr.bf16.gmra.mrb[0].mxu0 %v3305
    %v3498 = vpop.f32.mrb[0].mxu0
    %v3499 = vadd.f32 0.0, %v3498
    %v3500 = vpop.f32.mrb[0].mxu0
    %v3501 = vpop.f32.mrb[0].mxu0
    %v3502 = vadd.f32 0.0, %v3501
    %v3503 = vpop.f32.mrb[0].mxu0
    %3504 = vmatprep.mubr.bf16.mxu0 0
    %3505 = vmatmul.mubr.bf16.gmra.mrb[0].mxu0 %v3306
    %v3506 = vpop.f32.mrb[0].mxu0
    %v3507 = vadd.f32 0.0, %v3506
    %v3508 = vpop.f32.mrb[0].mxu0
    %v3509 = vpop.f32.mrb[0].mxu0
    %v3510 = vadd.f32 0.0, %v3509
    %v3511 = vpop.f32.mrb[0].mxu0
    %3512 = vmatprep.mubr.bf16.mxu0 0
    %3513 = vmatmul.mubr.bf16.gmra.mrb[0].mxu0 %v3307
    %v3514 = vpop.f32.mrb[0].mxu0
    %v3515 = vadd.f32 0.0, %v3514
    %v3516 = vpop.f32.mrb[0].mxu0
    %v3517 = vpop.f32.mrb[0].mxu0
    %v3518 = vadd.f32 0.0, %v3517
    %v3519 = vpop.f32.mrb[0].mxu0
    %3520 = vmatprep.mubr.bf16.mxu0 0
    %3521 = vmatmul.mubr.bf16.gmra.mrb[0].mxu0 %v3308
    %v3522 = vpop.f32.mrb[0].mxu0
    %v3523 = vadd.f32 0.0, %v3522
    %v3524 = vpop.f32.mrb[0].mxu0
    %v3525 = vpop.f32.mrb[0].mxu0
    %v3526 = vadd.f32 0.0, %v3525
    %v3527 = vpop.f32.mrb[0].mxu0
    %3528 = vmatprep.mubr.bf16.mxu0 0
    %3529 = vmatmul.mubr.bf16.gmra.mrb[0].mxu0 %v3309
    %v3530 = vpop.f32.mrb[0].mxu0
    %v3531 = vadd.f32 0.0, %v3530
    %v3532 = vpop.f32.mrb[0].mxu0
    %v3533 = vpop.f32.mrb[0].mxu0
    %v3534 = vadd.f32 0.0, %v3533
    %v3535 = vpop.f32.mrb[0].mxu0
    %3536 = vmatprep.mubr.bf16.mxu0 0
    %3537 = vmatmul.mubr.bf16.gmra.mrb[0].mxu0 %v3310
    %v3538 = vpop.f32.mrb[0].mxu0
    %v3539 = vadd.f32 0.0, %v3538
    %v3540 = vpop.f32.mrb[0].mxu0
    %v3541 = vpop.f32.mrb[0].mxu0
    %v3542 = vadd.f32 0.0, %v3541
    %v3543 = vpop.f32.mrb[0].mxu0
    %3544 = vmatprep.mubr.bf16.mxu0 0
    %3545 = vmatmul.mubr.bf16.gmra.mrb[0].mxu0 %v3311
    %v3546 = vpop.f32.mrb[0].mxu0
    %v3547 = vadd.f32 0.0, %v3546
    %v3548 = vpop.f32.mrb[0].mxu0
    %v3549 = vpop.f32.mrb[0].mxu0
    %v3550 = vadd.f32 0.0, %v3549
    %v3551 = vpop.f32.mrb[0].mxu0
    %3552 = vmatprep.mubr.bf16.mxu0 0
    %3553 = vmatmul.mubr.bf16.gmra.mrb[0].mxu0 %v3312
    %v3554 = vpop.f32.mrb[0].mxu0
    %v3555 = vadd.f32 0.0, %v3554
    %v3556 = vpop.f32.mrb[0].mxu0
    %v3557 = vpop.f32.mrb[0].mxu0
    %v3558 = vadd.f32 0.0, %v3557
    %v3559 = vpop.f32.mrb[0].mxu0
    %3560 = vmatprep.mubr.bf16.mxu0 0
    %3561 = vmatmul.mubr.bf16.gmra.mrb[0].mxu0 %v3313
    %v3562 = vpop.f32.mrb[0].mxu0
    %v3563 = vadd.f32 0.0, %v3562
    %v3564 = vpop.f32.mrb[0].mxu0
    %v3565 = vpop.f32.mrb[0].mxu0
    %v3566 = vadd.f32 0.0, %v3565
    %v3567 = vpop.f32.mrb[0].mxu0
    %3568 = vmatprep.mubr.bf16.mxu0 0
    %3569 = vmatmul.mubr.bf16.gmra.mrb[0].mxu0 %v3314
    %v3570 = vpop.f32.mrb[0].mxu0
    %v3571 = vadd.f32 0.0, %v3570
    %v3572 = vpop.f32.mrb[0].mxu0
    %v3573 = vpop.f32.mrb[0].mxu0
    %v3574 = vadd.f32 0.0, %v3573
    %v3575 = vpop.f32.mrb[0].mxu0
    %3576 = vmatprep.mubr.bf16.mxu0 0
    %3577 = vmatmul.mubr.bf16.gmra.mrb[0].mxu0 %v3315
    %v3578 = vpop.f32.mrb[0].mxu0
    %v3579 = vadd.f32 0.0, %v3578
    %v3580 = vpop.f32.mrb[0].mxu0
    %v3581 = vpop.f32.mrb[0].mxu0
    %v3582 = vadd.f32 0.0, %v3581
    %v3583 = vpop.f32.mrb[0].mxu0
    %3584 = vmatprep.mubr.bf16.mxu0 0
    %3585 = vmatmul.mubr.bf16.gmra.mrb[0].mxu0 %v3316
    %v3586 = vpop.f32.mrb[0].mxu0
    %v3587 = vadd.f32 0.0, %v3586
    %v3588 = vpop.f32.mrb[0].mxu0
    %v3589 = vpop.f32.mrb[0].mxu0
    %v3590 = vadd.f32 0.0, %v3589
    %v3591 = vpop.f32.mrb[0].mxu0
    %3592 = vmatprep.mubr.bf16.mxu0 0
    %3593 = vmatmul.mubr.bf16.gmra.mrb[0].mxu0 %v3317
    %v3594 = vpop.f32.mrb[0].mxu0
    %v3595 = vadd.f32 0.0, %v3594
    %v3596 = vpop.f32.mrb[0].mxu0
    %v3597 = vpop.f32.mrb[0].mxu0
    %v3598 = vadd.f32 0.0, %v3597
    %v3599 = vpop.f32.mrb[0].mxu0
    %3600 = vmatprep.mubr.bf16.mxu0 0
    %3601 = vmatmul.mubr.bf16.gmra.mrb[0].mxu0 %v3318
    %v3602 = vpop.f32.mrb[0].mxu0
    %v3603 = vadd.f32 0.0, %v3602
    %v3604 = vpop.f32.mrb[0].mxu0
    %v3605 = vpop.f32.mrb[0].mxu0
    %v3606 = vadd.f32 0.0, %v3605
    %v3607 = vpop.f32.mrb[0].mxu0
    %3608 = vmatprep.mubr.bf16.mxu0 0
    %3609 = vmatmul.mubr.bf16.gmra.mrb[0].mxu0 %v3319
    %v3610 = vpop.f32.mrb[0].mxu0
    %v3611 = vadd.f32 0.0, %v3610
    %v3612 = vpop.f32.mrb[0].mxu0
    %v3613 = vpop.f32.mrb[0].mxu0
    %v3614 = vadd.f32 0.0, %v3613
    %v3615 = vpop.f32.mrb[0].mxu0
    %3616 = vmatprep.mubr.bf16.mxu0 0
    %3617 = vmatmul.mubr.bf16.gmra.mrb[0].mxu0 %v3320
    %v3618 = vpop.f32.mrb[0].mxu0
    %v3619 = vadd.f32 0.0, %v3618
    %v3620 = vpop.f32.mrb[0].mxu0
    %v3621 = vpop.f32.mrb[0].mxu0
    %v3622 = vadd.f32 0.0, %v3621
    %v3623 = vpop.f32.mrb[0].mxu0
    %3624 = vmatprep.mubr.bf16.mxu0 0
    %3625 = vmatmul.mubr.bf16.gmra.mrb[0].mxu0 %v3321
    %v3626 = vpop.f32.mrb[0].mxu0
    %v3627 = vadd.f32 0.0, %v3626
    %v3628 = vpop.f32.mrb[0].mxu0
    %v3629 = vpop.f32.mrb[0].mxu0
    %v3630 = vadd.f32 0.0, %v3629
    %v3631 = vpop.f32.mrb[0].mxu0
    %3632 = vmatprep.mubr.bf16.mxu0 0
    %3633 = vmatmul.mubr.bf16.gmra.mrb[0].mxu0 %v3322
    %v3634 = vpop.f32.mrb[0].mxu0
    %v3635 = vadd.f32 0.0, %v3634
    %v3636 = vpop.f32.mrb[0].mxu0
    %v3637 = vpop.f32.mrb[0].mxu0
    %v3638 = vadd.f32 0.0, %v3637
    %v3639 = vpop.f32.mrb[0].mxu0
    %3640 = vmatprep.mubr.bf16.mxu0 0
    %3641 = vmatmul.mubr.bf16.gmra.mrb[0].mxu0 %v3323
    %v3642 = vpop.f32.mrb[0].mxu0
    %v3643 = vadd.f32 0.0, %v3642
    %v3644 = vpop.f32.mrb[0].mxu0
    %v3645 = vpop.f32.mrb[0].mxu0
    %v3646 = vadd.f32 0.0, %v3645
    %v3647 = vpop.f32.mrb[0].mxu0
    %3648 = vmatprep.mubr.bf16.mxu0 0
    %3649 = vmatmul.mubr.bf16.gmra.mrb[0].mxu0 %v3324
    %v3650 = vpop.f32.mrb[0].mxu0
    %v3651 = vadd.f32 0.0, %v3650
    %v3652 = vpop.f32.mrb[0].mxu0
    %v3653 = vpop.f32.mrb[0].mxu0
    %v3654 = vadd.f32 0.0, %v3653
    %v3655 = vpop.f32.mrb[0].mxu0
    %3656 = vmatprep.mubr.bf16.mxu0 0
    %3657 = vmatmul.mubr.bf16.gmra.mrb[0].mxu0 %v3325
    %v3658 = vpop.f32.mrb[0].mxu0
    %v3659 = vadd.f32 0.0, %v3658
    %v3660 = vpop.f32.mrb[0].mxu0
    %v3661 = vpop.f32.mrb[0].mxu0
    %v3662 = vadd.f32 0.0, %v3661
    %v3663 = vpop.f32.mrb[0].mxu0
    %3664 = vmatprep.mubr.bf16.mxu0 0
    %3665 = vmatmul.mubr.bf16.gmra.mrb[0].mxu0 %v3326
    %v3666 = vpop.f32.mrb[0].mxu0
    %v3667 = vadd.f32 0.0, %v3666
    %v3668 = vpop.f32.mrb[0].mxu0
    %v3669 = vpop.f32.mrb[0].mxu0
    %v3670 = vadd.f32 0.0, %v3669
    %v3671 = vpop.f32.mrb[0].mxu0
    %3672 = vmatprep.mubr.bf16.mxu0 0
    %3673 = vmatmul.mubr.bf16.gmra.mrb[0].mxu0 %v3327
    %v3674 = vpop.f32.mrb[0].mxu0
    %v3675 = vadd.f32 0.0, %v3674
    %v3676 = vpop.f32.mrb[0].mxu0
    %v3677 = vpop.f32.mrb[0].mxu0
    %v3678 = vadd.f32 0.0, %v3677
    %v3679 = vpop.f32.mrb[0].mxu0
    %3680 = vdwg.mxu0
    %v3681 = vadd.f32 %v3427, %v3430
    %v3682 = vadd.f32 %v3681, %v3435
    %v3683 = vadd.f32 %v3682, %v3438
    %v3684 = vadd.f32 %v3683, %v3443
    %v3685 = vadd.f32 %v3684, %v3446
    %v3686 = vadd.f32 %v3685, %v3451
    %v3687 = vadd.f32 %v3686, %v3454
    %v3688 = vadd.f32 %v3687, %v3459
    %v3689 = vadd.f32 %v3688, %v3462
    %v3690 = vadd.f32 %v3689, %v3467
    %v3691 = vadd.f32 %v3690, %v3470
    %v3692 = vadd.f32 %v3691, %v3475
    %v3693 = vadd.f32 %v3692, %v3478
    %v3694 = vadd.f32 %v3693, %v3483
    %v3695 = vadd.f32 %v3694, %v3486
    %v3696 = vadd.f32 %v3695, %v3491
    %v3697 = vadd.f32 %v3696, %v3494
    %v3698 = vadd.f32 %v3697, %v3499
    %v3699 = vadd.f32 %v3698, %v3502
    %v3700 = vadd.f32 %v3699, %v3507
    %v3701 = vadd.f32 %v3700, %v3510
    %v3702 = vadd.f32 %v3701, %v3515
    %v3703 = vadd.f32 %v3702, %v3518
    %v3704 = vadd.f32 %v3703, %v3523
    %v3705 = vadd.f32 %v3704, %v3526
    %v3706 = vadd.f32 %v3705, %v3531
    %v3707 = vadd.f32 %v3706, %v3534
    %v3708 = vadd.f32 %v3707, %v3539
    %v3709 = vadd.f32 %v3708, %v3542
    %v3710 = vadd.f32 %v3709, %v3547
    %v3711 = vadd.f32 %v3710, %v3550
    %v3712 = vadd.f32 %v3711, %v3555
    %v3713 = vadd.f32 %v3712, %v3558
    %v3714 = vadd.f32 %v3713, %v3563
    %v3715 = vadd.f32 %v3714, %v3566
    %v3716 = vadd.f32 %v3715, %v3571
    %v3717 = vadd.f32 %v3716, %v3574
    %v3718 = vadd.f32 %v3717, %v3579
    %v3719 = vadd.f32 %v3718, %v3582
    %v3720 = vadd.f32 %v3719, %v3587
    %v3721 = vadd.f32 %v3720, %v3590
    %v3722 = vadd.f32 %v3721, %v3595
    %v3723 = vadd.f32 %v3722, %v3598
    %v3724 = vadd.f32 %v3723, %v3603
    %v3725 = vadd.f32 %v3724, %v3606
    %v3726 = vadd.f32 %v3725, %v3611
    %v3727 = vadd.f32 %v3726, %v3614
    %v3728 = vadd.f32 %v3727, %v3619
    %v3729 = vadd.f32 %v3728, %v3622
    %v3730 = vadd.f32 %v3729, %v3627
    %v3731 = vadd.f32 %v3730, %v3630
    %v3732 = vadd.f32 %v3731, %v3635
    %v3733 = vadd.f32 %v3732, %v3638
    %v3734 = vadd.f32 %v3733, %v3643
    %v3735 = vadd.f32 %v3734, %v3646
    %v3736 = vadd.f32 %v3735, %v3651
    %v3737 = vadd.f32 %v3736, %v3654
    %v3738 = vadd.f32 %v3737, %v3659
    %v3739 = vadd.f32 %v3738, %v3662
    %v3740 = vadd.f32 %v3739, %v3667
    %v3741 = vadd.f32 %v3740, %v3670
    %v3742 = vadd.f32 %v3741, %v3675
    %v3743 = vadd.f32 %v3742, %v3678
    %v3744 = vrot.slane %v3743, 4
    %v3745 = vadd.f32 %v3743, %v3744
    %v3746 = vrot.slane %v3745, 2
    %v3747 = vadd.f32 %v3745, %v3746
    %v3748 = vrot.slane %v3747, 1
    %v3749 = vadd.f32 %v3747, %v3748
    %v3750 = vmul.f32 %v3749, 0.002
    %v3751 = vmul.f32 %v3427, %v3427
    %v3752 = vmul.f32 %v3430, %v3430
    %v3753 = vmul.f32 %v3435, %v3435
    %v3754 = vmul.f32 %v3438, %v3438
    %v3755 = vmul.f32 %v3443, %v3443
    %v3756 = vmul.f32 %v3446, %v3446
    %v3757 = vmul.f32 %v3451, %v3451
    %v3758 = vmul.f32 %v3454, %v3454
    %v3759 = vmul.f32 %v3459, %v3459
    %v3760 = vmul.f32 %v3462, %v3462
    %v3761 = vmul.f32 %v3467, %v3467
    %v3762 = vmul.f32 %v3470, %v3470
    %v3763 = vmul.f32 %v3475, %v3475
    %v3764 = vmul.f32 %v3478, %v3478
    %v3765 = vmul.f32 %v3483, %v3483
    %v3766 = vmul.f32 %v3486, %v3486
    %v3767 = vmul.f32 %v3491, %v3491
    %v3768 = vmul.f32 %v3494, %v3494
    %v3769 = vmul.f32 %v3499, %v3499
    %v3770 = vmul.f32 %v3502, %v3502
    %v3771 = vmul.f32 %v3507, %v3507
    %v3772 = vmul.f32 %v3510, %v3510
    %v3773 = vmul.f32 %v3515, %v3515
    %v3774 = vmul.f32 %v3518, %v3518
    %v3775 = vmul.f32 %v3523, %v3523
    %v3776 = vmul.f32 %v3526, %v3526
    %v3777 = vmul.f32 %v3531, %v3531
    %v3778 = vmul.f32 %v3534, %v3534
    %v3779 = vmul.f32 %v3539, %v3539
    %v3780 = vmul.f32 %v3542, %v3542
    %v3781 = vmul.f32 %v3547, %v3547
    %v3782 = vmul.f32 %v3550, %v3550
    %v3783 = vmul.f32 %v3555, %v3555
    %v3784 = vmul.f32 %v3558, %v3558
    %v3785 = vmul.f32 %v3563, %v3563
    %v3786 = vmul.f32 %v3566, %v3566
    %v3787 = vmul.f32 %v3571, %v3571
    %v3788 = vmul.f32 %v3574, %v3574
    %v3789 = vmul.f32 %v3579, %v3579
    %v3790 = vmul.f32 %v3582, %v3582
    %v3791 = vmul.f32 %v3587, %v3587
    %v3792 = vmul.f32 %v3590, %v3590
    %v3793 = vmul.f32 %v3595, %v3595
    %v3794 = vmul.f32 %v3598, %v3598
    %v3795 = vmul.f32 %v3603, %v3603
    %v3796 = vmul.f32 %v3606, %v3606
    %v3797 = vmul.f32 %v3611, %v3611
    %v3798 = vmul.f32 %v3614, %v3614
    %v3799 = vmul.f32 %v3619, %v3619
    %v3800 = vmul.f32 %v3622, %v3622
    %v3801 = vmul.f32 %v3627, %v3627
    %v3802 = vmul.f32 %v3630, %v3630
    %v3803 = vmul.f32 %v3635, %v3635
    %v3804 = vmul.f32 %v3638, %v3638
    %v3805 = vmul.f32 %v3643, %v3643
    %v3806 = vmul.f32 %v3646, %v3646
    %v3807 = vmul.f32 %v3651, %v3651
    %v3808 = vmul.f32 %v3654, %v3654
    %v3809 = vmul.f32 %v3659, %v3659
    %v3810 = vmul.f32 %v3662, %v3662
    %v3811 = vmul.f32 %v3667, %v3667
    %v3812 = vmul.f32 %v3670, %v3670
    %v3813 = vmul.f32 %v3675, %v3675
    %v3814 = vmul.f32 %v3678, %v3678
    %v3815 = vadd.f32 %v3751, %v3752
    %v3816 = vadd.f32 %v3815, %v3753
    %v3817 = vadd.f32 %v3816, %v3754
    %v3818 = vadd.f32 %v3817, %v3755
    %v3819 = vadd.f32 %v3818, %v3756
    %v3820 = vadd.f32 %v3819, %v3757
    %v3821 = vadd.f32 %v3820, %v3758
    %v3822 = vadd.f32 %v3821, %v3759
    %v3823 = vadd.f32 %v3822, %v3760
    %v3824 = vadd.f32 %v3823, %v3761
    %v3825 = vadd.f32 %v3824, %v3762
    %v3826 = vadd.f32 %v3825, %v3763
    %v3827 = vadd.f32 %v3826, %v3764
    %v3828 = vadd.f32 %v3827, %v3765
    %v3829 = vadd.f32 %v3828, %v3766
    %v3830 = vadd.f32 %v3829, %v3767
    %v3831 = vadd.f32 %v3830, %v3768
    %v3832 = vadd.f32 %v3831, %v3769
    %v3833 = vadd.f32 %v3832, %v3770
    %v3834 = vadd.f32 %v3833, %v3771
    %v3835 = vadd.f32 %v3834, %v3772
    %v3836 = vadd.f32 %v3835, %v3773
    %v3837 = vadd.f32 %v3836, %v3774
    %v3838 = vadd.f32 %v3837, %v3775
    %v3839 = vadd.f32 %v3838, %v3776
    %v3840 = vadd.f32 %v3839, %v3777
    %v3841 = vadd.f32 %v3840, %v3778
    %v3842 = vadd.f32 %v3841, %v3779
    %v3843 = vadd.f32 %v3842, %v3780
    %v3844 = vadd.f32 %v3843, %v3781
    %v3845 = vadd.f32 %v3844, %v3782
    %v3846 = vadd.f32 %v3845, %v3783
    %v3847 = vadd.f32 %v3846, %v3784
    %v3848 = vadd.f32 %v3847, %v3785
    %v3849 = vadd.f32 %v3848, %v3786
    %v3850 = vadd.f32 %v3849, %v3787
    %v3851 = vadd.f32 %v3850, %v3788
    %v3852 = vadd.f32 %v3851, %v3789
    %v3853 = vadd.f32 %v3852, %v3790
    %v3854 = vadd.f32 %v3853, %v3791
    %v3855 = vadd.f32 %v3854, %v3792
    %v3856 = vadd.f32 %v3855, %v3793
    %v3857 = vadd.f32 %v3856, %v3794
    %v3858 = vadd.f32 %v3857, %v3795
    %v3859 = vadd.f32 %v3858, %v3796
    %v3860 = vadd.f32 %v3859, %v3797
    %v3861 = vadd.f32 %v3860, %v3798
    %v3862 = vadd.f32 %v3861, %v3799
    %v3863 = vadd.f32 %v3862, %v3800
    %v3864 = vadd.f32 %v3863, %v3801
    %v3865 = vadd.f32 %v3864, %v3802
    %v3866 = vadd.f32 %v3865, %v3803
    %v3867 = vadd.f32 %v3866, %v3804
    %v3868 = vadd.f32 %v3867, %v3805
    %v3869 = vadd.f32 %v3868, %v3806
    %v3870 = vadd.f32 %v3869, %v3807
    %v3871 = vadd.f32 %v3870, %v3808
    %v3872 = vadd.f32 %v3871, %v3809
    %v3873 = vadd.f32 %v3872, %v3810
    %v3874 = vadd.f32 %v3873, %v3811
    %v3875 = vadd.f32 %v3874, %v3812
    %v3876 = vadd.f32 %v3875, %v3813
    %v3877 = vadd.f32 %v3876, %v3814
    %v3878 = vrot.slane %v3877, 4
    %v3879 = vadd.f32 %v3877, %v3878
    %v3880 = vrot.slane %v3879, 2
    %v3881 = vadd.f32 %v3879, %v3880
    %v3882 = vrot.slane %v3881, 1
    %v3883 = vadd.f32 %v3881, %v3882
    %v3884 = vmul.f32 %v3883, 0.002
    %v3885 = vmul.f32 %v3750, %v3750
    %v3886 = vsub.f32 %v3884, %v3885
    %v3887 = vmax.f32 %v3886, 0.0
    %v3888 = vsub.f32 %v3427, %v3750
    %v3889 = vsub.f32 %v3430, %v3750
    %v3890 = vsub.f32 %v3435, %v3750
    %v3891 = vsub.f32 %v3438, %v3750
    %v3892 = vsub.f32 %v3443, %v3750
    %v3893 = vsub.f32 %v3446, %v3750
    %v3894 = vsub.f32 %v3451, %v3750
    %v3895 = vsub.f32 %v3454, %v3750
    %v3896 = vsub.f32 %v3459, %v3750
    %v3897 = vsub.f32 %v3462, %v3750
    %v3898 = vsub.f32 %v3467, %v3750
    %v3899 = vsub.f32 %v3470, %v3750
    %v3900 = vsub.f32 %v3475, %v3750
    %v3901 = vsub.f32 %v3478, %v3750
    %v3902 = vsub.f32 %v3483, %v3750
    %v3903 = vsub.f32 %v3486, %v3750
    %v3904 = vsub.f32 %v3491, %v3750
    %v3905 = vsub.f32 %v3494, %v3750
    %v3906 = vsub.f32 %v3499, %v3750
    %v3907 = vsub.f32 %v3502, %v3750
    %v3908 = vsub.f32 %v3507, %v3750
    %v3909 = vsub.f32 %v3510, %v3750
    %v3910 = vsub.f32 %v3515, %v3750
    %v3911 = vsub.f32 %v3518, %v3750
    %v3912 = vsub.f32 %v3523, %v3750
    %v3913 = vsub.f32 %v3526, %v3750
    %v3914 = vsub.f32 %v3531, %v3750
    %v3915 = vsub.f32 %v3534, %v3750
    %v3916 = vsub.f32 %v3539, %v3750
    %v3917 = vsub.f32 %v3542, %v3750
    %v3918 = vsub.f32 %v3547, %v3750
    %v3919 = vsub.f32 %v3550, %v3750
    %v3920 = vsub.f32 %v3555, %v3750
    %v3921 = vsub.f32 %v3558, %v3750
    %v3922 = vsub.f32 %v3563, %v3750
    %v3923 = vsub.f32 %v3566, %v3750
    %v3924 = vsub.f32 %v3571, %v3750
    %v3925 = vsub.f32 %v3574, %v3750
    %v3926 = vsub.f32 %v3579, %v3750
    %v3927 = vsub.f32 %v3582, %v3750
    %v3928 = vsub.f32 %v3587, %v3750
    %v3929 = vsub.f32 %v3590, %v3750
    %v3930 = vsub.f32 %v3595, %v3750
    %v3931 = vsub.f32 %v3598, %v3750
    %v3932 = vsub.f32 %v3603, %v3750
    %v3933 = vsub.f32 %v3606, %v3750
    %v3934 = vsub.f32 %v3611, %v3750
    %v3935 = vsub.f32 %v3614, %v3750
    %v3936 = vsub.f32 %v3619, %v3750
    %v3937 = vsub.f32 %v3622, %v3750
    %v3938 = vsub.f32 %v3627, %v3750
    %v3939 = vsub.f32 %v3630, %v3750
    %v3940 = vsub.f32 %v3635, %v3750
    %v3941 = vsub.f32 %v3638, %v3750
    %v3942 = vsub.f32 %v3643, %v3750
    %v3943 = vsub.f32 %v3646, %v3750
    %v3944 = vsub.f32 %v3651, %v3750
    %v3945 = vsub.f32 %v3654, %v3750
    %v3946 = vsub.f32 %v3659, %v3750
    %v3947 = vsub.f32 %v3662, %v3750
    %v3948 = vsub.f32 %v3667, %v3750
    %v3949 = vsub.f32 %v3670, %v3750
    %v3950 = vsub.f32 %v3675, %v3750
    %v3951 = vsub.f32 %v3678, %v3750
    %v3952 = vadd.f32 %v3887, 1e-10
    %v3953 = vrsqrt.pop %v3952
    %v3954 = vmul.f32 %v3888, %v3953
    %v3955 = vmul.f32 %v3889, %v3953
    %v3956 = vmul.f32 %v3890, %v3953
    %v3957 = vmul.f32 %v3891, %v3953
    %v3958 = vmul.f32 %v3892, %v3953
    %v3959 = vmul.f32 %v3893, %v3953
    %v3960 = vmul.f32 %v3894, %v3953
    %v3961 = vmul.f32 %v3895, %v3953
    %v3962 = vmul.f32 %v3896, %v3953
    %v3963 = vmul.f32 %v3897, %v3953
    %v3964 = vmul.f32 %v3898, %v3953
    %v3965 = vmul.f32 %v3899, %v3953
    %v3966 = vmul.f32 %v3900, %v3953
    %v3967 = vmul.f32 %v3901, %v3953
    %v3968 = vmul.f32 %v3902, %v3953
    %v3969 = vmul.f32 %v3903, %v3953
    %v3970 = vmul.f32 %v3904, %v3953
    %v3971 = vmul.f32 %v3905, %v3953
    %v3972 = vmul.f32 %v3906, %v3953
    %v3973 = vmul.f32 %v3907, %v3953
    %v3974 = vmul.f32 %v3908, %v3953
    %v3975 = vmul.f32 %v3909, %v3953
    %v3976 = vmul.f32 %v3910, %v3953
    %v3977 = vmul.f32 %v3911, %v3953
    %v3978 = vmul.f32 %v3912, %v3953
    %v3979 = vmul.f32 %v3913, %v3953
    %v3980 = vmul.f32 %v3914, %v3953
    %v3981 = vmul.f32 %v3915, %v3953
    %v3982 = vmul.f32 %v3916, %v3953
    %v3983 = vmul.f32 %v3917, %v3953
    %v3984 = vmul.f32 %v3918, %v3953
    %v3985 = vmul.f32 %v3919, %v3953
    %v3986 = vmul.f32 %v3920, %v3953
    %v3987 = vmul.f32 %v3921, %v3953
    %v3988 = vmul.f32 %v3922, %v3953
    %v3989 = vmul.f32 %v3923, %v3953
    %v3990 = vmul.f32 %v3924, %v3953
    %v3991 = vmul.f32 %v3925, %v3953
    %v3992 = vmul.f32 %v3926, %v3953
    %v3993 = vmul.f32 %v3927, %v3953
    %v3994 = vmul.f32 %v3928, %v3953
    %v3995 = vmul.f32 %v3929, %v3953
    %v3996 = vmul.f32 %v3930, %v3953
    %v3997 = vmul.f32 %v3931, %v3953
    %v3998 = vmul.f32 %v3932, %v3953
    %v3999 = vmul.f32 %v3933, %v3953
    %v4000 = vmul.f32 %v3934, %v3953
    %v4001 = vmul.f32 %v3935, %v3953
    %v4002 = vmul.f32 %v3936, %v3953
    %v4003 = vmul.f32 %v3937, %v3953
    %v4004 = vmul.f32 %v3938, %v3953
    %v4005 = vmul.f32 %v3939, %v3953
    %v4006 = vmul.f32 %v3940, %v3953
    %v4007 = vmul.f32 %v3941, %v3953
    %v4008 = vmul.f32 %v3942, %v3953
    %v4009 = vmul.f32 %v3943, %v3953
    %v4010 = vmul.f32 %v3944, %v3953
    %v4011 = vmul.f32 %v3945, %v3953
    %v4012 = vmul.f32 %v3946, %v3953
    %v4013 = vmul.f32 %v3947, %v3953
    %v4014 = vmul.f32 %v3948, %v3953
    %v4015 = vmul.f32 %v3949, %v3953
    %v4016 = vmul.f32 %v3950, %v3953
    %v4017 = vmul.f32 %v3951, %v3953
    %v4018 = vmax.f32 %v3954, 0.0
    %v4019 = vmax.f32 %v3955, 0.0
    %v4020 = vmax.f32 %v3956, 0.0
    %v4021 = vmax.f32 %v3957, 0.0
    %v4022 = vmax.f32 %v3958, 0.0
    %v4023 = vmax.f32 %v3959, 0.0
    %v4024 = vmax.f32 %v3960, 0.0
    %v4025 = vmax.f32 %v3961, 0.0
    %v4026 = vmax.f32 %v3962, 0.0
    %v4027 = vmax.f32 %v3963, 0.0
    %v4028 = vmax.f32 %v3964, 0.0
    %v4029 = vmax.f32 %v3965, 0.0
    %v4030 = vmax.f32 %v3966, 0.0
    %v4031 = vmax.f32 %v3967, 0.0
    %v4032 = vmax.f32 %v3968, 0.0
    %v4033 = vmax.f32 %v3969, 0.0
    %v4034 = vmax.f32 %v3970, 0.0
    %v4035 = vmax.f32 %v3971, 0.0
    %v4036 = vmax.f32 %v3972, 0.0
    %v4037 = vmax.f32 %v3973, 0.0
    %v4038 = vmax.f32 %v3974, 0.0
    %v4039 = vmax.f32 %v3975, 0.0
    %v4040 = vmax.f32 %v3976, 0.0
    %v4041 = vmax.f32 %v3977, 0.0
    %v4042 = vmax.f32 %v3978, 0.0
    %v4043 = vmax.f32 %v3979, 0.0
    %v4044 = vmax.f32 %v3980, 0.0
    %v4045 = vmax.f32 %v3981, 0.0
    %v4046 = vmax.f32 %v3982, 0.0
    %v4047 = vmax.f32 %v3983, 0.0
    %v4048 = vmax.f32 %v3984, 0.0
    %v4049 = vmax.f32 %v3985, 0.0
    %v4050 = vmax.f32 %v3986, 0.0
    %v4051 = vmax.f32 %v3987, 0.0
    %v4052 = vmax.f32 %v3988, 0.0
    %v4053 = vmax.f32 %v3989, 0.0
    %v4054 = vmax.f32 %v3990, 0.0
    %v4055 = vmax.f32 %v3991, 0.0
    %v4056 = vmax.f32 %v3992, 0.0
    %v4057 = vmax.f32 %v3993, 0.0
    %v4058 = vmax.f32 %v3994, 0.0
    %v4059 = vmax.f32 %v3995, 0.0
    %v4060 = vmax.f32 %v3996, 0.0
    %v4061 = vmax.f32 %v3997, 0.0
    %v4062 = vmax.f32 %v3998, 0.0
    %v4063 = vmax.f32 %v3999, 0.0
    %v4064 = vmax.f32 %v4000, 0.0
    %v4065 = vmax.f32 %v4001, 0.0
    %v4066 = vmax.f32 %v4002, 0.0
    %v4067 = vmax.f32 %v4003, 0.0
    %v4068 = vmax.f32 %v4004, 0.0
    %v4069 = vmax.f32 %v4005, 0.0
    %v4070 = vmax.f32 %v4006, 0.0
    %v4071 = vmax.f32 %v4007, 0.0
    %v4072 = vmax.f32 %v4008, 0.0
    %v4073 = vmax.f32 %v4009, 0.0
    %v4074 = vmax.f32 %v4010, 0.0
    %v4075 = vmax.f32 %v4011, 0.0
    %v4076 = vmax.f32 %v4012, 0.0
    %v4077 = vmax.f32 %v4013, 0.0
    %v4078 = vmax.f32 %v4014, 0.0
    %v4079 = vmax.f32 %v4015, 0.0
    %v4080 = vmax.f32 %v4016, 0.0
    %v4081 = vmax.f32 %v4017, 0.0
    %v4082 = vsel %vm3168, %v4018, 0.0
    %v4083 = vsel %vm3169, %v4019, 0.0
    %v4084 = vsel %vm3170, %v4020, 0.0
    %v4085 = vsel %vm3171, %v4021, 0.0
    %v4086 = vsel %vm3172, %v4022, 0.0
    %v4087 = vsel %vm3173, %v4023, 0.0
    %v4088 = vsel %vm3174, %v4024, 0.0
    %v4089 = vsel %vm3175, %v4025, 0.0
    %v4090 = vsel %vm3176, %v4026, 0.0
    %v4091 = vsel %vm3177, %v4027, 0.0
    %v4092 = vsel %vm3178, %v4028, 0.0
    %v4093 = vsel %vm3179, %v4029, 0.0
    %v4094 = vsel %vm3180, %v4030, 0.0
    %v4095 = vsel %vm3181, %v4031, 0.0
    %v4096 = vsel %vm3182, %v4032, 0.0
    %v4097 = vsel %vm3183, %v4033, 0.0
    %v4098 = vsel %vm3184, %v4034, 0.0
    %v4099 = vsel %vm3185, %v4035, 0.0
    %v4100 = vsel %vm3186, %v4036, 0.0
    %v4101 = vsel %vm3187, %v4037, 0.0
    %v4102 = vsel %vm3188, %v4038, 0.0
    %v4103 = vsel %vm3189, %v4039, 0.0
    %v4104 = vsel %vm3190, %v4040, 0.0
    %v4105 = vsel %vm3191, %v4041, 0.0
    %v4106 = vsel %vm3192, %v4042, 0.0
    %v4107 = vsel %vm3193, %v4043, 0.0
    %v4108 = vsel %vm3194, %v4044, 0.0
    %v4109 = vsel %vm3195, %v4045, 0.0
    %v4110 = vsel %vm3196, %v4046, 0.0
    %v4111 = vsel %vm3197, %v4047, 0.0
    %v4112 = vsel %vm3198, %v4048, 0.0
    %v4113 = vsel %vm3199, %v4049, 0.0
    %v4114 = vsel %vm3200, %v4050, 0.0
    %v4115 = vsel %vm3201, %v4051, 0.0
    %v4116 = vsel %vm3202, %v4052, 0.0
    %v4117 = vsel %vm3203, %v4053, 0.0
    %v4118 = vsel %vm3204, %v4054, 0.0
    %v4119 = vsel %vm3205, %v4055, 0.0
    %v4120 = vsel %vm3206, %v4056, 0.0
    %v4121 = vsel %vm3207, %v4057, 0.0
    %v4122 = vsel %vm3208, %v4058, 0.0
    %v4123 = vsel %vm3209, %v4059, 0.0
    %v4124 = vsel %vm3210, %v4060, 0.0
    %v4125 = vsel %vm3211, %v4061, 0.0
    %v4126 = vsel %vm3212, %v4062, 0.0
    %v4127 = vsel %vm3213, %v4063, 0.0
    %v4128 = vsel %vm3214, %v4064, 0.0
    %v4129 = vsel %vm3215, %v4065, 0.0
    %v4130 = vsel %vm3216, %v4066, 0.0
    %v4131 = vsel %vm3217, %v4067, 0.0
    %v4132 = vsel %vm3218, %v4068, 0.0
    %v4133 = vsel %vm3219, %v4069, 0.0
    %v4134 = vsel %vm3220, %v4070, 0.0
    %v4135 = vsel %vm3221, %v4071, 0.0
    %v4136 = vsel %vm3222, %v4072, 0.0
    %v4137 = vsel %vm3223, %v4073, 0.0
    %v4138 = vsel %vm3224, %v4074, 0.0
    %v4139 = vsel %vm3225, %v4075, 0.0
    %v4140 = vsel %vm3226, %v4076, 0.0
    %v4141 = vsel %vm3227, %v4077, 0.0
    %v4142 = vsel %vm3228, %v4078, 0.0
    %v4143 = vsel %vm3229, %v4079, 0.0
    %v4144 = vsel %vm3230, %v4080, 0.0
    %v4145 = vsel %vm3231, %v4081, 0.0
    %v4146 = vpack.c.bf16 %v4083, %v4082
    %v4147 = vpack.c.bf16 %v4085, %v4084
    %v4148 = vpack.c.bf16 %v4087, %v4086
    %v4149 = vpack.c.bf16 %v4089, %v4088
    %v4150 = vpack.c.bf16 %v4091, %v4090
    %v4151 = vpack.c.bf16 %v4093, %v4092
    %v4152 = vpack.c.bf16 %v4095, %v4094
    %v4153 = vpack.c.bf16 %v4097, %v4096
    %v4154 = vpack.c.bf16 %v4099, %v4098
    %v4155 = vpack.c.bf16 %v4101, %v4100
    %v4156 = vpack.c.bf16 %v4103, %v4102
    %v4157 = vpack.c.bf16 %v4105, %v4104
    %v4158 = vpack.c.bf16 %v4107, %v4106
    %v4159 = vpack.c.bf16 %v4109, %v4108
    %v4160 = vpack.c.bf16 %v4111, %v4110
    %v4161 = vpack.c.bf16 %v4113, %v4112
    %v4162 = vpack.c.bf16 %v4115, %v4114
    %v4163 = vpack.c.bf16 %v4117, %v4116
    %v4164 = vpack.c.bf16 %v4119, %v4118
    %v4165 = vpack.c.bf16 %v4121, %v4120
    %v4166 = vpack.c.bf16 %v4123, %v4122
    %v4167 = vpack.c.bf16 %v4125, %v4124
    %v4168 = vpack.c.bf16 %v4127, %v4126
    %v4169 = vpack.c.bf16 %v4129, %v4128
    %v4170 = vpack.c.bf16 %v4131, %v4130
    %v4171 = vpack.c.bf16 %v4133, %v4132
    %v4172 = vpack.c.bf16 %v4135, %v4134
    %v4173 = vpack.c.bf16 %v4137, %v4136
    %v4174 = vpack.c.bf16 %v4139, %v4138
    %v4175 = vpack.c.bf16 %v4141, %v4140
    %v4176 = vpack.c.bf16 %v4143, %v4142
    %v4177 = vpack.c.bf16 %v4145, %v4144
    %v4178 = vld [vmem:[#allocation10] sm:$0xf]
    %v4179 = vld [vmem:[#allocation10 + $0x4] sm:$0xf]
    %v4180 = vld [vmem:[#allocation10 + $0x8] sm:$0xf]
    %v4181 = vld [vmem:[#allocation10 + $0xc] sm:$0xf]
    %v4182 = vld [vmem:[#allocation10 + $0x10] sm:$0xf]
    %v4183 = vld [vmem:[#allocation10 + $0x14] sm:$0xf]
    %v4184 = vld [vmem:[#allocation10 + $0x18] sm:$0xf]
    %v4185 = vld [vmem:[#allocation10 + $0x1c] sm:$0xf]
    %v4186 = vld [vmem:[#allocation10 + $0x20] sm:$0xf]
    %v4187 = vld [vmem:[#allocation10 + $0x24] sm:$0xf]
    %v4188 = vld [vmem:[#allocation10 + $0x28] sm:$0xf]
    %v4189 = vld [vmem:[#allocation10 + $0x2c] sm:$0xf]
    %v4190 = vld [vmem:[#allocation10 + $0x30] sm:$0xf]
    %v4191 = vld [vmem:[#allocation10 + $0x34] sm:$0xf]
    %v4192 = vld [vmem:[#allocation10 + $0x38] sm:$0xf]
    %v4193 = vld [vmem:[#allocation10 + $0x3c] sm:$0xf]
    %v4194 = vld [vmem:[#allocation11] sm:$0x1]
    %v4196 = vlaneseq
    %v4197 = vshrl.u32 %v4196, 7
    %v4198 = vsub.s32 0, %v4197
    %v4199 = vrot.slane %v4194, %v4198
    %v4217 = vunpack.c.l.b16 %v4178
    %v4218 = vunpack.c.l.b16 %v4179
    %v4219 = vunpack.c.l.b16 %v4180
    %v4220 = vunpack.c.l.b16 %v4181
    %v4221 = vunpack.c.l.b16 %v4182
    %v4222 = vunpack.c.l.b16 %v4183
    %v4223 = vunpack.c.l.b16 %v4184
    %v4224 = vunpack.c.l.b16 %v4185
    %v4225 = vunpack.c.l.b16 %v4186
    %v4226 = vunpack.c.l.b16 %v4187
    %v4227 = vunpack.c.l.b16 %v4188
    %v4228 = vunpack.c.l.b16 %v4189
    %v4229 = vunpack.c.l.b16 %v4190
    %v4230 = vunpack.c.l.b16 %v4191
    %v4231 = vunpack.c.l.b16 %v4192
    %v4232 = vunpack.c.l.b16 %v4193
    %v4233 = vpack.c.b16 %v4218, %v4217
    %v4234 = vpack.c.b16 %v4220, %v4219
    %v4235 = vpack.c.b16 %v4222, %v4221
    %v4236 = vpack.c.b16 %v4224, %v4223
    %v4237 = vpack.c.b16 %v4226, %v4225
    %v4238 = vpack.c.b16 %v4228, %v4227
    %v4239 = vpack.c.b16 %v4230, %v4229
    %v4240 = vpack.c.b16 %v4232, %v4231
    %4249 = vmatprep.subr.bf16.mxu0 0
    %4250 = vmatpush1.bf16.msra.mxu0 %v4233
    %4251 = vmatprep.subr.bf16.mxu0 0
    %4252 = vmatpush1.bf16.msra.mxu0 %v4234
    %4253 = vmatprep.subr.bf16.mxu0 0
    %4254 = vmatpush1.bf16.msra.mxu0 %v4235
    %4255 = vmatprep.subr.bf16.mxu0 0
    %4256 = vmatpush1.bf16.msra.mxu0 %v4236
    %4257 = vmatprep.subr.bf16.mxu0 0
    %4258 = vmatpush1.bf16.msra.mxu0 %v4237
    %4259 = vmatprep.subr.bf16.mxu0 0
    %4260 = vmatpush1.bf16.msra.mxu0 %v4238
    %4261 = vmatprep.subr.bf16.mxu0 0
    %4262 = vmatpush1.bf16.msra.mxu0 %v4239
    %4263 = vmatprep.subr.bf16.mxu0 0
    %4264 = vmatpush1.bf16.msra.mxu0 %v4240
    %4265 = vmatprep.subr.bf16.mxu0 0
    %4266 = vmatpush1.bf16.msra.mxu0 0
    %4267 = vmatprep.subr.bf16.mxu0 0
    %4268 = vmatpush1.bf16.msra.mxu0 0
    %4269 = vmatprep.subr.bf16.mxu0 0
    %4270 = vmatpush1.bf16.msra.mxu0 0
    %4271 = vmatprep.subr.bf16.mxu0 0
    %4272 = vmatpush1.bf16.msra.mxu0 0
    %4273 = vmatprep.subr.bf16.mxu0 0
    %4274 = vmatpush1.bf16.msra.mxu0 0
    %4275 = vmatprep.subr.bf16.mxu0 0
    %4276 = vmatpush1.bf16.msra.mxu0 0
    %4277 = vmatprep.subr.bf16.mxu0 0
    %4278 = vmatpush1.bf16.msra.mxu0 0
    %4279 = vmatprep.subr.bf16.mxu0 0
    %4280 = vmatpush1.bf16.msra.mxu0 0
    %4281 = vmatprep.mubr.bf16.mxu0 0
    %4282 = vmatmul.mubr.bf16.gmra.mrb[0].mxu0 %v4146
    %v4283 = vpop.f32.mrb[0].mxu0
    %v4284 = vadd.f32 %v4199, %v4283
    %v4285 = vpop.f32.mrb[0].mxu0
    %v4286 = vpop.f32.mrb[0].mxu0
    %v4287 = vadd.f32 %v4199, %v4286
    %v4288 = vpop.f32.mrb[0].mxu0
    %4289 = vmatprep.mubr.bf16.mxu0 0
    %4290 = vmatmul.mubr.bf16.gmra.mrb[0].mxu0 %v4147
    %v4291 = vpop.f32.mrb[0].mxu0
    %v4292 = vadd.f32 %v4199, %v4291
    %v4293 = vpop.f32.mrb[0].mxu0
    %v4294 = vpop.f32.mrb[0].mxu0
    %v4295 = vadd.f32 %v4199, %v4294
    %v4296 = vpop.f32.mrb[0].mxu0
    %4297 = vmatprep.mubr.bf16.mxu0 0
    %4298 = vmatmul.mubr.bf16.gmra.mrb[0].mxu0 %v4148
    %v4299 = vpop.f32.mrb[0].mxu0
    %v4300 = vadd.f32 %v4199, %v4299
    %v4301 = vpop.f32.mrb[0].mxu0
    %v4302 = vpop.f32.mrb[0].mxu0
    %v4303 = vadd.f32 %v4199, %v4302
    %v4304 = vpop.f32.mrb[0].mxu0
    %4305 = vmatprep.mubr.bf16.mxu0 0
    %4306 = vmatmul.mubr.bf16.gmra.mrb[0].mxu0 %v4149
    %v4307 = vpop.f32.mrb[0].mxu0
    %v4308 = vadd.f32 %v4199, %v4307
    %v4309 = vpop.f32.mrb[0].mxu0
    %v4310 = vpop.f32.mrb[0].mxu0
    %v4311 = vadd.f32 %v4199, %v4310
    %v4312 = vpop.f32.mrb[0].mxu0
    %4313 = vmatprep.mubr.bf16.mxu0 0
    %4314 = vmatmul.mubr.bf16.gmra.mrb[0].mxu0 %v4150
    %v4315 = vpop.f32.mrb[0].mxu0
    %v4316 = vadd.f32 %v4199, %v4315
    %v4317 = vpop.f32.mrb[0].mxu0
    %v4318 = vpop.f32.mrb[0].mxu0
    %v4319 = vadd.f32 %v4199, %v4318
    %v4320 = vpop.f32.mrb[0].mxu0
    %4321 = vmatprep.mubr.bf16.mxu0 0
    %4322 = vmatmul.mubr.bf16.gmra.mrb[0].mxu0 %v4151
    %v4323 = vpop.f32.mrb[0].mxu0
    %v4324 = vadd.f32 %v4199, %v4323
    %v4325 = vpop.f32.mrb[0].mxu0
    %v4326 = vpop.f32.mrb[0].mxu0
    %v4327 = vadd.f32 %v4199, %v4326
    %v4328 = vpop.f32.mrb[0].mxu0
    %4329 = vmatprep.mubr.bf16.mxu0 0
    %4330 = vmatmul.mubr.bf16.gmra.mrb[0].mxu0 %v4152
    %v4331 = vpop.f32.mrb[0].mxu0
    %v4332 = vadd.f32 %v4199, %v4331
    %v4333 = vpop.f32.mrb[0].mxu0
    %v4334 = vpop.f32.mrb[0].mxu0
    %v4335 = vadd.f32 %v4199, %v4334
    %v4336 = vpop.f32.mrb[0].mxu0
    %4337 = vmatprep.mubr.bf16.mxu0 0
    %4338 = vmatmul.mubr.bf16.gmra.mrb[0].mxu0 %v4153
    %v4339 = vpop.f32.mrb[0].mxu0
    %v4340 = vadd.f32 %v4199, %v4339
    %v4341 = vpop.f32.mrb[0].mxu0
    %v4342 = vpop.f32.mrb[0].mxu0
    %v4343 = vadd.f32 %v4199, %v4342
    %v4344 = vpop.f32.mrb[0].mxu0
    %4345 = vmatprep.mubr.bf16.mxu0 0
    %4346 = vmatmul.mubr.bf16.gmra.mrb[0].mxu0 %v4154
    %v4347 = vpop.f32.mrb[0].mxu0
    %v4348 = vadd.f32 %v4199, %v4347
    %v4349 = vpop.f32.mrb[0].mxu0
    %v4350 = vpop.f32.mrb[0].mxu0
    %v4351 = vadd.f32 %v4199, %v4350
    %v4352 = vpop.f32.mrb[0].mxu0
    %4353 = vmatprep.mubr.bf16.mxu0 0
    %4354 = vmatmul.mubr.bf16.gmra.mrb[0].mxu0 %v4155
    %v4355 = vpop.f32.mrb[0].mxu0
    %v4356 = vadd.f32 %v4199, %v4355
    %v4357 = vpop.f32.mrb[0].mxu0
    %v4358 = vpop.f32.mrb[0].mxu0
    %v4359 = vadd.f32 %v4199, %v4358
    %v4360 = vpop.f32.mrb[0].mxu0
    %4361 = vmatprep.mubr.bf16.mxu0 0
    %4362 = vmatmul.mubr.bf16.gmra.mrb[0].mxu0 %v4156
    %v4363 = vpop.f32.mrb[0].mxu0
    %v4364 = vadd.f32 %v4199, %v4363
    %v4365 = vpop.f32.mrb[0].mxu0
    %v4366 = vpop.f32.mrb[0].mxu0
    %v4367 = vadd.f32 %v4199, %v4366
    %v4368 = vpop.f32.mrb[0].mxu0
    %4369 = vmatprep.mubr.bf16.mxu0 0
    %4370 = vmatmul.mubr.bf16.gmra.mrb[0].mxu0 %v4157
    %v4371 = vpop.f32.mrb[0].mxu0
    %v4372 = vadd.f32 %v4199, %v4371
    %v4373 = vpop.f32.mrb[0].mxu0
    %v4374 = vpop.f32.mrb[0].mxu0
    %v4375 = vadd.f32 %v4199, %v4374
    %v4376 = vpop.f32.mrb[0].mxu0
    %4377 = vmatprep.mubr.bf16.mxu0 0
    %4378 = vmatmul.mubr.bf16.gmra.mrb[0].mxu0 %v4158
    %v4379 = vpop.f32.mrb[0].mxu0
    %v4380 = vadd.f32 %v4199, %v4379
    %v4381 = vpop.f32.mrb[0].mxu0
    %v4382 = vpop.f32.mrb[0].mxu0
    %v4383 = vadd.f32 %v4199, %v4382
    %v4384 = vpop.f32.mrb[0].mxu0
    %4385 = vmatprep.mubr.bf16.mxu0 0
    %4386 = vmatmul.mubr.bf16.gmra.mrb[0].mxu0 %v4159
    %v4387 = vpop.f32.mrb[0].mxu0
    %v4388 = vadd.f32 %v4199, %v4387
    %v4389 = vpop.f32.mrb[0].mxu0
    %v4390 = vpop.f32.mrb[0].mxu0
    %v4391 = vadd.f32 %v4199, %v4390
    %v4392 = vpop.f32.mrb[0].mxu0
    %4393 = vmatprep.mubr.bf16.mxu0 0
    %4394 = vmatmul.mubr.bf16.gmra.mrb[0].mxu0 %v4160
    %v4395 = vpop.f32.mrb[0].mxu0
    %v4396 = vadd.f32 %v4199, %v4395
    %v4397 = vpop.f32.mrb[0].mxu0
    %v4398 = vpop.f32.mrb[0].mxu0
    %v4399 = vadd.f32 %v4199, %v4398
    %v4400 = vpop.f32.mrb[0].mxu0
    %4401 = vmatprep.mubr.bf16.mxu0 0
    %4402 = vmatmul.mubr.bf16.gmra.mrb[0].mxu0 %v4161
    %v4403 = vpop.f32.mrb[0].mxu0
    %v4404 = vadd.f32 %v4199, %v4403
    %v4405 = vpop.f32.mrb[0].mxu0
    %v4406 = vpop.f32.mrb[0].mxu0
    %v4407 = vadd.f32 %v4199, %v4406
    %v4408 = vpop.f32.mrb[0].mxu0
    %4409 = vmatprep.mubr.bf16.mxu0 0
    %4410 = vmatmul.mubr.bf16.gmra.mrb[0].mxu0 %v4162
    %v4411 = vpop.f32.mrb[0].mxu0
    %v4412 = vadd.f32 %v4199, %v4411
    %v4413 = vpop.f32.mrb[0].mxu0
    %v4414 = vpop.f32.mrb[0].mxu0
    %v4415 = vadd.f32 %v4199, %v4414
    %v4416 = vpop.f32.mrb[0].mxu0
    %4417 = vmatprep.mubr.bf16.mxu0 0
    %4418 = vmatmul.mubr.bf16.gmra.mrb[0].mxu0 %v4163
    %v4419 = vpop.f32.mrb[0].mxu0
    %v4420 = vadd.f32 %v4199, %v4419
    %v4421 = vpop.f32.mrb[0].mxu0
    %v4422 = vpop.f32.mrb[0].mxu0
    %v4423 = vadd.f32 %v4199, %v4422
    %v4424 = vpop.f32.mrb[0].mxu0
    %4425 = vmatprep.mubr.bf16.mxu0 0
    %4426 = vmatmul.mubr.bf16.gmra.mrb[0].mxu0 %v4164
    %v4427 = vpop.f32.mrb[0].mxu0
    %v4428 = vadd.f32 %v4199, %v4427
    %v4429 = vpop.f32.mrb[0].mxu0
    %v4430 = vpop.f32.mrb[0].mxu0
    %v4431 = vadd.f32 %v4199, %v4430
    %v4432 = vpop.f32.mrb[0].mxu0
    %4433 = vmatprep.mubr.bf16.mxu0 0
    %4434 = vmatmul.mubr.bf16.gmra.mrb[0].mxu0 %v4165
    %v4435 = vpop.f32.mrb[0].mxu0
    %v4436 = vadd.f32 %v4199, %v4435
    %v4437 = vpop.f32.mrb[0].mxu0
    %v4438 = vpop.f32.mrb[0].mxu0
    %v4439 = vadd.f32 %v4199, %v4438
    %v4440 = vpop.f32.mrb[0].mxu0
    %4441 = vmatprep.mubr.bf16.mxu0 0
    %4442 = vmatmul.mubr.bf16.gmra.mrb[0].mxu0 %v4166
    %v4443 = vpop.f32.mrb[0].mxu0
    %v4444 = vadd.f32 %v4199, %v4443
    %v4445 = vpop.f32.mrb[0].mxu0
    %v4446 = vpop.f32.mrb[0].mxu0
    %v4447 = vadd.f32 %v4199, %v4446
    %v4448 = vpop.f32.mrb[0].mxu0
    %4449 = vmatprep.mubr.bf16.mxu0 0
    %4450 = vmatmul.mubr.bf16.gmra.mrb[0].mxu0 %v4167
    %v4451 = vpop.f32.mrb[0].mxu0
    %v4452 = vadd.f32 %v4199, %v4451
    %v4453 = vpop.f32.mrb[0].mxu0
    %v4454 = vpop.f32.mrb[0].mxu0
    %v4455 = vadd.f32 %v4199, %v4454
    %v4456 = vpop.f32.mrb[0].mxu0
    %4457 = vmatprep.mubr.bf16.mxu0 0
    %4458 = vmatmul.mubr.bf16.gmra.mrb[0].mxu0 %v4168
    %v4459 = vpop.f32.mrb[0].mxu0
    %v4460 = vadd.f32 %v4199, %v4459
    %v4461 = vpop.f32.mrb[0].mxu0
    %v4462 = vpop.f32.mrb[0].mxu0
    %v4463 = vadd.f32 %v4199, %v4462
    %v4464 = vpop.f32.mrb[0].mxu0
    %4465 = vmatprep.mubr.bf16.mxu0 0
    %4466 = vmatmul.mubr.bf16.gmra.mrb[0].mxu0 %v4169
    %v4467 = vpop.f32.mrb[0].mxu0
    %v4468 = vadd.f32 %v4199, %v4467
    %v4469 = vpop.f32.mrb[0].mxu0
    %v4470 = vpop.f32.mrb[0].mxu0
    %v4471 = vadd.f32 %v4199, %v4470
    %v4472 = vpop.f32.mrb[0].mxu0
    %4473 = vmatprep.mubr.bf16.mxu0 0
    %4474 = vmatmul.mubr.bf16.gmra.mrb[0].mxu0 %v4170
    %v4475 = vpop.f32.mrb[0].mxu0
    %v4476 = vadd.f32 %v4199, %v4475
    %v4477 = vpop.f32.mrb[0].mxu0
    %v4478 = vpop.f32.mrb[0].mxu0
    %v4479 = vadd.f32 %v4199, %v4478
    %v4480 = vpop.f32.mrb[0].mxu0
    %4481 = vmatprep.mubr.bf16.mxu0 0
    %4482 = vmatmul.mubr.bf16.gmra.mrb[0].mxu0 %v4171
    %v4483 = vpop.f32.mrb[0].mxu0
    %v4484 = vadd.f32 %v4199, %v4483
    %v4485 = vpop.f32.mrb[0].mxu0
    %v4486 = vpop.f32.mrb[0].mxu0
    %v4487 = vadd.f32 %v4199, %v4486
    %v4488 = vpop.f32.mrb[0].mxu0
    %4489 = vmatprep.mubr.bf16.mxu0 0
    %4490 = vmatmul.mubr.bf16.gmra.mrb[0].mxu0 %v4172
    %v4491 = vpop.f32.mrb[0].mxu0
    %v4492 = vadd.f32 %v4199, %v4491
    %v4493 = vpop.f32.mrb[0].mxu0
    %v4494 = vpop.f32.mrb[0].mxu0
    %v4495 = vadd.f32 %v4199, %v4494
    %v4496 = vpop.f32.mrb[0].mxu0
    %4497 = vmatprep.mubr.bf16.mxu0 0
    %4498 = vmatmul.mubr.bf16.gmra.mrb[0].mxu0 %v4173
    %v4499 = vpop.f32.mrb[0].mxu0
    %v4500 = vadd.f32 %v4199, %v4499
    %v4501 = vpop.f32.mrb[0].mxu0
    %v4502 = vpop.f32.mrb[0].mxu0
    %v4503 = vadd.f32 %v4199, %v4502
    %v4504 = vpop.f32.mrb[0].mxu0
    %4505 = vmatprep.mubr.bf16.mxu0 0
    %4506 = vmatmul.mubr.bf16.gmra.mrb[0].mxu0 %v4174
    %v4507 = vpop.f32.mrb[0].mxu0
    %v4508 = vadd.f32 %v4199, %v4507
    %v4509 = vpop.f32.mrb[0].mxu0
    %v4510 = vpop.f32.mrb[0].mxu0
    %v4511 = vadd.f32 %v4199, %v4510
    %v4512 = vpop.f32.mrb[0].mxu0
    %4513 = vmatprep.mubr.bf16.mxu0 0
    %4514 = vmatmul.mubr.bf16.gmra.mrb[0].mxu0 %v4175
    %v4515 = vpop.f32.mrb[0].mxu0
    %v4516 = vadd.f32 %v4199, %v4515
    %v4517 = vpop.f32.mrb[0].mxu0
    %v4518 = vpop.f32.mrb[0].mxu0
    %v4519 = vadd.f32 %v4199, %v4518
    %v4520 = vpop.f32.mrb[0].mxu0
    %4521 = vmatprep.mubr.bf16.mxu0 0
    %4522 = vmatmul.mubr.bf16.gmra.mrb[0].mxu0 %v4176
    %v4523 = vpop.f32.mrb[0].mxu0
    %v4524 = vadd.f32 %v4199, %v4523
    %v4525 = vpop.f32.mrb[0].mxu0
    %v4526 = vpop.f32.mrb[0].mxu0
    %v4527 = vadd.f32 %v4199, %v4526
    %v4528 = vpop.f32.mrb[0].mxu0
    %4529 = vmatprep.mubr.bf16.mxu0 0
    %4530 = vmatmul.mubr.bf16.gmra.mrb[0].mxu0 %v4177
    %v4531 = vpop.f32.mrb[0].mxu0
    %v4532 = vadd.f32 %v4199, %v4531
    %v4533 = vpop.f32.mrb[0].mxu0
    %v4534 = vpop.f32.mrb[0].mxu0
    %v4535 = vadd.f32 %v4199, %v4534
    %v4536 = vpop.f32.mrb[0].mxu0
    %4537 = vdwg.mxu0
    %4538 = vst [vmem:[#allocation13] sm:$0xff] %v4284
    %4539 = vst [vmem:[#allocation13 + $0x8] sm:$0xff] %v4287
    %4540 = vst [vmem:[#allocation13 + $0x10] sm:$0xff] %v4292
    %4541 = vst [vmem:[#allocation13 + $0x18] sm:$0xff] %v4295
    %4542 = vst [vmem:[#allocation13 + $0x20] sm:$0xff] %v4300
    %4543 = vst [vmem:[#allocation13 + $0x28] sm:$0xff] %v4303
    %4544 = vst [vmem:[#allocation13 + $0x30] sm:$0xff] %v4308
    %4545 = vst [vmem:[#allocation13 + $0x38] sm:$0xff] %v4311
    %4546 = vst [vmem:[#allocation13 + $0x40] sm:$0xff] %v4316
    %4547 = vst [vmem:[#allocation13 + $0x48] sm:$0xff] %v4319
    %4548 = vst [vmem:[#allocation13 + $0x50] sm:$0xff] %v4324
    %4549 = vst [vmem:[#allocation13 + $0x58] sm:$0xff] %v4327
    %4550 = vst [vmem:[#allocation13 + $0x60] sm:$0xff] %v4332
    %4551 = vst [vmem:[#allocation13 + $0x68] sm:$0xff] %v4335
    %4552 = vst [vmem:[#allocation13 + $0x70] sm:$0xff] %v4340
    %4553 = vst [vmem:[#allocation13 + $0x78] sm:$0xff] %v4343
    %4554 = vst [vmem:[#allocation13 + $0x80] sm:$0xff] %v4348
    %4555 = vst [vmem:[#allocation13 + $0x88] sm:$0xff] %v4351
    %4556 = vst [vmem:[#allocation13 + $0x90] sm:$0xff] %v4356
    %4557 = vst [vmem:[#allocation13 + $0x98] sm:$0xff] %v4359
    %4558 = vst [vmem:[#allocation13 + $0xa0] sm:$0xff] %v4364
    %4559 = vst [vmem:[#allocation13 + $0xa8] sm:$0xff] %v4367
    %4560 = vst [vmem:[#allocation13 + $0xb0] sm:$0xff] %v4372
    %4561 = vst [vmem:[#allocation13 + $0xb8] sm:$0xff] %v4375
    %4562 = vst [vmem:[#allocation13 + $0xc0] sm:$0xff] %v4380
    %4563 = vst [vmem:[#allocation13 + $0xc8] sm:$0xff] %v4383
    %4564 = vst [vmem:[#allocation13 + $0xd0] sm:$0xff] %v4388
    %4565 = vst [vmem:[#allocation13 + $0xd8] sm:$0xff] %v4391
    %4566 = vst [vmem:[#allocation13 + $0xe0] sm:$0xff] %v4396
    %4567 = vst [vmem:[#allocation13 + $0xe8] sm:$0xff] %v4399
    %4568 = vst [vmem:[#allocation13 + $0xf0] sm:$0xff] %v4404
    %4569 = vst [vmem:[#allocation13 + $0xf8] sm:$0xff] %v4407
    %4570 = vst [vmem:[#allocation13 + $0x100] sm:$0xff] %v4412
    %4571 = vst [vmem:[#allocation13 + $0x108] sm:$0xff] %v4415
    %4572 = vst [vmem:[#allocation13 + $0x110] sm:$0xff] %v4420
    %4573 = vst [vmem:[#allocation13 + $0x118] sm:$0xff] %v4423
    %4574 = vst [vmem:[#allocation13 + $0x120] sm:$0xff] %v4428
    %4575 = vst [vmem:[#allocation13 + $0x128] sm:$0xff] %v4431
    %4576 = vst [vmem:[#allocation13 + $0x130] sm:$0xff] %v4436
    %4577 = vst [vmem:[#allocation13 + $0x138] sm:$0xff] %v4439
    %4578 = vst [vmem:[#allocation13 + $0x140] sm:$0xff] %v4444
    %4579 = vst [vmem:[#allocation13 + $0x148] sm:$0xff] %v4447
    %4580 = vst [vmem:[#allocation13 + $0x150] sm:$0xff] %v4452
    %4581 = vst [vmem:[#allocation13 + $0x158] sm:$0xff] %v4455
    %4582 = vst [vmem:[#allocation13 + $0x160] sm:$0xff] %v4460
    %4583 = vst [vmem:[#allocation13 + $0x168] sm:$0xff] %v4463
    %4584 = vst [vmem:[#allocation13 + $0x170] sm:$0xff] %v4468
    %4585 = vst [vmem:[#allocation13 + $0x178] sm:$0xff] %v4471
    %4586 = vst [vmem:[#allocation13 + $0x180] sm:$0xff] %v4476
    %4587 = vst [vmem:[#allocation13 + $0x188] sm:$0xff] %v4479
    %4588 = vst [vmem:[#allocation13 + $0x190] sm:$0xff] %v4484
    %4589 = vst [vmem:[#allocation13 + $0x198] sm:$0xff] %v4487
    %4590 = vst [vmem:[#allocation13 + $0x1a0] sm:$0xff] %v4492
    %4591 = vst [vmem:[#allocation13 + $0x1a8] sm:$0xff] %v4495
    %4592 = vst [vmem:[#allocation13 + $0x1b0] sm:$0xff] %v4500
    %4593 = vst [vmem:[#allocation13 + $0x1b8] sm:$0xff] %v4503
    %4594 = vst [vmem:[#allocation13 + $0x1c0] sm:$0xff] %v4508
    %4595 = vst [vmem:[#allocation13 + $0x1c8] sm:$0xff] %v4511
    %4596 = vst [vmem:[#allocation13 + $0x1d0] sm:$0xff] %v4516
    %4597 = vst [vmem:[#allocation13 + $0x1d8] sm:$0xff] %v4519
    %4598 = vst [vmem:[#allocation13 + $0x1e0] sm:$0xff] %v4524
    %4599 = vst [vmem:[#allocation13 + $0x1e8] sm:$0xff] %v4527
    %4600 = vst [vmem:[#allocation13 + $0x1f0] sm:$0xff] %v4532
    %4601 = vst [vmem:[#allocation13 + $0x1f8] sm:$0xff] %v4535
    // Predicated region
    $region50: #{pmlp_sgc_forward.1} parent=1 // pred_check
      _
    $region51: #{pmlp_sgc_forward.1} parent=1 // pred_check_branch
      %4603 = sbr.rel (0) target = $region53
    $region52: #{pmlp_sgc_forward.1} parent=1 // pred_region
      %s4605 = ssub.s32 8192, 8192
      %4606 = vsyncadd [#allocation4], %s4605
      %s4607 = sshll.u32 [#allocation13], 4
      %s4608 = int_to_ptr.vmem [resolvable:$true] %s4607
      %4613 = dma.vmem_to_hbm [thread:$0]  %s4608, 8192, %s6, [#allocation4], 128, 128, 8
    $region53: #{pmlp_sgc_forward.1} parent=1 // pred_fallthru
      _
    // Predicated region
    $region54: #{pmlp_sgc_forward.1} parent=1 // pred_check
      _
    $region55: #{pmlp_sgc_forward.1} parent=1 // pred_check_branch
      %4615 = sbr.rel (0) target = $region57
    $region56: #{pmlp_sgc_forward.1} parent=1 // pred_region
      %4616 = dma.done [#allocation4], 8192
    $region57: #{pmlp_sgc_forward.1} parent=1 // pred_fallthru
      _
    %4617 = vsyncpa [#allocation3], 1
    %4618 = vsyncpa [#allocation6], 1
    %4619 = vsyncpa [#allocation9], 1
    %4620 = vsyncpa [#allocation12], 1
    %4621 = vsyncpa [#allocation4], 1

</llo_original>
